<compile_context>
chip_gen: v7x
topology: tpu7x:2x2x1
jax: 0.10.0
libtpu: 0.0.40
codegen_flags: <defaults>
</compile_context>

<pallas_src>
import math

import jax
import jax.numpy as jnp
from jax.experimental import pallas as pl
from jax.experimental.pallas import tpu as pltpu

LATENT = 2048      # latent_dim in the PyTorch module
HIDDEN = 256       # hidden width of each residual block
NUM_BLOCKS = 5


def make_fused_kernel(N, H, W, C, D):
    """One grid step == one residual block: x <- relu(block(x) + x)."""
    HW = H * W
    M = N * HW

    def kernel(x_ref, w1_ref, b1_ref, w2_ref, b2_ref, w3_ref, b3_ref,
               w4_ref, b4_ref, o_ref):
        b = pl.program_id(0)

        # The f32 residual stream lives in the revisited output block; load
        # the network input into it once.
        @pl.when(b == 0)
        def _():
            o_ref[...] = x_ref[...]

        relu = lambda v: jnp.maximum(v, 0.0)
        bf16 = lambda v: v.astype(jnp.bfloat16)
        dot = lambda a, w: jnp.dot(a, w, preferred_element_type=jnp.float32)

        # Border masks from an (M, 1) iota; broadcast over the D lanes.
        # (Pure VALU work on a 32x1 tile -- fully hidden under the weight DMA.)
        row = jax.lax.broadcasted_iota(jnp.int32, (M, 1), 0)
        wpos = row % W
        not_left = (wpos > 0).astype(jnp.float32)        # has left neighbour
        not_right = (wpos < W - 1).astype(jnp.float32)   # has right neighbour
        not_top = ((row % HW) >= W).astype(jnp.float32)  # has row above (same image)

        x = o_ref[...]                                    # (M, C) f32

        # ---- Conv2d(C, D, (1,1)) + ReLU --------------------------------
        h1 = relu(dot(bf16(x), w1_ref[0]) + b1_ref[0])    # (M, D)

        # ---- ZeroPad2d((1,1,0,0)) + Conv2d(D, D, (1,3)) + ReLU ---------
        # One wide (M,D)@(D,3D) matmul; taps = shifted + border-masked
        # column slices of the result (slices land on lane multiples of 256).
        # NOTE: static jnp.roll lowers to slice+concat; at this H*W it is a
        # handful of vreg copies.  Swap for pltpu.roll (XLU sublane rotate)
        # if H*W grows enough for the shift copies to show up.
        s = dot(bf16(h1), w2_ref[0])                      # (M, 3D)
        left = jnp.roll(s[:, :D], 1, axis=0) * not_left         # tap kw=0
        right = jnp.roll(s[:, 2 * D:], -1, axis=0) * not_right  # tap kw=2
        h2 = relu(left + s[:, D:2 * D] + right + b2_ref[0])     # (M, D)

        # ---- ZeroPad2d((0,0,1,0)) + Conv2d(D, D, (2,1)) + ReLU ---------
        t = dot(bf16(h2), w3_ref[0])                      # (M, 2D)
        up = jnp.roll(t[:, :D], W, axis=0) * not_top             # tap kh=0
        h3 = relu(up + t[:, D:] + b3_ref[0])                     # (M, D)

        # ---- Conv2d(D, C, (1,1)) + residual + ReLU ---------------------
        y = dot(bf16(h3), w4_ref[0]) + b4_ref[0] + x
        o_ref[...] = relu(y)

    return kernel


def pixelcnn_forward(x_nchw, stacked):
    """PyTorch-compatible entry point: NCHW float32 in, NCHW float32 out."""
    N, C, H, W = x_nchw.shape
    M = N * H * W
    num_blocks, _, D = stacked["w1"].shape

    x = jnp.transpose(x_nchw, (0, 2, 3, 1)).reshape(M, C)

    def wspec(shape):
        # Per-residual-block weight slice, streamed / double-buffered by the
        # BlockSpec pipeline as the grid walks the block axis.
        return pl.BlockSpec((1,) + tuple(shape[1:]), lambda b: (b, 0, 0))

    out = pl.pallas_call(
        make_fused_kernel(N, H, W, C, D),
        out_shape=jax.ShapeDtypeStruct((M, C), jnp.float32),
        grid=(num_blocks,),
        in_specs=[
            # Activation: constant index map -> fetched once, read at b == 0.
            pl.BlockSpec((M, C), lambda b: (0, 0)),
            wspec(stacked["w1"].shape), wspec(stacked["b1"].shape),
            wspec(stacked["w2"].shape), wspec(stacked["b2"].shape),
            wspec(stacked["w3"].shape), wspec(stacked["b3"].shape),
            wspec(stacked["w4"].shape), wspec(stacked["b4"].shape),
        ],
        # Constant index map: the f32 residual stream stays resident in VMEM
        # across the block axis and is written back to HBM once at the end.
        out_specs=pl.BlockSpec((M, C), lambda b: (0, 0)),
        compiler_params=pltpu.CompilerParams(
            dimension_semantics=("arbitrary",),      # blocks are sequential
            vmem_limit_bytes=40 * 1024 * 1024),      # fits v7x's 64 MiB VMEM
    )(x, stacked["w1"], stacked["b1"], stacked["w2"], stacked["b2"],
      stacked["w3"], stacked["b3"], stacked["w4"], stacked["b4"])

    return jnp.transpose(out.reshape(N, H, W, C), (0, 3, 1, 2))


pixelcnn_forward = jax.jit(pixelcnn_forward)


# ----------------------------- parameters ------------------------------
def init_block_params(key, C, D):
    """Per-block parameters in matmul layout.  Weights are stored in bf16
    (the kernel's storage / streaming format), biases in f32.
       w1: (C, D)      b1: (1, D)   -- Conv2d(C, D, (1,1))
       w2: (3, D, D)   b2: (1, D)   -- Conv2d(D, D, (1,3)), lead idx = kw
       w3: (2, D, D)   b3: (1, D)   -- Conv2d(D, D, (2,1)), lead idx = kh
       w4: (D, C)      b4: (1, C)   -- Conv2d(D, C, (1,1))"""
    k = jax.random.split(key, 8)

    def w(kk, shape, fan_in, dtype):
        return (jax.random.normal(kk, shape, jnp.float32)
                / math.sqrt(fan_in)).astype(dtype)

    bf, f32 = jnp.bfloat16, jnp.float32
    return {
        "w1": w(k[0], (C, D), C, bf),        "b1": w(k[1], (1, D), C, f32),
        "w2": w(k[2], (3, D, D), 3 * D, bf), "b2": w(k[3], (1, D), 3 * D, f32),
        "w3": w(k[4], (2, D, D), 2 * D, bf), "b3": w(k[5], (1, D), 2 * D, f32),
        "w4": w(k[6], (D, C), D, bf),        "b4": w(k[7], (1, C), D, f32),
    }


def stack_params(params):
    """Stack per-block params for the fused kernel and widen w2/w3 so the
    (1,3)/(2,1) convs become single (D,3D)/(D,2D) matmuls."""
    D = params[0]["w1"].shape[1]
    widen = lambda w: jnp.transpose(w, (1, 0, 2)).reshape(D, -1)  # (k,D,D)->(D,kD)
    return {
        "w1": jnp.stack([p["w1"] for p in params]),
        "b1": jnp.stack([p["b1"] for p in params]),
        "w2": jnp.stack([widen(p["w2"]) for p in params]),
        "b2": jnp.stack([p["b2"] for p in params]),
        "w3": jnp.stack([widen(p["w3"]) for p in params]),
        "b3": jnp.stack([p["b3"] for p in params]),
        "w4": jnp.stack([p["w4"] for p in params]),
        "b4": jnp.stack([p["b4"] for p in params]),
    }


# ------------------------- pure-JAX reference --------------------------
def _ref_block(x, p):
    """f32 (HIGHEST precision) forward of one residual block using the
    bf16-stored weights upcast to f32."""
    hi = jax.lax.Precision.HIGHEST
    f32 = lambda a: a.astype(jnp.float32)
    ein = lambda a, b: jnp.einsum("nhwc,cd->nhwd", a, f32(b), precision=hi)
    relu = jax.nn.relu
    h1 = relu(ein(x, p["w1"]) + p["b1"][0])
    h1p = jnp.pad(h1, ((0, 0), (0, 0), (1, 1), (0, 0)))
    h2 = relu(ein(h1p[:, :, :-2], p["w2"][0])
              + ein(h1p[:, :, 1:-1], p["w2"][1])
              + ein(h1p[:, :, 2:], p["w2"][2]) + p["b2"][0])
    h2p = jnp.pad(h2, ((0, 0), (1, 0), (0, 0), (0, 0)))
    h3 = relu(ein(h2p[:, :-1], p["w3"][0])
              + ein(h2p[:, 1:], p["w3"][1]) + p["b3"][0])
    y = ein(h3, p["w4"]) + p["b4"][0]
    return relu(y + x)


def _ref_forward(x_nchw, params):
    x = jnp.transpose(x_nchw, (0, 2, 3, 1))
    for p in params:
        x = _ref_block(x, p)
    return jnp.transpose(x, (0, 3, 1, 2))


# -------------------------------- main ---------------------------------
if __name__ == "__main__":
    key = jax.random.PRNGKey(0)
    kx, kp = jax.random.split(key)

    # Small spatial extent; channel widths are fixed by the module (2048/256).
    N, C, H, W = 2, LATENT, 4, 4
    x = jax.random.normal(kx, (N, C, H, W), jnp.float32)
    params = [init_block_params(k, C, HIDDEN)
              for k in jax.random.split(kp, NUM_BLOCKS)]
    stacked = stack_params(params)

    out = jax.block_until_ready(pixelcnn_forward(x, stacked))
    ref = jax.block_until_ready(_ref_forward(x, params))

    assert out.shape == (N, C, H, W) and out.dtype == jnp.float32
    # Weights are bf16; the kernel additionally feeds the MXU bf16-rounded
    # activations (f32 accumulation, f32 residual stream), so allow bf16-level
    # rounding error compounded across the 5 residual blocks.
    if not bool(jnp.allclose(out, ref, rtol=5e-2, atol=5e-2)):
        err = float(jnp.max(jnp.abs(out - ref)))
        raise AssertionError(f"Pallas output mismatch, max abs err = {err}")

    print("KERNEL_OK")
</pallas_src>

<mosaic_0001>
module attributes {stable_mosaic.version = 11 : i64} {
  func.func @kernel(%arg0: i32, %arg1: memref<32x2048xf32, #tpu.memory_space<vmem>>, %arg2: memref<1x2048x256xbf16, #tpu.memory_space<vmem>>, %arg3: memref<1x1x256xf32, #tpu.memory_space<vmem>>, %arg4: memref<1x256x768xbf16, #tpu.memory_space<vmem>>, %arg5: memref<1x1x256xf32, #tpu.memory_space<vmem>>, %arg6: memref<1x256x512xbf16, #tpu.memory_space<vmem>>, %arg7: memref<1x1x256xf32, #tpu.memory_space<vmem>>, %arg8: memref<1x256x2048xbf16, #tpu.memory_space<vmem>>, %arg9: memref<1x1x2048xf32, #tpu.memory_space<vmem>>, %arg10: memref<32x2048xf32, #tpu.memory_space<vmem>>) attributes {dimension_semantics = [#tpu.dimension_semantics<arbitrary>], iteration_bounds = array<i64: 5>, scalar_prefetch = 0 : i64, scratch_operands = 0 : i64, tpu.core_type = #tpu.core_type<tc>, window_params = [{pipeline_mode = #tpu.pipeline_mode<synchronous>, transform_indices = @transform_0, window_bounds = array<i64: 32, 2048>}, {transform_indices = @transform_1, window_bounds = array<i64: 1, 2048, 256>}, {transform_indices = @transform_2, window_bounds = array<i64: 1, 1, 256>}, {transform_indices = @transform_3, window_bounds = array<i64: 1, 256, 768>}, {transform_indices = @transform_4, window_bounds = array<i64: 1, 1, 256>}, {transform_indices = @transform_5, window_bounds = array<i64: 1, 256, 512>}, {transform_indices = @transform_6, window_bounds = array<i64: 1, 1, 256>}, {transform_indices = @transform_7, window_bounds = array<i64: 1, 256, 2048>}, {transform_indices = @transform_8, window_bounds = array<i64: 1, 1, 2048>}, {pipeline_mode = #tpu.pipeline_mode<synchronous>, transform_indices = @transform_9, window_bounds = array<i64: 32, 2048>}]} {
    %c0_i32 = arith.constant 0 : i32
    %0 = arith.cmpi eq, %arg0, %c0_i32 : i32
    %1 = arith.extui %0 : i1 to i32
    %c0_i32_0 = arith.constant 0 : i32
    %2 = arith.cmpi ne, %1, %c0_i32_0 : i32
    scf.if %2 {
      %c0_46 = arith.constant 0 : index
      %c0_47 = arith.constant 0 : index
      %114 = vector.load %arg1[%c0_46, %c0_47] : memref<32x2048xf32, #tpu.memory_space<vmem>>, vector<32x2048xf32>
      %c0_48 = arith.constant 0 : index
      %c0_49 = arith.constant 0 : index
      %115 = vector.load %arg10[%c0_48, %c0_49] : memref<32x2048xf32, #tpu.memory_space<vmem>>, vector<32x2048xf32>
      tpu.vector_store %arg10[%c0_48, %c0_49], %114 {strides = array<i32>} : memref<32x2048xf32, #tpu.memory_space<vmem>>, vector<32x2048xf32>,
    } else {
    }
    %3 = tpu.iota {dimensions = array<i32: 0>} : vector<32x1xi32>
    %c4_i32 = arith.constant 4 : i32
    %c0_i32_1 = arith.constant 0 : i32
    %4 = arith.cmpi eq, %c4_i32, %c0_i32_1 : i32
    %c1_i32 = arith.constant 1 : i32
    %5 = arith.select %4, %c1_i32, %c4_i32 : i32
    %6 = vector.broadcast %5 : i32 to vector<32x1xi32>
    %7 = arith.remsi %3, %6 : vector<32x1xi32>
    %c0_i32_2 = arith.constant 0 : i32
    %8 = vector.broadcast %c0_i32_2 : i32 to vector<32x1xi32>
    %9 = arith.cmpi ne, %7, %8 : vector<32x1xi32>
    %c0_i32_3 = arith.constant 0 : i32
    %10 = vector.broadcast %c0_i32_3 : i32 to vector<32x1xi32>
    %11 = arith.cmpi slt, %7, %10 : vector<32x1xi32>
    %c0_i32_4 = arith.constant 0 : i32
    %12 = arith.cmpi slt, %5, %c0_i32_4 : i32
    %13 = vector.broadcast %12 : i1 to vector<32x1xi1>
    %14 = vector.broadcast %13 : vector<32x1xi1> to vector<32x1xi1>
    %15 = arith.xori %11, %14 : vector<32x1xi1>
    %16 = arith.andi %15, %9 : vector<32x1xi1>
    %17 = vector.broadcast %5 : i32 to vector<32x1xi32>
    %18 = arith.addi %7, %17 : vector<32x1xi32>
    %19 = arith.select %16, %18, %7 : vector<32x1xi1>, vector<32x1xi32>
    %c0_i32_5 = arith.constant 0 : i32
    %20 = vector.broadcast %c0_i32_5 : i32 to vector<32x1xi32>
    %21 = arith.cmpi sgt, %19, %20 : vector<32x1xi32>
    %22 = arith.extui %21 : vector<32x1xi1> to vector<32x1xi32>
    %23 = arith.sitofp %22 : vector<32x1xi32> to vector<32x1xf32>
    %c3_i32 = arith.constant 3 : i32
    %24 = vector.broadcast %c3_i32 : i32 to vector<32x1xi32>
    %25 = arith.cmpi slt, %19, %24 : vector<32x1xi32>
    %26 = arith.extui %25 : vector<32x1xi1> to vector<32x1xi32>
    %27 = arith.sitofp %26 : vector<32x1xi32> to vector<32x1xf32>
    %c16_i32 = arith.constant 16 : i32
    %c0_i32_6 = arith.constant 0 : i32
    %28 = arith.cmpi eq, %c16_i32, %c0_i32_6 : i32
    %c1_i32_7 = arith.constant 1 : i32
    %29 = arith.select %28, %c1_i32_7, %c16_i32 : i32
    %30 = vector.broadcast %29 : i32 to vector<32x1xi32>
    %31 = arith.remsi %3, %30 : vector<32x1xi32>
    %c0_i32_8 = arith.constant 0 : i32
    %32 = vector.broadcast %c0_i32_8 : i32 to vector<32x1xi32>
    %33 = arith.cmpi ne, %31, %32 : vector<32x1xi32>
    %c0_i32_9 = arith.constant 0 : i32
    %34 = vector.broadcast %c0_i32_9 : i32 to vector<32x1xi32>
    %35 = arith.cmpi slt, %31, %34 : vector<32x1xi32>
    %c0_i32_10 = arith.constant 0 : i32
    %36 = arith.cmpi slt, %29, %c0_i32_10 : i32
    %37 = vector.broadcast %36 : i1 to vector<32x1xi1>
    %38 = vector.broadcast %37 : vector<32x1xi1> to vector<32x1xi1>
    %39 = arith.xori %35, %38 : vector<32x1xi1>
    %40 = arith.andi %39, %33 : vector<32x1xi1>
    %41 = vector.broadcast %29 : i32 to vector<32x1xi32>
    %42 = arith.addi %31, %41 : vector<32x1xi32>
    %43 = arith.select %40, %42, %31 : vector<32x1xi1>, vector<32x1xi32>
    %c4_i32_11 = arith.constant 4 : i32
    %44 = vector.broadcast %c4_i32_11 : i32 to vector<32x1xi32>
    %45 = arith.cmpi sge, %43, %44 : vector<32x1xi32>
    %46 = arith.extui %45 : vector<32x1xi1> to vector<32x1xi32>
    %47 = arith.sitofp %46 : vector<32x1xi32> to vector<32x1xf32>
    %c0 = arith.constant 0 : index
    %c0_12 = arith.constant 0 : index
    %48 = vector.load %arg10[%c0, %c0_12] : memref<32x2048xf32, #tpu.memory_space<vmem>>, vector<32x2048xf32>
    %49 = arith.truncf %48 : vector<32x2048xf32> to vector<32x2048xbf16>
    %c0_13 = arith.constant 0 : index
    %c0_14 = arith.constant 0 : index
    %c0_15 = arith.constant 0 : index
    %50 = vector.load %arg2[%c0_13, %c0_14, %c0_15] : memref<1x2048x256xbf16, #tpu.memory_space<vmem>>, vector<1x2048x256xbf16>
    %51 = vector.shape_cast %50 : vector<1x2048x256xbf16> to vector<2048x256xbf16>
    %cst = arith.constant dense<0.000000e+00> : vector<32x256xf32>
    %52 = tpu.matmul %49, %51, %cst {dimension_numbers = #tpu.dot_dimension_numbers<[1], [0], [0], [1], [0, 0, 1, 1], [], []>} : vector<32x2048xbf16>, vector<2048x256xbf16>, vector<32x256xf32> -> vector<32x256xf32>
    %c0_16 = arith.constant 0 : index
    %c0_17 = arith.constant 0 : index
    %c0_18 = arith.constant 0 : index
    %53 = vector.load %arg3[%c0_16, %c0_17, %c0_18] : memref<1x1x256xf32, #tpu.memory_space<vmem>>, vector<1x1x256xf32>
    %54 = vector.shape_cast %53 : vector<1x1x256xf32> to vector<1x256xf32>
    %55 = vector.broadcast %54 : vector<1x256xf32> to vector<32x256xf32>
    %56 = arith.addf %52, %55 : vector<32x256xf32>
    %cst_19 = arith.constant 0.000000e+00 : f32
    %57 = vector.broadcast %cst_19 : f32 to vector<32x256xf32>
    %58 = arith.maximumf %56, %57 : vector<32x256xf32>
    %59 = arith.truncf %58 : vector<32x256xf32> to vector<32x256xbf16>
    %c0_20 = arith.constant 0 : index
    %c0_21 = arith.constant 0 : index
    %c0_22 = arith.constant 0 : index
    %60 = vector.load %arg4[%c0_20, %c0_21, %c0_22] : memref<1x256x768xbf16, #tpu.memory_space<vmem>>, vector<1x256x768xbf16>
    %61 = vector.shape_cast %60 : vector<1x256x768xbf16> to vector<256x768xbf16>
    %cst_23 = arith.constant dense<0.000000e+00> : vector<32x768xf32>
    %62 = tpu.matmul %59, %61, %cst_23 {dimension_numbers = #tpu.dot_dimension_numbers<[1], [0], [0], [1], [0, 0, 1, 1], [], []>} : vector<32x256xbf16>, vector<256x768xbf16>, vector<32x768xf32> -> vector<32x768xf32>
    %63 = vector.extract_strided_slice %62 {offsets = [0, 0], sizes = [32, 256], strides = [1, 1]} : vector<32x768xf32> to vector<32x256xf32>
    %64 = vector.extract_strided_slice %63 {offsets = [31, 0], sizes = [1, 256], strides = [1, 1]} : vector<32x256xf32> to vector<1x256xf32>
    %65 = vector.extract_strided_slice %63 {offsets = [0, 0], sizes = [31, 256], strides = [1, 1]} : vector<32x256xf32> to vector<31x256xf32>
    %66 = tpu.concatenate %64, %65 in 0 : vector<1x256xf32>, vector<31x256xf32> -> vector<32x256xf32>
    %67 = vector.broadcast %23 : vector<32x1xf32> to vector<32x256xf32>
    %68 = arith.mulf %66, %67 : vector<32x256xf32>
    %69 = vector.extract_strided_slice %62 {offsets = [0, 512], sizes = [32, 256], strides = [1, 1]} : vector<32x768xf32> to vector<32x256xf32>
    %70 = vector.extract_strided_slice %69 {offsets = [1, 0], sizes = [31, 256], strides = [1, 1]} : vector<32x256xf32> to vector<31x256xf32>
    %71 = vector.extract_strided_slice %69 {offsets = [0, 0], sizes = [1, 256], strides = [1, 1]} : vector<32x256xf32> to vector<1x256xf32>
    %72 = tpu.concatenate %70, %71 in 0 : vector<31x256xf32>, vector<1x256xf32> -> vector<32x256xf32>
    %73 = vector.broadcast %27 : vector<32x1xf32> to vector<32x256xf32>
    %74 = arith.mulf %72, %73 : vector<32x256xf32>
    %75 = vector.extract_strided_slice %62 {offsets = [0, 256], sizes = [32, 256], strides = [1, 1]} : vector<32x768xf32> to vector<32x256xf32>
    %76 = arith.addf %68, %75 : vector<32x256xf32>
    %77 = arith.addf %76, %74 : vector<32x256xf32>
    %c0_24 = arith.constant 0 : index
    %c0_25 = arith.constant 0 : index
    %c0_26 = arith.constant 0 : index
    %78 = vector.load %arg5[%c0_24, %c0_25, %c0_26] : memref<1x1x256xf32, #tpu.memory_space<vmem>>, vector<1x1x256xf32>
    %79 = vector.shape_cast %78 : vector<1x1x256xf32> to vector<1x256xf32>
    %80 = vector.broadcast %79 : vector<1x256xf32> to vector<32x256xf32>
    %81 = arith.addf %77, %80 : vector<32x256xf32>
    %cst_27 = arith.constant 0.000000e+00 : f32
    %82 = vector.broadcast %cst_27 : f32 to vector<32x256xf32>
    %83 = arith.maximumf %81, %82 : vector<32x256xf32>
    %84 = arith.truncf %83 : vector<32x256xf32> to vector<32x256xbf16>
    %c0_28 = arith.constant 0 : index
    %c0_29 = arith.constant 0 : index
    %c0_30 = arith.constant 0 : index
    %85 = vector.load %arg6[%c0_28, %c0_29, %c0_30] : memref<1x256x512xbf16, #tpu.memory_space<vmem>>, vector<1x256x512xbf16>
    %86 = vector.shape_cast %85 : vector<1x256x512xbf16> to vector<256x512xbf16>
    %cst_31 = arith.constant dense<0.000000e+00> : vector<32x512xf32>
    %87 = tpu.matmul %84, %86, %cst_31 {dimension_numbers = #tpu.dot_dimension_numbers<[1], [0], [0], [1], [0, 0, 1, 1], [], []>} : vector<32x256xbf16>, vector<256x512xbf16>, vector<32x512xf32> -> vector<32x512xf32>
    %88 = vector.extract_strided_slice %87 {offsets = [0, 0], sizes = [32, 256], strides = [1, 1]} : vector<32x512xf32> to vector<32x256xf32>
    %89 = vector.extract_strided_slice %88 {offsets = [28, 0], sizes = [4, 256], strides = [1, 1]} : vector<32x256xf32> to vector<4x256xf32>
    %90 = vector.extract_strided_slice %88 {offsets = [0, 0], sizes = [28, 256], strides = [1, 1]} : vector<32x256xf32> to vector<28x256xf32>
    %91 = tpu.concatenate %89, %90 in 0 : vector<4x256xf32>, vector<28x256xf32> -> vector<32x256xf32>
    %92 = vector.broadcast %47 : vector<32x1xf32> to vector<32x256xf32>
    %93 = arith.mulf %91, %92 : vector<32x256xf32>
    %94 = vector.extract_strided_slice %87 {offsets = [0, 256], sizes = [32, 256], strides = [1, 1]} : vector<32x512xf32> to vector<32x256xf32>
    %95 = arith.addf %93, %94 : vector<32x256xf32>
    %c0_32 = arith.constant 0 : index
    %c0_33 = arith.constant 0 : index
    %c0_34 = arith.constant 0 : index
    %96 = vector.load %arg7[%c0_32, %c0_33, %c0_34] : memref<1x1x256xf32, #tpu.memory_space<vmem>>, vector<1x1x256xf32>
    %97 = vector.shape_cast %96 : vector<1x1x256xf32> to vector<1x256xf32>
    %98 = vector.broadcast %97 : vector<1x256xf32> to vector<32x256xf32>
    %99 = arith.addf %95, %98 : vector<32x256xf32>
    %cst_35 = arith.constant 0.000000e+00 : f32
    %100 = vector.broadcast %cst_35 : f32 to vector<32x256xf32>
    %101 = arith.maximumf %99, %100 : vector<32x256xf32>
    %102 = arith.truncf %101 : vector<32x256xf32> to vector<32x256xbf16>
    %c0_36 = arith.constant 0 : index
    %c0_37 = arith.constant 0 : index
    %c0_38 = arith.constant 0 : index
    %103 = vector.load %arg8[%c0_36, %c0_37, %c0_38] : memref<1x256x2048xbf16, #tpu.memory_space<vmem>>, vector<1x256x2048xbf16>
    %104 = vector.shape_cast %103 : vector<1x256x2048xbf16> to vector<256x2048xbf16>
    %cst_39 = arith.constant dense<0.000000e+00> : vector<32x2048xf32>
    %105 = tpu.matmul %102, %104, %cst_39 {dimension_numbers = #tpu.dot_dimension_numbers<[1], [0], [0], [1], [0, 0, 1, 1], [], []>} : vector<32x256xbf16>, vector<256x2048xbf16>, vector<32x2048xf32> -> vector<32x2048xf32>
    %c0_40 = arith.constant 0 : index
    %c0_41 = arith.constant 0 : index
    %c0_42 = arith.constant 0 : index
    %106 = vector.load %arg9[%c0_40, %c0_41, %c0_42] : memref<1x1x2048xf32, #tpu.memory_space<vmem>>, vector<1x1x2048xf32>
    %107 = vector.shape_cast %106 : vector<1x1x2048xf32> to vector<1x2048xf32>
    %108 = vector.broadcast %107 : vector<1x2048xf32> to vector<32x2048xf32>
    %109 = arith.addf %105, %108 : vector<32x2048xf32>
    %110 = arith.addf %109, %48 : vector<32x2048xf32>
    %cst_43 = arith.constant 0.000000e+00 : f32
    %111 = vector.broadcast %cst_43 : f32 to vector<32x2048xf32>
    %112 = arith.maximumf %110, %111 : vector<32x2048xf32>
    %c0_44 = arith.constant 0 : index
    %c0_45 = arith.constant 0 : index
    %113 = vector.load %arg10[%c0_44, %c0_45] : memref<32x2048xf32, #tpu.memory_space<vmem>>, vector<32x2048xf32>
    tpu.vector_store %arg10[%c0_44, %c0_45], %112 {strides = array<i32>} : memref<32x2048xf32, #tpu.memory_space<vmem>>, vector<32x2048xf32>,
    return
  }
  func.func @transform_0(%arg0: i32) -> (i32, i32) {
    %c0_i32 = arith.constant 0 : i32
    %c0_i32_0 = arith.constant 0 : i32
    %c0_i32_1 = arith.constant 0 : i32
    return %c0_i32, %c0_i32_0 : i32, i32
  }
  func.func @transform_1(%arg0: i32) -> (i32, i32, i32) {
    %c0_i32 = arith.constant 0 : i32
    %c0_i32_0 = arith.constant 0 : i32
    %c0_i32_1 = arith.constant 0 : i32
    return %arg0, %c0_i32, %c0_i32_0 : i32, i32, i32
  }
  func.func @transform_2(%arg0: i32) -> (i32, i32, i32) {
    %c0_i32 = arith.constant 0 : i32
    %c0_i32_0 = arith.constant 0 : i32
    %c0_i32_1 = arith.constant 0 : i32
    return %arg0, %c0_i32, %c0_i32_0 : i32, i32, i32
  }
  func.func @transform_3(%arg0: i32) -> (i32, i32, i32) {
    %c0_i32 = arith.constant 0 : i32
    %c0_i32_0 = arith.constant 0 : i32
    %c0_i32_1 = arith.constant 0 : i32
    return %arg0, %c0_i32, %c0_i32_0 : i32, i32, i32
  }
  func.func @transform_4(%arg0: i32) -> (i32, i32, i32) {
    %c0_i32 = arith.constant 0 : i32
    %c0_i32_0 = arith.constant 0 : i32
    %c0_i32_1 = arith.constant 0 : i32
    return %arg0, %c0_i32, %c0_i32_0 : i32, i32, i32
  }
  func.func @transform_5(%arg0: i32) -> (i32, i32, i32) {
    %c0_i32 = arith.constant 0 : i32
    %c0_i32_0 = arith.constant 0 : i32
    %c0_i32_1 = arith.constant 0 : i32
    return %arg0, %c0_i32, %c0_i32_0 : i32, i32, i32
  }
  func.func @transform_6(%arg0: i32) -> (i32, i32, i32) {
    %c0_i32 = arith.constant 0 : i32
    %c0_i32_0 = arith.constant 0 : i32
    %c0_i32_1 = arith.constant 0 : i32
    return %arg0, %c0_i32, %c0_i32_0 : i32, i32, i32
  }
  func.func @transform_7(%arg0: i32) -> (i32, i32, i32) {
    %c0_i32 = arith.constant 0 : i32
    %c0_i32_0 = arith.constant 0 : i32
    %c0_i32_1 = arith.constant 0 : i32
    return %arg0, %c0_i32, %c0_i32_0 : i32, i32, i32
  }
  func.func @transform_8(%arg0: i32) -> (i32, i32, i32) {
    %c0_i32 = arith.constant 0 : i32
    %c0_i32_0 = arith.constant 0 : i32
    %c0_i32_1 = arith.constant 0 : i32
    return %arg0, %c0_i32, %c0_i32_0 : i32, i32, i32
  }
  func.func @transform_9(%arg0: i32) -> (i32, i32) {
    %c0_i32 = arith.constant 0 : i32
    %c0_i32_0 = arith.constant 0 : i32
    %c0_i32_1 = arith.constant 0 : i32
    return %c0_i32, %c0_i32_0 : i32, i32
  }
}

</mosaic_0001>

<llo_original>
// kernel: pixelcnn_forward.1
$region0: #{pixelcnn_forward.1}
  #allocation0 [shape = 'u32[]', space=smem, size = 0x4, offset = 0x4, fixed_abs, tag = 'smem constant byte address 0x4 - core index']
  #allocation1 [shape = 'u32[144,128]{1,0:T(1,128)}', space=vmem, size = 0x12000, scoped, tag = 'internal scratch']
  %s0 = inlined_call_operand.vmem [shape: f32[32,2048], index: 0, kind: input, shape index: {}]
  %s1 = inlined_call_operand.hbm [shape: bf16[5,2048,256], index: 1, kind: input, shape index: {}]
  %s2 = inlined_call_operand.hbm [shape: f32[5,1,256], index: 2, kind: input, shape index: {}]
  %s3 = inlined_call_operand.hbm [shape: bf16[5,256,768], index: 3, kind: input, shape index: {}]
  %s4 = inlined_call_operand.hbm [shape: f32[5,1,256], index: 4, kind: input, shape index: {}]
  %s5 = inlined_call_operand.hbm [shape: bf16[5,256,512], index: 5, kind: input, shape index: {}]
  %s6 = inlined_call_operand.hbm [shape: f32[5,1,256], index: 6, kind: input, shape index: {}]
  %s7 = inlined_call_operand.hbm [shape: bf16[5,256,2048], index: 7, kind: input, shape index: {}]
  %s8 = inlined_call_operand.hbm [shape: f32[5,1,2048], index: 8, kind: input, shape index: {}]
  %s9 = inlined_call_operand.vmem [shape: f32[32,2048], index: 9, kind: output, shape index: {}]
  %s10 = sld [smem:[#allocation0]]
  $region105: #{pixelcnn_forward.1} parent=0
    _
  %s12 = ssub.s32 1, %s10
  %s13 = scalar_select 0, %s12, %s10
  $region1: #{pixelcnn_forward.1} parent=0
    #allocation2 [shape = 'u8[2097152]{0}', space=vmem, size = 0x200000, scoped, tag = 'input window, operand 1']
    #allocation3 [shape = 's32[2]{0}', space=sflag, size = 0x8, scoped, tag = 'scoped memory for pixelcnn_forward.1']
    #allocation4 [shape = 'u8[2048]{0}', space=vmem, size = 0x800, scoped, tag = 'input window, operand 2']
    #allocation5 [shape = 's32[2]{0}', space=sflag, size = 0x8, scoped, tag = 'scoped memory for pixelcnn_forward.1']
    #allocation6 [shape = 'u8[786432]{0}', space=vmem, size = 0xc0000, scoped, tag = 'input window, operand 3']
    #allocation7 [shape = 'u8[2048]{0}', space=vmem, size = 0x800, scoped, tag = 'input window, operand 4']
    #allocation8 [shape = 's32[2]{0}', space=sflag, size = 0x8, scoped, tag = 'scoped memory for pixelcnn_forward.1']
    #allocation9 [shape = 'u8[524288]{0}', space=vmem, size = 0x80000, scoped, tag = 'input window, operand 5']
    #allocation10 [shape = 'u8[2048]{0}', space=vmem, size = 0x800, scoped, tag = 'input window, operand 6']
    #allocation11 [shape = 's32[2]{0}', space=sflag, size = 0x8, scoped, tag = 'scoped memory for pixelcnn_forward.1']
    #allocation12 [shape = 'u8[2097152]{0}', space=vmem, size = 0x200000, scoped, tag = 'input window, operand 7']
    #allocation13 [shape = 'u8[16384]{0}', space=vmem, size = 0x4000, scoped, tag = 'input window, operand 8']
    #allocation14 [shape = 's32[2]{0}', space=sflag, size = 0x8, scoped, tag = 'scoped memory for pixelcnn_forward.1']
    %14 = vsyncpa [#allocation3], 0
    %s15 = scalar_lea.sflag [#allocation3], 1
    %16 = vsyncpa %s15, 0
    %17 = vsyncpa [#allocation5], 0
    %s18 = scalar_lea.sflag [#allocation5], 1
    %19 = vsyncpa %s18, 0
    %20 = vsyncpa [#allocation8], 0
    %s21 = scalar_lea.sflag [#allocation8], 1
    %22 = vsyncpa %s21, 0
    %23 = vsyncpa [#allocation11], 0
    %s24 = scalar_lea.sflag [#allocation11], 1
    %25 = vsyncpa %s24, 0
    %26 = vsyncpa [#allocation14], 0
    %s27 = scalar_lea.sflag [#allocation14], 1
    %28 = vsyncpa %s27, 0
    loop: start=0, step=1, limit=7
    $region2: #{pixelcnn_forward.1} parent=1 // loop_pre_header
      _
    $region3: #{pixelcnn_forward.1} parent=1 // loop_header
      %s30 = sphi 0, %s34
      %p31 = scmp.ge.s32.totalorder %s30, 7
      %s38 = sphi 0, %s38
      %s40 = sphi 0, %s38
      %s41 = sphi 0, %s40
      %s55 = sphi 0, %s41
      %s61 = sphi 0, %s63
      %s64 = sphi 0, %s61
      %s65 = sphi 0, %s64
      %s81 = sphi 0, %s65
      %s87 = sphi 0, %s89
      %s90 = sphi 0, %s87
      %s91 = sphi 0, %s90
      %s107 = sphi 0, %s91
      %s113 = sphi 0, %s115
      %s116 = sphi 0, %s113
      %s117 = sphi 0, %s116
      %s133 = sphi 0, %s117
      %s139 = sphi 0, %s141
      %s142 = sphi 0, %s139
      %s143 = sphi 0, %s142
      %s159 = sphi 0, %s143
      %s165 = sphi 0, %s167
      %s168 = sphi 0, %s165
      %s169 = sphi 0, %s168
      %s185 = sphi 0, %s169
      %s191 = sphi 0, %s193
      %s194 = sphi 0, %s191
      %s195 = sphi 0, %s194
      %s211 = sphi 0, %s195
      %s217 = sphi 0, %s219
      %s220 = sphi 0, %s217
      %s221 = sphi 0, %s220
      %s237 = sphi 0, %s221
      %s243 = sphi 0, %s245
      %s246 = sphi 0, %s243
      %s247 = sphi 0, %s246
      %s263 = sphi 0, %s247
      %s267 = sphi 0, %s267
      %s269 = sphi 0, %s267
      %s270 = sphi 0, %s269
      %s284 = sphi 0, %s270
    $region4: #{pixelcnn_forward.1} parent=1 // loop_header_branch
      %33 = sbr.rel (%p31) target = $region8
    $region5: #{pixelcnn_forward.1} parent=1 // loop_body
      %s35 = ssub.s32 %s30, 1
      %s36 = ssub.s32 %s30, 2
      %s37 = sadd.s32 %s30, 1
      %s39 = sadd.s32 %s38, 1
      %p42 = scmp.eq.s32.totalorder %s30, 4
      %p43 = scmp.ne.s32.totalorder %s38, %s40
      %p44 = scmp.eq.s32.totalorder %s30, 0
      %p45 = por %p43, %p44
      %p46 = scmp.ne.s32.totalorder %s38, %s40
      %p47 = scmp.eq.s32.totalorder %s35, 4
      %p48 = por %p46, %p47
      %p49 = scmp.ne.s32.totalorder %s40, %s41
      %p50 = scmp.eq.s32.totalorder %s35, 0
      %p51 = por %p49, %p50
      %p52 = scmp.ne.s32.totalorder %s40, %s41
      %p53 = scmp.eq.s32.totalorder %s36, 4
      %p54 = por %p52, %p53
      %p56 = scmp.ne.s32.totalorder %s41, %s55
      %p57 = scmp.eq.s32.totalorder %s36, 0
      %p58 = por %p56, %p57
      %s59 = ssub.s32 %s30, %s37
      %p60 = scmp.eq.s32.totalorder %s59, 0
      %s62 = sadd.s32 %s61, 1
      %s63 = scalar_select %p60, %s61, %s62
      %p66 = pneg %p60
      %p67 = scmp.eq.s32.totalorder %s30, 4
      %p68 = por %p66, %p67
      %p69 = scmp.ne.s32.totalorder %s61, %s64
      %p70 = scmp.eq.s32.totalorder %s30, 0
      %p71 = por %p69, %p70
      %p72 = scmp.ne.s32.totalorder %s61, %s64
      %p73 = scmp.eq.s32.totalorder %s35, 4
      %p74 = por %p72, %p73
      %p75 = scmp.ne.s32.totalorder %s64, %s65
      %p76 = scmp.eq.s32.totalorder %s35, 0
      %p77 = por %p75, %p76
      %p78 = scmp.ne.s32.totalorder %s64, %s65
      %p79 = scmp.eq.s32.totalorder %s36, 4
      %p80 = por %p78, %p79
      %p82 = scmp.ne.s32.totalorder %s65, %s81
      %p83 = scmp.eq.s32.totalorder %s36, 0
      %p84 = por %p82, %p83
      %s85 = ssub.s32 %s30, %s37
      %p86 = scmp.eq.s32.totalorder %s85, 0
      %s88 = sadd.s32 %s87, 1
      %s89 = scalar_select %p86, %s87, %s88
      %p92 = pneg %p86
      %p93 = scmp.eq.s32.totalorder %s30, 4
      %p94 = por %p92, %p93
      %p95 = scmp.ne.s32.totalorder %s87, %s90
      %p96 = scmp.eq.s32.totalorder %s30, 0
      %p97 = por %p95, %p96
      %p98 = scmp.ne.s32.totalorder %s87, %s90
      %p99 = scmp.eq.s32.totalorder %s35, 4
      %p100 = por %p98, %p99
      %p101 = scmp.ne.s32.totalorder %s90, %s91
      %p102 = scmp.eq.s32.totalorder %s35, 0
      %p103 = por %p101, %p102
      %p104 = scmp.ne.s32.totalorder %s90, %s91
      %p105 = scmp.eq.s32.totalorder %s36, 4
      %p106 = por %p104, %p105
      %p108 = scmp.ne.s32.totalorder %s91, %s107
      %p109 = scmp.eq.s32.totalorder %s36, 0
      %p110 = por %p108, %p109
      %s111 = ssub.s32 %s30, %s37
      %p112 = scmp.eq.s32.totalorder %s111, 0
      %s114 = sadd.s32 %s113, 1
      %s115 = scalar_select %p112, %s113, %s114
      %p118 = pneg %p112
      %p119 = scmp.eq.s32.totalorder %s30, 4
      %p120 = por %p118, %p119
      %p121 = scmp.ne.s32.totalorder %s113, %s116
      %p122 = scmp.eq.s32.totalorder %s30, 0
      %p123 = por %p121, %p122
      %p124 = scmp.ne.s32.totalorder %s113, %s116
      %p125 = scmp.eq.s32.totalorder %s35, 4
      %p126 = por %p124, %p125
      %p127 = scmp.ne.s32.totalorder %s116, %s117
      %p128 = scmp.eq.s32.totalorder %s35, 0
      %p129 = por %p127, %p128
      %p130 = scmp.ne.s32.totalorder %s116, %s117
      %p131 = scmp.eq.s32.totalorder %s36, 4
      %p132 = por %p130, %p131
      %p134 = scmp.ne.s32.totalorder %s117, %s133
      %p135 = scmp.eq.s32.totalorder %s36, 0
      %p136 = por %p134, %p135
      %s137 = ssub.s32 %s30, %s37
      %p138 = scmp.eq.s32.totalorder %s137, 0
      %s140 = sadd.s32 %s139, 1
      %s141 = scalar_select %p138, %s139, %s140
      %p144 = pneg %p138
      %p145 = scmp.eq.s32.totalorder %s30, 4
      %p146 = por %p144, %p145
      %p147 = scmp.ne.s32.totalorder %s139, %s142
      %p148 = scmp.eq.s32.totalorder %s30, 0
      %p149 = por %p147, %p148
      %p150 = scmp.ne.s32.totalorder %s139, %s142
      %p151 = scmp.eq.s32.totalorder %s35, 4
      %p152 = por %p150, %p151
      %p153 = scmp.ne.s32.totalorder %s142, %s143
      %p154 = scmp.eq.s32.totalorder %s35, 0
      %p155 = por %p153, %p154
      %p156 = scmp.ne.s32.totalorder %s142, %s143
      %p157 = scmp.eq.s32.totalorder %s36, 4
      %p158 = por %p156, %p157
      %p160 = scmp.ne.s32.totalorder %s143, %s159
      %p161 = scmp.eq.s32.totalorder %s36, 0
      %p162 = por %p160, %p161
      %s163 = ssub.s32 %s30, %s37
      %p164 = scmp.eq.s32.totalorder %s163, 0
      %s166 = sadd.s32 %s165, 1
      %s167 = scalar_select %p164, %s165, %s166
      %p170 = pneg %p164
      %p171 = scmp.eq.s32.totalorder %s30, 4
      %p172 = por %p170, %p171
      %p173 = scmp.ne.s32.totalorder %s165, %s168
      %p174 = scmp.eq.s32.totalorder %s30, 0
      %p175 = por %p173, %p174
      %p176 = scmp.ne.s32.totalorder %s165, %s168
      %p177 = scmp.eq.s32.totalorder %s35, 4
      %p178 = por %p176, %p177
      %p179 = scmp.ne.s32.totalorder %s168, %s169
      %p180 = scmp.eq.s32.totalorder %s35, 0
      %p181 = por %p179, %p180
      %p182 = scmp.ne.s32.totalorder %s168, %s169
      %p183 = scmp.eq.s32.totalorder %s36, 4
      %p184 = por %p182, %p183
      %p186 = scmp.ne.s32.totalorder %s169, %s185
      %p187 = scmp.eq.s32.totalorder %s36, 0
      %p188 = por %p186, %p187
      %s189 = ssub.s32 %s30, %s37
      %p190 = scmp.eq.s32.totalorder %s189, 0
      %s192 = sadd.s32 %s191, 1
      %s193 = scalar_select %p190, %s191, %s192
      %p196 = pneg %p190
      %p197 = scmp.eq.s32.totalorder %s30, 4
      %p198 = por %p196, %p197
      %p199 = scmp.ne.s32.totalorder %s191, %s194
      %p200 = scmp.eq.s32.totalorder %s30, 0
      %p201 = por %p199, %p200
      %p202 = scmp.ne.s32.totalorder %s191, %s194
      %p203 = scmp.eq.s32.totalorder %s35, 4
      %p204 = por %p202, %p203
      %p205 = scmp.ne.s32.totalorder %s194, %s195
      %p206 = scmp.eq.s32.totalorder %s35, 0
      %p207 = por %p205, %p206
      %p208 = scmp.ne.s32.totalorder %s194, %s195
      %p209 = scmp.eq.s32.totalorder %s36, 4
      %p210 = por %p208, %p209
      %p212 = scmp.ne.s32.totalorder %s195, %s211
      %p213 = scmp.eq.s32.totalorder %s36, 0
      %p214 = por %p212, %p213
      %s215 = ssub.s32 %s30, %s37
      %p216 = scmp.eq.s32.totalorder %s215, 0
      %s218 = sadd.s32 %s217, 1
      %s219 = scalar_select %p216, %s217, %s218
      %p222 = pneg %p216
      %p223 = scmp.eq.s32.totalorder %s30, 4
      %p224 = por %p222, %p223
      %p225 = scmp.ne.s32.totalorder %s217, %s220
      %p226 = scmp.eq.s32.totalorder %s30, 0
      %p227 = por %p225, %p226
      %p228 = scmp.ne.s32.totalorder %s217, %s220
      %p229 = scmp.eq.s32.totalorder %s35, 4
      %p230 = por %p228, %p229
      %p231 = scmp.ne.s32.totalorder %s220, %s221
      %p232 = scmp.eq.s32.totalorder %s35, 0
      %p233 = por %p231, %p232
      %p234 = scmp.ne.s32.totalorder %s220, %s221
      %p235 = scmp.eq.s32.totalorder %s36, 4
      %p236 = por %p234, %p235
      %p238 = scmp.ne.s32.totalorder %s221, %s237
      %p239 = scmp.eq.s32.totalorder %s36, 0
      %p240 = por %p238, %p239
      %s241 = ssub.s32 %s30, %s37
      %p242 = scmp.eq.s32.totalorder %s241, 0
      %s244 = sadd.s32 %s243, 1
      %s245 = scalar_select %p242, %s243, %s244
      %p248 = pneg %p242
      %p249 = scmp.eq.s32.totalorder %s30, 4
      %p250 = por %p248, %p249
      %p251 = scmp.ne.s32.totalorder %s243, %s246
      %p252 = scmp.eq.s32.totalorder %s30, 0
      %p253 = por %p251, %p252
      %p254 = scmp.ne.s32.totalorder %s243, %s246
      %p255 = scmp.eq.s32.totalorder %s35, 4
      %p256 = por %p254, %p255
      %p257 = scmp.ne.s32.totalorder %s246, %s247
      %p258 = scmp.eq.s32.totalorder %s35, 0
      %p259 = por %p257, %p258
      %p260 = scmp.ne.s32.totalorder %s246, %s247
      %p261 = scmp.eq.s32.totalorder %s36, 4
      %p262 = por %p260, %p261
      %p264 = scmp.ne.s32.totalorder %s247, %s263
      %p265 = scmp.eq.s32.totalorder %s36, 0
      %p266 = por %p264, %p265
      %s268 = sadd.s32 %s267, 1
      %p271 = scmp.eq.s32.totalorder %s30, 4
      %p272 = scmp.ne.s32.totalorder %s267, %s269
      %p273 = scmp.eq.s32.totalorder %s30, 0
      %p274 = por %p272, %p273
      %p275 = scmp.ne.s32.totalorder %s267, %s269
      %p276 = scmp.eq.s32.totalorder %s35, 4
      %p277 = por %p275, %p276
      %p278 = scmp.ne.s32.totalorder %s269, %s270
      %p279 = scmp.eq.s32.totalorder %s35, 0
      %p280 = por %p278, %p279
      %p281 = scmp.ne.s32.totalorder %s269, %s270
      %p282 = scmp.eq.s32.totalorder %s36, 4
      %p283 = por %p281, %p282
      %p285 = scmp.ne.s32.totalorder %s270, %s284
      %p286 = scmp.eq.s32.totalorder %s36, 0
      %p287 = por %p285, %p286
      %p288 = scmp.le.s32.totalorder 1, %s30
      %p289 = scmp.lt.s32.totalorder %s30, 6
      %p290 = pnand %p288, %p289
      %p291 = pneg %p290
      // Predicated region
      $region9: #{pixelcnn_forward.1} parent=5 // pred_check
        _
      $region10: #{pixelcnn_forward.1} parent=5 // pred_check_branch
        %293 = sbr.rel (%p290) target = $region12
      $region11: #{pixelcnn_forward.1} parent=5 // pred_region
        %s294 = ssub.s32 %s30, 1
        // Predicated region
        $region13: #{pixelcnn_forward.1} parent=11 // pred_check
          %p295 = pneg %p51
        $region14: #{pixelcnn_forward.1} parent=11 // pred_check_branch
          %297 = sbr.rel (%p295) target = $region16
        $region15: #{pixelcnn_forward.1} parent=11 // pred_region
          _
        $region16: #{pixelcnn_forward.1} parent=11 // pred_fallthru
          _
      $region12: #{pixelcnn_forward.1} parent=5 // pred_fallthru
        _
      %p298 = scmp.lt.s32.totalorder %s30, 5
      // Predicated region
      $region17: #{pixelcnn_forward.1} parent=5 // pred_check
        %p299 = pneg %p298
      $region18: #{pixelcnn_forward.1} parent=5 // pred_check_branch
        %301 = sbr.rel (%p299) target = $region20
      $region19: #{pixelcnn_forward.1} parent=5 // pred_region
        // Predicated region
        $region21: #{pixelcnn_forward.1} parent=19 // pred_check
          %p302 = pneg %p71
        $region22: #{pixelcnn_forward.1} parent=19 // pred_check_branch
          %304 = sbr.rel (%p302) target = $region24
        $region23: #{pixelcnn_forward.1} parent=19 // pred_region
          %s305 = sand.u32 %s61, 1
          %s306 = scalar_lea.sflag [#allocation3], %s305
          %s307 = sand.u32 %s61, 1
          %s308 = smul.addr %s307, 2048
          %s309 = scalar_lea.vmem [#allocation2], %s308
          %s311 = ssub.s32 32768, 32768
          %312 = vsyncadd %s306, %s311
          %s313 = smul.addr %s30, 512
          %s314 = smul.addr %s313, 64
          %s315 = scalar_lea.hbm %s1, %s314
          %s316 = sshll.u32 %s309, 4
          %s317 = int_to_ptr.vmem [resolvable:$true] %s316
          %322 = dma.hbm_to_vmem [thread:$0]  %s315, 32768, %s317, %s306, 128, 128, 8
        $region24: #{pixelcnn_forward.1} parent=19 // pred_fallthru
          _
        // Predicated region
        $region25: #{pixelcnn_forward.1} parent=19 // pred_check
          %p323 = pneg %p97
        $region26: #{pixelcnn_forward.1} parent=19 // pred_check_branch
          %325 = sbr.rel (%p323) target = $region28
        $region27: #{pixelcnn_forward.1} parent=19 // pred_region
          %s326 = sand.u32 %s30, 1
          %s327 = scalar_lea.sflag [#allocation5], %s326
          %s328 = sand.u32 %s87, 1
          %s329 = smul.addr %s328, 2
          %s330 = scalar_lea.vmem [#allocation4], %s329
          %s332 = ssub.s32 32, 32
          %333 = vsyncadd %s327, %s332
          %s334 = smul.addr %s30, 2
          %s335 = smul.addr %s334, 16
          %s336 = scalar_lea.hbm %s2, %s335
          %s338 = sshll.u32 %s330, 4
          %s339 = int_to_ptr.vmem [resolvable:$true] %s338
          %341 = dma.hbm_to_vmem [thread:$0]  %s336, 32, %s339, %s327
        $region28: #{pixelcnn_forward.1} parent=19 // pred_fallthru
          _
        // Predicated region
        $region29: #{pixelcnn_forward.1} parent=19 // pred_check
          %p342 = pneg %p123
        $region30: #{pixelcnn_forward.1} parent=19 // pred_check_branch
          %344 = sbr.rel (%p342) target = $region32
        $region31: #{pixelcnn_forward.1} parent=19 // pred_region
          %s345 = sand.u32 %s30, 1
          %s346 = scalar_lea.sflag [#allocation5], %s345
          %s347 = sand.u32 %s113, 1
          %s348 = smul.addr %s347, 768
          %s349 = scalar_lea.vmem [#allocation6], %s348
          %s351 = ssub.s32 12288, 12288
          %352 = vsyncadd %s346, %s351
          %s353 = smul.addr %s30, 192
          %s354 = smul.addr %s353, 64
          %s355 = scalar_lea.hbm %s3, %s354
          %s356 = sshll.u32 %s349, 4
          %s357 = int_to_ptr.vmem [resolvable:$true] %s356
          %362 = dma.hbm_to_vmem [thread:$0]  %s355, 12288, %s357, %s346, 384, 384, 24
        $region32: #{pixelcnn_forward.1} parent=19 // pred_fallthru
          _
        // Predicated region
        $region33: #{pixelcnn_forward.1} parent=19 // pred_check
          %p363 = pneg %p149
        $region34: #{pixelcnn_forward.1} parent=19 // pred_check_branch
          %365 = sbr.rel (%p363) target = $region36
        $region35: #{pixelcnn_forward.1} parent=19 // pred_region
          %s366 = sand.u32 %s30, 1
          %s367 = scalar_lea.sflag [#allocation8], %s366
          %s368 = sand.u32 %s139, 1
          %s369 = smul.addr %s368, 2
          %s370 = scalar_lea.vmem [#allocation7], %s369
          %s372 = ssub.s32 32, 32
          %373 = vsyncadd %s367, %s372
          %s374 = smul.addr %s30, 2
          %s375 = smul.addr %s374, 16
          %s376 = scalar_lea.hbm %s4, %s375
          %s378 = sshll.u32 %s370, 4
          %s379 = int_to_ptr.vmem [resolvable:$true] %s378
          %381 = dma.hbm_to_vmem [thread:$0]  %s376, 32, %s379, %s367
        $region36: #{pixelcnn_forward.1} parent=19 // pred_fallthru
          _
        // Predicated region
        $region37: #{pixelcnn_forward.1} parent=19 // pred_check
          %p382 = pneg %p175
        $region38: #{pixelcnn_forward.1} parent=19 // pred_check_branch
          %384 = sbr.rel (%p382) target = $region40
        $region39: #{pixelcnn_forward.1} parent=19 // pred_region
          %s385 = sand.u32 %s30, 1
          %s386 = scalar_lea.sflag [#allocation8], %s385
          %s387 = sand.u32 %s165, 1
          %s388 = smul.addr %s387, 512
          %s389 = scalar_lea.vmem [#allocation9], %s388
          %s391 = ssub.s32 8192, 8192
          %392 = vsyncadd %s386, %s391
          %s393 = smul.addr %s30, 128
          %s394 = smul.addr %s393, 64
          %s395 = scalar_lea.hbm %s5, %s394
          %s396 = sshll.u32 %s389, 4
          %s397 = int_to_ptr.vmem [resolvable:$true] %s396
          %402 = dma.hbm_to_vmem [thread:$0]  %s395, 8192, %s397, %s386, 256, 256, 16
        $region40: #{pixelcnn_forward.1} parent=19 // pred_fallthru
          _
        // Predicated region
        $region41: #{pixelcnn_forward.1} parent=19 // pred_check
          %p403 = pneg %p201
        $region42: #{pixelcnn_forward.1} parent=19 // pred_check_branch
          %405 = sbr.rel (%p403) target = $region44
        $region43: #{pixelcnn_forward.1} parent=19 // pred_region
          %s406 = sand.u32 %s30, 1
          %s407 = scalar_lea.sflag [#allocation11], %s406
          %s408 = sand.u32 %s191, 1
          %s409 = smul.addr %s408, 2
          %s410 = scalar_lea.vmem [#allocation10], %s409
          %s412 = ssub.s32 32, 32
          %413 = vsyncadd %s407, %s412
          %s414 = smul.addr %s30, 2
          %s415 = smul.addr %s414, 16
          %s416 = scalar_lea.hbm %s6, %s415
          %s418 = sshll.u32 %s410, 4
          %s419 = int_to_ptr.vmem [resolvable:$true] %s418
          %421 = dma.hbm_to_vmem [thread:$0]  %s416, 32, %s419, %s407
        $region44: #{pixelcnn_forward.1} parent=19 // pred_fallthru
          _
        // Predicated region
        $region45: #{pixelcnn_forward.1} parent=19 // pred_check
          %p422 = pneg %p227
        $region46: #{pixelcnn_forward.1} parent=19 // pred_check_branch
          %424 = sbr.rel (%p422) target = $region48
        $region47: #{pixelcnn_forward.1} parent=19 // pred_region
          %s425 = sand.u32 %s30, 1
          %s426 = scalar_lea.sflag [#allocation11], %s425
          %s427 = sand.u32 %s217, 1
          %s428 = smul.addr %s427, 2048
          %s429 = scalar_lea.vmem [#allocation12], %s428
          %s431 = ssub.s32 32768, 32768
          %432 = vsyncadd %s426, %s431
          %s433 = smul.addr %s30, 512
          %s434 = smul.addr %s433, 64
          %s435 = scalar_lea.hbm %s7, %s434
          %s436 = sshll.u32 %s429, 4
          %s437 = int_to_ptr.vmem [resolvable:$true] %s436
          %442 = dma.hbm_to_vmem [thread:$0]  %s435, 32768, %s437, %s426, 1024, 1024, 64
        $region48: #{pixelcnn_forward.1} parent=19 // pred_fallthru
          _
        // Predicated region
        $region49: #{pixelcnn_forward.1} parent=19 // pred_check
          %p443 = pneg %p253
        $region50: #{pixelcnn_forward.1} parent=19 // pred_check_branch
          %445 = sbr.rel (%p443) target = $region52
        $region51: #{pixelcnn_forward.1} parent=19 // pred_region
          %s446 = sand.u32 %s243, 1
          %s447 = scalar_lea.sflag [#allocation14], %s446
          %s448 = sand.u32 %s243, 1
          %s449 = smul.addr %s448, 16
          %s450 = scalar_lea.vmem [#allocation13], %s449
          %s452 = ssub.s32 256, 256
          %453 = vsyncadd %s447, %s452
          %s454 = smul.addr %s30, 16
          %s455 = smul.addr %s454, 16
          %s456 = scalar_lea.hbm %s8, %s455
          %s458 = sshll.u32 %s450, 4
          %s459 = int_to_ptr.vmem [resolvable:$true] %s458
          %461 = dma.hbm_to_vmem [thread:$0]  %s456, 256, %s459, %s447
        $region52: #{pixelcnn_forward.1} parent=19 // pred_fallthru
          _
      $region20: #{pixelcnn_forward.1} parent=5 // pred_fallthru
        _
      %p462 = scmp.le.s32.totalorder 1, %s30
      %p463 = scmp.lt.s32.totalorder %s30, 6
      %p464 = pnand %p462, %p463
      %p465 = pneg %p464
      // Predicated region
      $region53: #{pixelcnn_forward.1} parent=5 // pred_check
        _
      $region54: #{pixelcnn_forward.1} parent=5 // pred_check_branch
        %467 = sbr.rel (%p464) target = $region56
      $region55: #{pixelcnn_forward.1} parent=5 // pred_region
        %s468 = ssub.s32 %s30, 1
        %s469 = sand.u32 %s64, 1
        %s470 = scalar_lea.sflag [#allocation3], %s469
        %s471 = sand.u32 %s64, 1
        %s472 = smul.addr %s471, 2048
        %s473 = scalar_lea.vmem [#allocation2], %s472
        // Predicated region
        $region57: #{pixelcnn_forward.1} parent=55 // pred_check
          %p474 = pneg %p77
        $region58: #{pixelcnn_forward.1} parent=55 // pred_check_branch
          %476 = sbr.rel (%p474) target = $region60
        $region59: #{pixelcnn_forward.1} parent=55 // pred_region
          %477 = dma.done %s470, 32768
        $region60: #{pixelcnn_forward.1} parent=55 // pred_fallthru
          _
        %s478 = sand.u32 %s35, 1
        %s479 = scalar_lea.sflag [#allocation5], %s478
        %s480 = sand.u32 %s90, 1
        %s481 = smul.addr %s480, 2
        %s482 = scalar_lea.vmem [#allocation4], %s481
        // Predicated region
        $region61: #{pixelcnn_forward.1} parent=55 // pred_check
          %p483 = pneg %p103
        $region62: #{pixelcnn_forward.1} parent=55 // pred_check_branch
          %485 = sbr.rel (%p483) target = $region64
        $region63: #{pixelcnn_forward.1} parent=55 // pred_region
          %486 = dma.done %s479, 32
        $region64: #{pixelcnn_forward.1} parent=55 // pred_fallthru
          _
        %s487 = sand.u32 %s35, 1
        %s488 = scalar_lea.sflag [#allocation5], %s487
        %s489 = sand.u32 %s116, 1
        %s490 = smul.addr %s489, 768
        %s491 = scalar_lea.vmem [#allocation6], %s490
        // Predicated region
        $region65: #{pixelcnn_forward.1} parent=55 // pred_check
          %p492 = pneg %p129
        $region66: #{pixelcnn_forward.1} parent=55 // pred_check_branch
          %494 = sbr.rel (%p492) target = $region68
        $region67: #{pixelcnn_forward.1} parent=55 // pred_region
          %495 = dma.done %s488, 12288
        $region68: #{pixelcnn_forward.1} parent=55 // pred_fallthru
          _
        %s496 = sand.u32 %s35, 1
        %s497 = scalar_lea.sflag [#allocation8], %s496
        %s498 = sand.u32 %s142, 1
        %s499 = smul.addr %s498, 2
        %s500 = scalar_lea.vmem [#allocation7], %s499
        // Predicated region
        $region69: #{pixelcnn_forward.1} parent=55 // pred_check
          %p501 = pneg %p155
        $region70: #{pixelcnn_forward.1} parent=55 // pred_check_branch
          %503 = sbr.rel (%p501) target = $region72
        $region71: #{pixelcnn_forward.1} parent=55 // pred_region
          %504 = dma.done %s497, 32
        $region72: #{pixelcnn_forward.1} parent=55 // pred_fallthru
          _
        %s505 = sand.u32 %s35, 1
        %s506 = scalar_lea.sflag [#allocation8], %s505
        %s507 = sand.u32 %s168, 1
        %s508 = smul.addr %s507, 512
        %s509 = scalar_lea.vmem [#allocation9], %s508
        // Predicated region
        $region73: #{pixelcnn_forward.1} parent=55 // pred_check
          %p510 = pneg %p181
        $region74: #{pixelcnn_forward.1} parent=55 // pred_check_branch
          %512 = sbr.rel (%p510) target = $region76
        $region75: #{pixelcnn_forward.1} parent=55 // pred_region
          %513 = dma.done %s506, 8192
        $region76: #{pixelcnn_forward.1} parent=55 // pred_fallthru
          _
        %s514 = sand.u32 %s35, 1
        %s515 = scalar_lea.sflag [#allocation11], %s514
        %s516 = sand.u32 %s194, 1
        %s517 = smul.addr %s516, 2
        %s518 = scalar_lea.vmem [#allocation10], %s517
        // Predicated region
        $region77: #{pixelcnn_forward.1} parent=55 // pred_check
          %p519 = pneg %p207
        $region78: #{pixelcnn_forward.1} parent=55 // pred_check_branch
          %521 = sbr.rel (%p519) target = $region80
        $region79: #{pixelcnn_forward.1} parent=55 // pred_region
          %522 = dma.done %s515, 32
        $region80: #{pixelcnn_forward.1} parent=55 // pred_fallthru
          _
        %s523 = sand.u32 %s35, 1
        %s524 = scalar_lea.sflag [#allocation11], %s523
        %s525 = sand.u32 %s220, 1
        %s526 = smul.addr %s525, 2048
        %s527 = scalar_lea.vmem [#allocation12], %s526
        // Predicated region
        $region81: #{pixelcnn_forward.1} parent=55 // pred_check
          %p528 = pneg %p233
        $region82: #{pixelcnn_forward.1} parent=55 // pred_check_branch
          %530 = sbr.rel (%p528) target = $region84
        $region83: #{pixelcnn_forward.1} parent=55 // pred_region
          %531 = dma.done %s524, 32768
        $region84: #{pixelcnn_forward.1} parent=55 // pred_fallthru
          _
        %s532 = sand.u32 %s246, 1
        %s533 = scalar_lea.sflag [#allocation14], %s532
        %s534 = sand.u32 %s246, 1
        %s535 = smul.addr %s534, 16
        %s536 = scalar_lea.vmem [#allocation13], %s535
        // Predicated region
        $region85: #{pixelcnn_forward.1} parent=55 // pred_check
          %p537 = pneg %p259
        $region86: #{pixelcnn_forward.1} parent=55 // pred_check_branch
          %539 = sbr.rel (%p537) target = $region88
        $region87: #{pixelcnn_forward.1} parent=55 // pred_region
          %540 = dma.done %s533, 256
        $region88: #{pixelcnn_forward.1} parent=55 // pred_fallthru
          _
        %p541 = pneg %p51
        %p542 = pneg %p48
        %s543 = sand.u32 %s64, 1
        %s544 = scalar_lea.sflag [#allocation3], %s543
        %s545 = sand.u32 %s64, 1
        %s546 = smul.addr %s545, 2048
        %s547 = scalar_lea.vmem [#allocation2], %s546
        %p548 = pneg %p77
        %p549 = pneg %p74
        %s550 = sand.u32 %s35, 1
        %s551 = scalar_lea.sflag [#allocation5], %s550
        %s552 = sand.u32 %s90, 1
        %s553 = smul.addr %s552, 2
        %s554 = scalar_lea.vmem [#allocation4], %s553
        %p555 = pneg %p103
        %p556 = pneg %p100
        %s557 = sand.u32 %s35, 1
        %s558 = scalar_lea.sflag [#allocation5], %s557
        %s559 = sand.u32 %s116, 1
        %s560 = smul.addr %s559, 768
        %s561 = scalar_lea.vmem [#allocation6], %s560
        %p562 = pneg %p129
        %p563 = pneg %p126
        %s564 = sand.u32 %s35, 1
        %s565 = scalar_lea.sflag [#allocation8], %s564
        %s566 = sand.u32 %s142, 1
        %s567 = smul.addr %s566, 2
        %s568 = scalar_lea.vmem [#allocation7], %s567
        %p569 = pneg %p155
        %p570 = pneg %p152
        %s571 = sand.u32 %s35, 1
        %s572 = scalar_lea.sflag [#allocation8], %s571
        %s573 = sand.u32 %s168, 1
        %s574 = smul.addr %s573, 512
        %s575 = scalar_lea.vmem [#allocation9], %s574
        %p576 = pneg %p181
        %p577 = pneg %p178
        %s578 = sand.u32 %s35, 1
        %s579 = scalar_lea.sflag [#allocation11], %s578
        %s580 = sand.u32 %s194, 1
        %s581 = smul.addr %s580, 2
        %s582 = scalar_lea.vmem [#allocation10], %s581
        %p583 = pneg %p207
        %p584 = pneg %p204
        %s585 = sand.u32 %s35, 1
        %s586 = scalar_lea.sflag [#allocation11], %s585
        %s587 = sand.u32 %s220, 1
        %s588 = smul.addr %s587, 2048
        %s589 = scalar_lea.vmem [#allocation12], %s588
        %p590 = pneg %p233
        %p591 = pneg %p230
        %s592 = sand.u32 %s246, 1
        %s593 = scalar_lea.sflag [#allocation14], %s592
        %s594 = sand.u32 %s246, 1
        %s595 = smul.addr %s594, 16
        %s596 = scalar_lea.vmem [#allocation13], %s595
        %p597 = pneg %p259
        %p598 = pneg %p256
        %p599 = pneg %p280
        %p600 = pneg %p277
        %p601 = scmp.eq.s32.totalorder %s35, 0
        // Predicated region
        $region89: #{pixelcnn_forward.1} parent=55 // pred_check
          %p602 = pneg %p601
        $region90: #{pixelcnn_forward.1} parent=55 // pred_check_branch
          %604 = sbr.rel (%p602) target = $region92
        $region91: #{pixelcnn_forward.1} parent=55 // pred_region
          %v605 = vld [vmem:[%s0] sm:$0xff]
          %v606 = vld [vmem:[%s0 + $0x8] sm:$0xff]
          %v607 = vld [vmem:[%s0 + $0x10] sm:$0xff]
          %v608 = vld [vmem:[%s0 + $0x18] sm:$0xff]
          %v609 = vld [vmem:[%s0 + $0x20] sm:$0xff]
          %v610 = vld [vmem:[%s0 + $0x28] sm:$0xff]
          %v611 = vld [vmem:[%s0 + $0x30] sm:$0xff]
          %v612 = vld [vmem:[%s0 + $0x38] sm:$0xff]
          %v613 = vld [vmem:[%s0 + $0x40] sm:$0xff]
          %v614 = vld [vmem:[%s0 + $0x48] sm:$0xff]
          %v615 = vld [vmem:[%s0 + $0x50] sm:$0xff]
          %v616 = vld [vmem:[%s0 + $0x58] sm:$0xff]
          %v617 = vld [vmem:[%s0 + $0x60] sm:$0xff]
          %v618 = vld [vmem:[%s0 + $0x68] sm:$0xff]
          %v619 = vld [vmem:[%s0 + $0x70] sm:$0xff]
          %v620 = vld [vmem:[%s0 + $0x78] sm:$0xff]
          %v621 = vld [vmem:[%s0 + $0x80] sm:$0xff]
          %v622 = vld [vmem:[%s0 + $0x88] sm:$0xff]
          %v623 = vld [vmem:[%s0 + $0x90] sm:$0xff]
          %v624 = vld [vmem:[%s0 + $0x98] sm:$0xff]
          %v625 = vld [vmem:[%s0 + $0xa0] sm:$0xff]
          %v626 = vld [vmem:[%s0 + $0xa8] sm:$0xff]
          %v627 = vld [vmem:[%s0 + $0xb0] sm:$0xff]
          %v628 = vld [vmem:[%s0 + $0xb8] sm:$0xff]
          %v629 = vld [vmem:[%s0 + $0xc0] sm:$0xff]
          %v630 = vld [vmem:[%s0 + $0xc8] sm:$0xff]
          %v631 = vld [vmem:[%s0 + $0xd0] sm:$0xff]
          %v632 = vld [vmem:[%s0 + $0xd8] sm:$0xff]
          %v633 = vld [vmem:[%s0 + $0xe0] sm:$0xff]
          %v634 = vld [vmem:[%s0 + $0xe8] sm:$0xff]
          %v635 = vld [vmem:[%s0 + $0xf0] sm:$0xff]
          %v636 = vld [vmem:[%s0 + $0xf8] sm:$0xff]
          %v637 = vld [vmem:[%s0 + $0x100] sm:$0xff]
          %v638 = vld [vmem:[%s0 + $0x108] sm:$0xff]
          %v639 = vld [vmem:[%s0 + $0x110] sm:$0xff]
          %v640 = vld [vmem:[%s0 + $0x118] sm:$0xff]
          %v641 = vld [vmem:[%s0 + $0x120] sm:$0xff]
          %v642 = vld [vmem:[%s0 + $0x128] sm:$0xff]
          %v643 = vld [vmem:[%s0 + $0x130] sm:$0xff]
          %v644 = vld [vmem:[%s0 + $0x138] sm:$0xff]
          %v645 = vld [vmem:[%s0 + $0x140] sm:$0xff]
          %v646 = vld [vmem:[%s0 + $0x148] sm:$0xff]
          %v647 = vld [vmem:[%s0 + $0x150] sm:$0xff]
          %v648 = vld [vmem:[%s0 + $0x158] sm:$0xff]
          %v649 = vld [vmem:[%s0 + $0x160] sm:$0xff]
          %v650 = vld [vmem:[%s0 + $0x168] sm:$0xff]
          %v651 = vld [vmem:[%s0 + $0x170] sm:$0xff]
          %v652 = vld [vmem:[%s0 + $0x178] sm:$0xff]
          %v653 = vld [vmem:[%s0 + $0x180] sm:$0xff]
          %v654 = vld [vmem:[%s0 + $0x188] sm:$0xff]
          %v655 = vld [vmem:[%s0 + $0x190] sm:$0xff]
          %v656 = vld [vmem:[%s0 + $0x198] sm:$0xff]
          %v657 = vld [vmem:[%s0 + $0x1a0] sm:$0xff]
          %v658 = vld [vmem:[%s0 + $0x1a8] sm:$0xff]
          %v659 = vld [vmem:[%s0 + $0x1b0] sm:$0xff]
          %v660 = vld [vmem:[%s0 + $0x1b8] sm:$0xff]
          %v661 = vld [vmem:[%s0 + $0x1c0] sm:$0xff]
          %v662 = vld [vmem:[%s0 + $0x1c8] sm:$0xff]
          %v663 = vld [vmem:[%s0 + $0x1d0] sm:$0xff]
          %v664 = vld [vmem:[%s0 + $0x1d8] sm:$0xff]
          %v665 = vld [vmem:[%s0 + $0x1e0] sm:$0xff]
          %v666 = vld [vmem:[%s0 + $0x1e8] sm:$0xff]
          %v667 = vld [vmem:[%s0 + $0x1f0] sm:$0xff]
          %v668 = vld [vmem:[%s0 + $0x1f8] sm:$0xff]
          %669 = vst [vmem:[%s9] sm:$0xff] %v605
          %670 = vst [vmem:[%s9 + $0x8] sm:$0xff] %v606
          %671 = vst [vmem:[%s9 + $0x10] sm:$0xff] %v607
          %672 = vst [vmem:[%s9 + $0x18] sm:$0xff] %v608
          %673 = vst [vmem:[%s9 + $0x20] sm:$0xff] %v609
          %674 = vst [vmem:[%s9 + $0x28] sm:$0xff] %v610
          %675 = vst [vmem:[%s9 + $0x30] sm:$0xff] %v611
          %676 = vst [vmem:[%s9 + $0x38] sm:$0xff] %v612
          %677 = vst [vmem:[%s9 + $0x40] sm:$0xff] %v613
          %678 = vst [vmem:[%s9 + $0x48] sm:$0xff] %v614
          %679 = vst [vmem:[%s9 + $0x50] sm:$0xff] %v615
          %680 = vst [vmem:[%s9 + $0x58] sm:$0xff] %v616
          %681 = vst [vmem:[%s9 + $0x60] sm:$0xff] %v617
          %682 = vst [vmem:[%s9 + $0x68] sm:$0xff] %v618
          %683 = vst [vmem:[%s9 + $0x70] sm:$0xff] %v619
          %684 = vst [vmem:[%s9 + $0x78] sm:$0xff] %v620
          %685 = vst [vmem:[%s9 + $0x80] sm:$0xff] %v621
          %686 = vst [vmem:[%s9 + $0x88] sm:$0xff] %v622
          %687 = vst [vmem:[%s9 + $0x90] sm:$0xff] %v623
          %688 = vst [vmem:[%s9 + $0x98] sm:$0xff] %v624
          %689 = vst [vmem:[%s9 + $0xa0] sm:$0xff] %v625
          %690 = vst [vmem:[%s9 + $0xa8] sm:$0xff] %v626
          %691 = vst [vmem:[%s9 + $0xb0] sm:$0xff] %v627
          %692 = vst [vmem:[%s9 + $0xb8] sm:$0xff] %v628
          %693 = vst [vmem:[%s9 + $0xc0] sm:$0xff] %v629
          %694 = vst [vmem:[%s9 + $0xc8] sm:$0xff] %v630
          %695 = vst [vmem:[%s9 + $0xd0] sm:$0xff] %v631
          %696 = vst [vmem:[%s9 + $0xd8] sm:$0xff] %v632
          %697 = vst [vmem:[%s9 + $0xe0] sm:$0xff] %v633
          %698 = vst [vmem:[%s9 + $0xe8] sm:$0xff] %v634
          %699 = vst [vmem:[%s9 + $0xf0] sm:$0xff] %v635
          %700 = vst [vmem:[%s9 + $0xf8] sm:$0xff] %v636
          %701 = vst [vmem:[%s9 + $0x100] sm:$0xff] %v637
          %702 = vst [vmem:[%s9 + $0x108] sm:$0xff] %v638
          %703 = vst [vmem:[%s9 + $0x110] sm:$0xff] %v639
          %704 = vst [vmem:[%s9 + $0x118] sm:$0xff] %v640
          %705 = vst [vmem:[%s9 + $0x120] sm:$0xff] %v641
          %706 = vst [vmem:[%s9 + $0x128] sm:$0xff] %v642
          %707 = vst [vmem:[%s9 + $0x130] sm:$0xff] %v643
          %708 = vst [vmem:[%s9 + $0x138] sm:$0xff] %v644
          %709 = vst [vmem:[%s9 + $0x140] sm:$0xff] %v645
          %710 = vst [vmem:[%s9 + $0x148] sm:$0xff] %v646
          %711 = vst [vmem:[%s9 + $0x150] sm:$0xff] %v647
          %712 = vst [vmem:[%s9 + $0x158] sm:$0xff] %v648
          %713 = vst [vmem:[%s9 + $0x160] sm:$0xff] %v649
          %714 = vst [vmem:[%s9 + $0x168] sm:$0xff] %v650
          %715 = vst [vmem:[%s9 + $0x170] sm:$0xff] %v651
          %716 = vst [vmem:[%s9 + $0x178] sm:$0xff] %v652
          %717 = vst [vmem:[%s9 + $0x180] sm:$0xff] %v653
          %718 = vst [vmem:[%s9 + $0x188] sm:$0xff] %v654
          %719 = vst [vmem:[%s9 + $0x190] sm:$0xff] %v655
          %720 = vst [vmem:[%s9 + $0x198] sm:$0xff] %v656
          %721 = vst [vmem:[%s9 + $0x1a0] sm:$0xff] %v657
          %722 = vst [vmem:[%s9 + $0x1a8] sm:$0xff] %v658
          %723 = vst [vmem:[%s9 + $0x1b0] sm:$0xff] %v659
          %724 = vst [vmem:[%s9 + $0x1b8] sm:$0xff] %v660
          %725 = vst [vmem:[%s9 + $0x1c0] sm:$0xff] %v661
          %726 = vst [vmem:[%s9 + $0x1c8] sm:$0xff] %v662
          %727 = vst [vmem:[%s9 + $0x1d0] sm:$0xff] %v663
          %728 = vst [vmem:[%s9 + $0x1d8] sm:$0xff] %v664
          %729 = vst [vmem:[%s9 + $0x1e0] sm:$0xff] %v665
          %730 = vst [vmem:[%s9 + $0x1e8] sm:$0xff] %v666
          %731 = vst [vmem:[%s9 + $0x1f0] sm:$0xff] %v667
          %732 = vst [vmem:[%s9 + $0x1f8] sm:$0xff] %v668
        $region92: #{pixelcnn_forward.1} parent=55 // pred_fallthru
          _
        %v733 = vlaneseq
        %v734 = vshrl.u32 %v733, 7
        %v735 = vadd.s32 %v734, 8
        %v736 = vadd.s32 %v734, 16
        %v737 = vadd.s32 %v734, 24
        %vm738 = vcmp.lt.s32.totalorder %v734, 0
        %v739 = vsub.s32 0, %v734
        %v740 = vsel %vm738, %v739, %v734
        %v741 = vshrl.u32 %v740, 2
        %v742 = vand.u32 %v740, 3
        %v743 = vsub.s32 0, %v742
        %v744 = vsel %vm738, %v743, %v742
        %vm745 = vcmp.lt.s32.totalorder %v735, 0
        %v746 = vsub.s32 0, %v735
        %v747 = vsel %vm745, %v746, %v735
        %v748 = vshrl.u32 %v747, 2
        %v749 = vand.u32 %v747, 3
        %v750 = vsub.s32 0, %v749
        %v751 = vsel %vm745, %v750, %v749
        %vm752 = vcmp.lt.s32.totalorder %v736, 0
        %v753 = vsub.s32 0, %v736
        %v754 = vsel %vm752, %v753, %v736
        %v755 = vshrl.u32 %v754, 2
        %v756 = vand.u32 %v754, 3
        %v757 = vsub.s32 0, %v756
        %v758 = vsel %vm752, %v757, %v756
        %vm759 = vcmp.lt.s32.totalorder %v737, 0
        %v760 = vsub.s32 0, %v737
        %v761 = vsel %vm759, %v760, %v737
        %v762 = vshrl.u32 %v761, 2
        %v763 = vand.u32 %v761, 3
        %v764 = vsub.s32 0, %v763
        %v765 = vsel %vm759, %v764, %v763
        %vm766 = vcmp.ne.s32.totalorder %v744, 0
        %vm767 = vcmp.ne.s32.totalorder %v751, 0
        %vm768 = vcmp.ne.s32.totalorder %v758, 0
        %vm769 = vcmp.ne.s32.totalorder %v765, 0
        %vm770 = vcmp.lt.s32.totalorder %v744, 0
        %vm771 = vcmp.lt.s32.totalorder %v751, 0
        %vm772 = vcmp.lt.s32.totalorder %v758, 0
        %vm773 = vcmp.lt.s32.totalorder %v765, 0
        %vm774 = vmand %vm770, %vm766
        %vm775 = vmand %vm771, %vm767
        %vm776 = vmand %vm772, %vm768
        %vm777 = vmand %vm773, %vm769
        %v778 = vadd.s32 %v744, 4
        %v779 = vadd.s32 %v751, 4
        %v780 = vadd.s32 %v758, 4
        %v781 = vadd.s32 %v765, 4
        %v782 = vsel %vm774, %v778, %v744
        %v783 = vsel %vm775, %v779, %v751
        %v784 = vsel %vm776, %v780, %v758
        %v785 = vsel %vm777, %v781, %v765
        %vm786 = vcmp.gt.s32.totalorder %v782, 0
        %vm787 = vcmp.gt.s32.totalorder %v783, 0
        %vm788 = vcmp.gt.s32.totalorder %v784, 0
        %vm789 = vcmp.gt.s32.totalorder %v785, 0
        %v790 = vsel %vm786, 1, 0
        %v791 = vsel %vm787, 1, 0
        %v792 = vsel %vm788, 1, 0
        %v793 = vsel %vm789, 1, 0
        %v794 = vcvt.s32.f32 %v790
        %v795 = vcvt.s32.f32 %v791
        %v796 = vcvt.s32.f32 %v792
        %v797 = vcvt.s32.f32 %v793
        %vm798 = vcmp.lt.s32.totalorder %v782, 3
        %vm799 = vcmp.lt.s32.totalorder %v783, 3
        %vm800 = vcmp.lt.s32.totalorder %v784, 3
        %vm801 = vcmp.lt.s32.totalorder %v785, 3
        %v802 = vsel %vm798, 1, 0
        %v803 = vsel %vm799, 1, 0
        %v804 = vsel %vm800, 1, 0
        %v805 = vsel %vm801, 1, 0
        %v806 = vcvt.s32.f32 %v802
        %v807 = vcvt.s32.f32 %v803
        %v808 = vcvt.s32.f32 %v804
        %v809 = vcvt.s32.f32 %v805
        %vm810 = vcmp.lt.s32.totalorder %v734, 0
        %v811 = vsub.s32 0, %v734
        %v812 = vsel %vm810, %v811, %v734
        %v813 = vshrl.u32 %v812, 4
        %v814 = vand.u32 %v812, 15
        %v815 = vsub.s32 0, %v814
        %v816 = vsel %vm810, %v815, %v814
        %vm817 = vcmp.lt.s32.totalorder %v735, 0
        %v818 = vsub.s32 0, %v735
        %v819 = vsel %vm817, %v818, %v735
        %v820 = vshrl.u32 %v819, 4
        %v821 = vand.u32 %v819, 15
        %v822 = vsub.s32 0, %v821
        %v823 = vsel %vm817, %v822, %v821
        %vm824 = vcmp.lt.s32.totalorder %v736, 0
        %v825 = vsub.s32 0, %v736
        %v826 = vsel %vm824, %v825, %v736
        %v827 = vshrl.u32 %v826, 4
        %v828 = vand.u32 %v826, 15
        %v829 = vsub.s32 0, %v828
        %v830 = vsel %vm824, %v829, %v828
        %vm831 = vcmp.lt.s32.totalorder %v737, 0
        %v832 = vsub.s32 0, %v737
        %v833 = vsel %vm831, %v832, %v737
        %v834 = vshrl.u32 %v833, 4
        %v835 = vand.u32 %v833, 15
        %v836 = vsub.s32 0, %v835
        %v837 = vsel %vm831, %v836, %v835
        %vm838 = vcmp.ne.s32.totalorder %v816, 0
        %vm839 = vcmp.ne.s32.totalorder %v823, 0
        %vm840 = vcmp.ne.s32.totalorder %v830, 0
        %vm841 = vcmp.ne.s32.totalorder %v837, 0
        %vm842 = vcmp.lt.s32.totalorder %v816, 0
        %vm843 = vcmp.lt.s32.totalorder %v823, 0
        %vm844 = vcmp.lt.s32.totalorder %v830, 0
        %vm845 = vcmp.lt.s32.totalorder %v837, 0
        %vm846 = vmand %vm842, %vm838
        %vm847 = vmand %vm843, %vm839
        %vm848 = vmand %vm844, %vm840
        %vm849 = vmand %vm845, %vm841
        %v850 = vadd.s32 %v816, 16
        %v851 = vadd.s32 %v823, 16
        %v852 = vadd.s32 %v830, 16
        %v853 = vadd.s32 %v837, 16
        %v854 = vsel %vm846, %v850, %v816
        %v855 = vsel %vm847, %v851, %v823
        %v856 = vsel %vm848, %v852, %v830
        %v857 = vsel %vm849, %v853, %v837
        %vm858 = vcmp.ge.s32.totalorder %v854, 4
        %vm859 = vcmp.ge.s32.totalorder %v855, 4
        %vm860 = vcmp.ge.s32.totalorder %v856, 4
        %vm861 = vcmp.ge.s32.totalorder %v857, 4
        %v862 = vsel %vm858, 1, 0
        %v863 = vsel %vm859, 1, 0
        %v864 = vsel %vm860, 1, 0
        %v865 = vsel %vm861, 1, 0
        %v866 = vcvt.s32.f32 %v862
        %v867 = vcvt.s32.f32 %v863
        %v868 = vcvt.s32.f32 %v864
        %v869 = vcvt.s32.f32 %v865
        %v870 = vld [vmem:[%s9] sm:$0xff]
        %v871 = vld [vmem:[%s9 + $0x8] sm:$0xff]
        %v872 = vld [vmem:[%s9 + $0x10] sm:$0xff]
        %v873 = vld [vmem:[%s9 + $0x18] sm:$0xff]
        %v874 = vld [vmem:[%s9 + $0x20] sm:$0xff]
        %v875 = vld [vmem:[%s9 + $0x28] sm:$0xff]
        %v876 = vld [vmem:[%s9 + $0x30] sm:$0xff]
        %v877 = vld [vmem:[%s9 + $0x38] sm:$0xff]
        %v878 = vld [vmem:[%s9 + $0x40] sm:$0xff]
        %v879 = vld [vmem:[%s9 + $0x48] sm:$0xff]
        %v880 = vld [vmem:[%s9 + $0x50] sm:$0xff]
        %v881 = vld [vmem:[%s9 + $0x58] sm:$0xff]
        %v882 = vld [vmem:[%s9 + $0x60] sm:$0xff]
        %v883 = vld [vmem:[%s9 + $0x68] sm:$0xff]
        %v884 = vld [vmem:[%s9 + $0x70] sm:$0xff]
        %v885 = vld [vmem:[%s9 + $0x78] sm:$0xff]
        %v886 = vld [vmem:[%s9 + $0x80] sm:$0xff]
        %v887 = vld [vmem:[%s9 + $0x88] sm:$0xff]
        %v888 = vld [vmem:[%s9 + $0x90] sm:$0xff]
        %v889 = vld [vmem:[%s9 + $0x98] sm:$0xff]
        %v890 = vld [vmem:[%s9 + $0xa0] sm:$0xff]
        %v891 = vld [vmem:[%s9 + $0xa8] sm:$0xff]
        %v892 = vld [vmem:[%s9 + $0xb0] sm:$0xff]
        %v893 = vld [vmem:[%s9 + $0xb8] sm:$0xff]
        %v894 = vld [vmem:[%s9 + $0xc0] sm:$0xff]
        %v895 = vld [vmem:[%s9 + $0xc8] sm:$0xff]
        %v896 = vld [vmem:[%s9 + $0xd0] sm:$0xff]
        %v897 = vld [vmem:[%s9 + $0xd8] sm:$0xff]
        %v898 = vld [vmem:[%s9 + $0xe0] sm:$0xff]
        %v899 = vld [vmem:[%s9 + $0xe8] sm:$0xff]
        %v900 = vld [vmem:[%s9 + $0xf0] sm:$0xff]
        %v901 = vld [vmem:[%s9 + $0xf8] sm:$0xff]
        %v902 = vld [vmem:[%s9 + $0x100] sm:$0xff]
        %v903 = vld [vmem:[%s9 + $0x108] sm:$0xff]
        %v904 = vld [vmem:[%s9 + $0x110] sm:$0xff]
        %v905 = vld [vmem:[%s9 + $0x118] sm:$0xff]
        %v906 = vld [vmem:[%s9 + $0x120] sm:$0xff]
        %v907 = vld [vmem:[%s9 + $0x128] sm:$0xff]
        %v908 = vld [vmem:[%s9 + $0x130] sm:$0xff]
        %v909 = vld [vmem:[%s9 + $0x138] sm:$0xff]
        %v910 = vld [vmem:[%s9 + $0x140] sm:$0xff]
        %v911 = vld [vmem:[%s9 + $0x148] sm:$0xff]
        %v912 = vld [vmem:[%s9 + $0x150] sm:$0xff]
        %v913 = vld [vmem:[%s9 + $0x158] sm:$0xff]
        %v914 = vld [vmem:[%s9 + $0x160] sm:$0xff]
        %v915 = vld [vmem:[%s9 + $0x168] sm:$0xff]
        %v916 = vld [vmem:[%s9 + $0x170] sm:$0xff]
        %v917 = vld [vmem:[%s9 + $0x178] sm:$0xff]
        %v918 = vld [vmem:[%s9 + $0x180] sm:$0xff]
        %v919 = vld [vmem:[%s9 + $0x188] sm:$0xff]
        %v920 = vld [vmem:[%s9 + $0x190] sm:$0xff]
        %v921 = vld [vmem:[%s9 + $0x198] sm:$0xff]
        %v922 = vld [vmem:[%s9 + $0x1a0] sm:$0xff]
        %v923 = vld [vmem:[%s9 + $0x1a8] sm:$0xff]
        %v924 = vld [vmem:[%s9 + $0x1b0] sm:$0xff]
        %v925 = vld [vmem:[%s9 + $0x1b8] sm:$0xff]
        %v926 = vld [vmem:[%s9 + $0x1c0] sm:$0xff]
        %v927 = vld [vmem:[%s9 + $0x1c8] sm:$0xff]
        %v928 = vld [vmem:[%s9 + $0x1d0] sm:$0xff]
        %v929 = vld [vmem:[%s9 + $0x1d8] sm:$0xff]
        %v930 = vld [vmem:[%s9 + $0x1e0] sm:$0xff]
        %v931 = vld [vmem:[%s9 + $0x1e8] sm:$0xff]
        %v932 = vld [vmem:[%s9 + $0x1f0] sm:$0xff]
        %v933 = vld [vmem:[%s9 + $0x1f8] sm:$0xff]
        %v934 = vpack.c.bf16 %v886, %v870
        %v935 = vpack.c.bf16 %v887, %v871
        %v936 = vpack.c.bf16 %v888, %v872
        %v937 = vpack.c.bf16 %v889, %v873
        %v938 = vpack.c.bf16 %v890, %v874
        %v939 = vpack.c.bf16 %v891, %v875
        %v940 = vpack.c.bf16 %v892, %v876
        %v941 = vpack.c.bf16 %v893, %v877
        %v942 = vpack.c.bf16 %v894, %v878
        %v943 = vpack.c.bf16 %v895, %v879
        %v944 = vpack.c.bf16 %v896, %v880
        %v945 = vpack.c.bf16 %v897, %v881
        %v946 = vpack.c.bf16 %v898, %v882
        %v947 = vpack.c.bf16 %v899, %v883
        %v948 = vpack.c.bf16 %v900, %v884
        %v949 = vpack.c.bf16 %v901, %v885
        %v950 = vpack.c.bf16 %v918, %v902
        %v951 = vpack.c.bf16 %v919, %v903
        %v952 = vpack.c.bf16 %v920, %v904
        %v953 = vpack.c.bf16 %v921, %v905
        %v954 = vpack.c.bf16 %v922, %v906
        %v955 = vpack.c.bf16 %v923, %v907
        %v956 = vpack.c.bf16 %v924, %v908
        %v957 = vpack.c.bf16 %v925, %v909
        %v958 = vpack.c.bf16 %v926, %v910
        %v959 = vpack.c.bf16 %v927, %v911
        %v960 = vpack.c.bf16 %v928, %v912
        %v961 = vpack.c.bf16 %v929, %v913
        %v962 = vpack.c.bf16 %v930, %v914
        %v963 = vpack.c.bf16 %v931, %v915
        %v964 = vpack.c.bf16 %v932, %v916
        %v965 = vpack.c.bf16 %v933, %v917
        %v966 = vld [vmem:[%s473] sm:$0xff]
        %v967 = vld [vmem:[%s473 + $0x8] sm:$0xff]
        %v968 = vld [vmem:[%s473 + $0x10] sm:$0xff]
        %v969 = vld [vmem:[%s473 + $0x18] sm:$0xff]
        %v970 = vld [vmem:[%s473 + $0x20] sm:$0xff]
        %v971 = vld [vmem:[%s473 + $0x28] sm:$0xff]
        %v972 = vld [vmem:[%s473 + $0x30] sm:$0xff]
        %v973 = vld [vmem:[%s473 + $0x38] sm:$0xff]
        %v974 = vld [vmem:[%s473 + $0x40] sm:$0xff]
        %v975 = vld [vmem:[%s473 + $0x48] sm:$0xff]
        %v976 = vld [vmem:[%s473 + $0x50] sm:$0xff]
        %v977 = vld [vmem:[%s473 + $0x58] sm:$0xff]
        %v978 = vld [vmem:[%s473 + $0x60] sm:$0xff]
        %v979 = vld [vmem:[%s473 + $0x68] sm:$0xff]
        %v980 = vld [vmem:[%s473 + $0x70] sm:$0xff]
        %v981 = vld [vmem:[%s473 + $0x78] sm:$0xff]
        %v982 = vld [vmem:[%s473 + $0x80] sm:$0xff]
        %v983 = vld [vmem:[%s473 + $0x88] sm:$0xff]
        %v984 = vld [vmem:[%s473 + $0x90] sm:$0xff]
        %v985 = vld [vmem:[%s473 + $0x98] sm:$0xff]
        %v986 = vld [vmem:[%s473 + $0xa0] sm:$0xff]
        %v987 = vld [vmem:[%s473 + $0xa8] sm:$0xff]
        %v988 = vld [vmem:[%s473 + $0xb0] sm:$0xff]
        %v989 = vld [vmem:[%s473 + $0xb8] sm:$0xff]
        %v990 = vld [vmem:[%s473 + $0xc0] sm:$0xff]
        %v991 = vld [vmem:[%s473 + $0xc8] sm:$0xff]
        %v992 = vld [vmem:[%s473 + $0xd0] sm:$0xff]
        %v993 = vld [vmem:[%s473 + $0xd8] sm:$0xff]
        %v994 = vld [vmem:[%s473 + $0xe0] sm:$0xff]
        %v995 = vld [vmem:[%s473 + $0xe8] sm:$0xff]
        %v996 = vld [vmem:[%s473 + $0xf0] sm:$0xff]
        %v997 = vld [vmem:[%s473 + $0xf8] sm:$0xff]
        %v998 = vld [vmem:[%s473 + $0x100] sm:$0xff]
        %v999 = vld [vmem:[%s473 + $0x108] sm:$0xff]
        %v1000 = vld [vmem:[%s473 + $0x110] sm:$0xff]
        %v1001 = vld [vmem:[%s473 + $0x118] sm:$0xff]
        %v1002 = vld [vmem:[%s473 + $0x120] sm:$0xff]
        %v1003 = vld [vmem:[%s473 + $0x128] sm:$0xff]
        %v1004 = vld [vmem:[%s473 + $0x130] sm:$0xff]
        %v1005 = vld [vmem:[%s473 + $0x138] sm:$0xff]
        %v1006 = vld [vmem:[%s473 + $0x140] sm:$0xff]
        %v1007 = vld [vmem:[%s473 + $0x148] sm:$0xff]
        %v1008 = vld [vmem:[%s473 + $0x150] sm:$0xff]
        %v1009 = vld [vmem:[%s473 + $0x158] sm:$0xff]
        %v1010 = vld [vmem:[%s473 + $0x160] sm:$0xff]
        %v1011 = vld [vmem:[%s473 + $0x168] sm:$0xff]
        %v1012 = vld [vmem:[%s473 + $0x170] sm:$0xff]
        %v1013 = vld [vmem:[%s473 + $0x178] sm:$0xff]
        %v1014 = vld [vmem:[%s473 + $0x180] sm:$0xff]
        %v1015 = vld [vmem:[%s473 + $0x188] sm:$0xff]
        %v1016 = vld [vmem:[%s473 + $0x190] sm:$0xff]
        %v1017 = vld [vmem:[%s473 + $0x198] sm:$0xff]
        %v1018 = vld [vmem:[%s473 + $0x1a0] sm:$0xff]
        %v1019 = vld [vmem:[%s473 + $0x1a8] sm:$0xff]
        %v1020 = vld [vmem:[%s473 + $0x1b0] sm:$0xff]
        %v1021 = vld [vmem:[%s473 + $0x1b8] sm:$0xff]
        %v1022 = vld [vmem:[%s473 + $0x1c0] sm:$0xff]
        %v1023 = vld [vmem:[%s473 + $0x1c8] sm:$0xff]
        %v1024 = vld [vmem:[%s473 + $0x1d0] sm:$0xff]
        %v1025 = vld [vmem:[%s473 + $0x1d8] sm:$0xff]
        %v1026 = vld [vmem:[%s473 + $0x1e0] sm:$0xff]
        %v1027 = vld [vmem:[%s473 + $0x1e8] sm:$0xff]
        %v1028 = vld [vmem:[%s473 + $0x1f0] sm:$0xff]
        %v1029 = vld [vmem:[%s473 + $0x1f8] sm:$0xff]
        %v1030 = vld [vmem:[%s473 + $0x200] sm:$0xff]
        %v1031 = vld [vmem:[%s473 + $0x208] sm:$0xff]
        %v1032 = vld [vmem:[%s473 + $0x210] sm:$0xff]
        %v1033 = vld [vmem:[%s473 + $0x218] sm:$0xff]
        %v1034 = vld [vmem:[%s473 + $0x220] sm:$0xff]
        %v1035 = vld [vmem:[%s473 + $0x228] sm:$0xff]
        %v1036 = vld [vmem:[%s473 + $0x230] sm:$0xff]
        %v1037 = vld [vmem:[%s473 + $0x238] sm:$0xff]
        %v1038 = vld [vmem:[%s473 + $0x240] sm:$0xff]
        %v1039 = vld [vmem:[%s473 + $0x248] sm:$0xff]
        %v1040 = vld [vmem:[%s473 + $0x250] sm:$0xff]
        %v1041 = vld [vmem:[%s473 + $0x258] sm:$0xff]
        %v1042 = vld [vmem:[%s473 + $0x260] sm:$0xff]
        %v1043 = vld [vmem:[%s473 + $0x268] sm:$0xff]
        %v1044 = vld [vmem:[%s473 + $0x270] sm:$0xff]
        %v1045 = vld [vmem:[%s473 + $0x278] sm:$0xff]
        %v1046 = vld [vmem:[%s473 + $0x280] sm:$0xff]
        %v1047 = vld [vmem:[%s473 + $0x288] sm:$0xff]
        %v1048 = vld [vmem:[%s473 + $0x290] sm:$0xff]
        %v1049 = vld [vmem:[%s473 + $0x298] sm:$0xff]
        %v1050 = vld [vmem:[%s473 + $0x2a0] sm:$0xff]
        %v1051 = vld [vmem:[%s473 + $0x2a8] sm:$0xff]
        %v1052 = vld [vmem:[%s473 + $0x2b0] sm:$0xff]
        %v1053 = vld [vmem:[%s473 + $0x2b8] sm:$0xff]
        %v1054 = vld [vmem:[%s473 + $0x2c0] sm:$0xff]
        %v1055 = vld [vmem:[%s473 + $0x2c8] sm:$0xff]
        %v1056 = vld [vmem:[%s473 + $0x2d0] sm:$0xff]
        %v1057 = vld [vmem:[%s473 + $0x2d8] sm:$0xff]
        %v1058 = vld [vmem:[%s473 + $0x2e0] sm:$0xff]
        %v1059 = vld [vmem:[%s473 + $0x2e8] sm:$0xff]
        %v1060 = vld [vmem:[%s473 + $0x2f0] sm:$0xff]
        %v1061 = vld [vmem:[%s473 + $0x2f8] sm:$0xff]
        %v1062 = vld [vmem:[%s473 + $0x300] sm:$0xff]
        %v1063 = vld [vmem:[%s473 + $0x308] sm:$0xff]
        %v1064 = vld [vmem:[%s473 + $0x310] sm:$0xff]
        %v1065 = vld [vmem:[%s473 + $0x318] sm:$0xff]
        %v1066 = vld [vmem:[%s473 + $0x320] sm:$0xff]
        %v1067 = vld [vmem:[%s473 + $0x328] sm:$0xff]
        %v1068 = vld [vmem:[%s473 + $0x330] sm:$0xff]
        %v1069 = vld [vmem:[%s473 + $0x338] sm:$0xff]
        %v1070 = vld [vmem:[%s473 + $0x340] sm:$0xff]
        %v1071 = vld [vmem:[%s473 + $0x348] sm:$0xff]
        %v1072 = vld [vmem:[%s473 + $0x350] sm:$0xff]
        %v1073 = vld [vmem:[%s473 + $0x358] sm:$0xff]
        %v1074 = vld [vmem:[%s473 + $0x360] sm:$0xff]
        %v1075 = vld [vmem:[%s473 + $0x368] sm:$0xff]
        %v1076 = vld [vmem:[%s473 + $0x370] sm:$0xff]
        %v1077 = vld [vmem:[%s473 + $0x378] sm:$0xff]
        %v1078 = vld [vmem:[%s473 + $0x380] sm:$0xff]
        %v1079 = vld [vmem:[%s473 + $0x388] sm:$0xff]
        %v1080 = vld [vmem:[%s473 + $0x390] sm:$0xff]
        %v1081 = vld [vmem:[%s473 + $0x398] sm:$0xff]
        %v1082 = vld [vmem:[%s473 + $0x3a0] sm:$0xff]
        %v1083 = vld [vmem:[%s473 + $0x3a8] sm:$0xff]
        %v1084 = vld [vmem:[%s473 + $0x3b0] sm:$0xff]
        %v1085 = vld [vmem:[%s473 + $0x3b8] sm:$0xff]
        %v1086 = vld [vmem:[%s473 + $0x3c0] sm:$0xff]
        %v1087 = vld [vmem:[%s473 + $0x3c8] sm:$0xff]
        %v1088 = vld [vmem:[%s473 + $0x3d0] sm:$0xff]
        %v1089 = vld [vmem:[%s473 + $0x3d8] sm:$0xff]
        %v1090 = vld [vmem:[%s473 + $0x3e0] sm:$0xff]
        %v1091 = vld [vmem:[%s473 + $0x3e8] sm:$0xff]
        %v1092 = vld [vmem:[%s473 + $0x3f0] sm:$0xff]
        %v1093 = vld [vmem:[%s473 + $0x3f8] sm:$0xff]
        %v1094 = vld [vmem:[%s473 + $0x400] sm:$0xff]
        %v1095 = vld [vmem:[%s473 + $0x408] sm:$0xff]
        %v1096 = vld [vmem:[%s473 + $0x410] sm:$0xff]
        %v1097 = vld [vmem:[%s473 + $0x418] sm:$0xff]
        %v1098 = vld [vmem:[%s473 + $0x420] sm:$0xff]
        %v1099 = vld [vmem:[%s473 + $0x428] sm:$0xff]
        %v1100 = vld [vmem:[%s473 + $0x430] sm:$0xff]
        %v1101 = vld [vmem:[%s473 + $0x438] sm:$0xff]
        %v1102 = vld [vmem:[%s473 + $0x440] sm:$0xff]
        %v1103 = vld [vmem:[%s473 + $0x448] sm:$0xff]
        %v1104 = vld [vmem:[%s473 + $0x450] sm:$0xff]
        %v1105 = vld [vmem:[%s473 + $0x458] sm:$0xff]
        %v1106 = vld [vmem:[%s473 + $0x460] sm:$0xff]
        %v1107 = vld [vmem:[%s473 + $0x468] sm:$0xff]
        %v1108 = vld [vmem:[%s473 + $0x470] sm:$0xff]
        %v1109 = vld [vmem:[%s473 + $0x478] sm:$0xff]
        %v1110 = vld [vmem:[%s473 + $0x480] sm:$0xff]
        %v1111 = vld [vmem:[%s473 + $0x488] sm:$0xff]
        %v1112 = vld [vmem:[%s473 + $0x490] sm:$0xff]
        %v1113 = vld [vmem:[%s473 + $0x498] sm:$0xff]
        %v1114 = vld [vmem:[%s473 + $0x4a0] sm:$0xff]
        %v1115 = vld [vmem:[%s473 + $0x4a8] sm:$0xff]
        %v1116 = vld [vmem:[%s473 + $0x4b0] sm:$0xff]
        %v1117 = vld [vmem:[%s473 + $0x4b8] sm:$0xff]
        %v1118 = vld [vmem:[%s473 + $0x4c0] sm:$0xff]
        %v1119 = vld [vmem:[%s473 + $0x4c8] sm:$0xff]
        %v1120 = vld [vmem:[%s473 + $0x4d0] sm:$0xff]
        %v1121 = vld [vmem:[%s473 + $0x4d8] sm:$0xff]
        %v1122 = vld [vmem:[%s473 + $0x4e0] sm:$0xff]
        %v1123 = vld [vmem:[%s473 + $0x4e8] sm:$0xff]
        %v1124 = vld [vmem:[%s473 + $0x4f0] sm:$0xff]
        %v1125 = vld [vmem:[%s473 + $0x4f8] sm:$0xff]
        %v1126 = vld [vmem:[%s473 + $0x500] sm:$0xff]
        %v1127 = vld [vmem:[%s473 + $0x508] sm:$0xff]
        %v1128 = vld [vmem:[%s473 + $0x510] sm:$0xff]
        %v1129 = vld [vmem:[%s473 + $0x518] sm:$0xff]
        %v1130 = vld [vmem:[%s473 + $0x520] sm:$0xff]
        %v1131 = vld [vmem:[%s473 + $0x528] sm:$0xff]
        %v1132 = vld [vmem:[%s473 + $0x530] sm:$0xff]
        %v1133 = vld [vmem:[%s473 + $0x538] sm:$0xff]
        %v1134 = vld [vmem:[%s473 + $0x540] sm:$0xff]
        %v1135 = vld [vmem:[%s473 + $0x548] sm:$0xff]
        %v1136 = vld [vmem:[%s473 + $0x550] sm:$0xff]
        %v1137 = vld [vmem:[%s473 + $0x558] sm:$0xff]
        %v1138 = vld [vmem:[%s473 + $0x560] sm:$0xff]
        %v1139 = vld [vmem:[%s473 + $0x568] sm:$0xff]
        %v1140 = vld [vmem:[%s473 + $0x570] sm:$0xff]
        %v1141 = vld [vmem:[%s473 + $0x578] sm:$0xff]
        %v1142 = vld [vmem:[%s473 + $0x580] sm:$0xff]
        %v1143 = vld [vmem:[%s473 + $0x588] sm:$0xff]
        %v1144 = vld [vmem:[%s473 + $0x590] sm:$0xff]
        %v1145 = vld [vmem:[%s473 + $0x598] sm:$0xff]
        %v1146 = vld [vmem:[%s473 + $0x5a0] sm:$0xff]
        %v1147 = vld [vmem:[%s473 + $0x5a8] sm:$0xff]
        %v1148 = vld [vmem:[%s473 + $0x5b0] sm:$0xff]
        %v1149 = vld [vmem:[%s473 + $0x5b8] sm:$0xff]
        %v1150 = vld [vmem:[%s473 + $0x5c0] sm:$0xff]
        %v1151 = vld [vmem:[%s473 + $0x5c8] sm:$0xff]
        %v1152 = vld [vmem:[%s473 + $0x5d0] sm:$0xff]
        %v1153 = vld [vmem:[%s473 + $0x5d8] sm:$0xff]
        %v1154 = vld [vmem:[%s473 + $0x5e0] sm:$0xff]
        %v1155 = vld [vmem:[%s473 + $0x5e8] sm:$0xff]
        %v1156 = vld [vmem:[%s473 + $0x5f0] sm:$0xff]
        %v1157 = vld [vmem:[%s473 + $0x5f8] sm:$0xff]
        %v1158 = vld [vmem:[%s473 + $0x600] sm:$0xff]
        %v1159 = vld [vmem:[%s473 + $0x608] sm:$0xff]
        %v1160 = vld [vmem:[%s473 + $0x610] sm:$0xff]
        %v1161 = vld [vmem:[%s473 + $0x618] sm:$0xff]
        %v1162 = vld [vmem:[%s473 + $0x620] sm:$0xff]
        %v1163 = vld [vmem:[%s473 + $0x628] sm:$0xff]
        %v1164 = vld [vmem:[%s473 + $0x630] sm:$0xff]
        %v1165 = vld [vmem:[%s473 + $0x638] sm:$0xff]
        %v1166 = vld [vmem:[%s473 + $0x640] sm:$0xff]
        %v1167 = vld [vmem:[%s473 + $0x648] sm:$0xff]
        %v1168 = vld [vmem:[%s473 + $0x650] sm:$0xff]
        %v1169 = vld [vmem:[%s473 + $0x658] sm:$0xff]
        %v1170 = vld [vmem:[%s473 + $0x660] sm:$0xff]
        %v1171 = vld [vmem:[%s473 + $0x668] sm:$0xff]
        %v1172 = vld [vmem:[%s473 + $0x670] sm:$0xff]
        %v1173 = vld [vmem:[%s473 + $0x678] sm:$0xff]
        %v1174 = vld [vmem:[%s473 + $0x680] sm:$0xff]
        %v1175 = vld [vmem:[%s473 + $0x688] sm:$0xff]
        %v1176 = vld [vmem:[%s473 + $0x690] sm:$0xff]
        %v1177 = vld [vmem:[%s473 + $0x698] sm:$0xff]
        %v1178 = vld [vmem:[%s473 + $0x6a0] sm:$0xff]
        %v1179 = vld [vmem:[%s473 + $0x6a8] sm:$0xff]
        %v1180 = vld [vmem:[%s473 + $0x6b0] sm:$0xff]
        %v1181 = vld [vmem:[%s473 + $0x6b8] sm:$0xff]
        %v1182 = vld [vmem:[%s473 + $0x6c0] sm:$0xff]
        %v1183 = vld [vmem:[%s473 + $0x6c8] sm:$0xff]
        %v1184 = vld [vmem:[%s473 + $0x6d0] sm:$0xff]
        %v1185 = vld [vmem:[%s473 + $0x6d8] sm:$0xff]
        %v1186 = vld [vmem:[%s473 + $0x6e0] sm:$0xff]
        %v1187 = vld [vmem:[%s473 + $0x6e8] sm:$0xff]
        %v1188 = vld [vmem:[%s473 + $0x6f0] sm:$0xff]
        %v1189 = vld [vmem:[%s473 + $0x6f8] sm:$0xff]
        %v1190 = vld [vmem:[%s473 + $0x700] sm:$0xff]
        %v1191 = vld [vmem:[%s473 + $0x708] sm:$0xff]
        %v1192 = vld [vmem:[%s473 + $0x710] sm:$0xff]
        %v1193 = vld [vmem:[%s473 + $0x718] sm:$0xff]
        %v1194 = vld [vmem:[%s473 + $0x720] sm:$0xff]
        %v1195 = vld [vmem:[%s473 + $0x728] sm:$0xff]
        %v1196 = vld [vmem:[%s473 + $0x730] sm:$0xff]
        %v1197 = vld [vmem:[%s473 + $0x738] sm:$0xff]
        %v1198 = vld [vmem:[%s473 + $0x740] sm:$0xff]
        %v1199 = vld [vmem:[%s473 + $0x748] sm:$0xff]
        %v1200 = vld [vmem:[%s473 + $0x750] sm:$0xff]
        %v1201 = vld [vmem:[%s473 + $0x758] sm:$0xff]
        %v1202 = vld [vmem:[%s473 + $0x760] sm:$0xff]
        %v1203 = vld [vmem:[%s473 + $0x768] sm:$0xff]
        %v1204 = vld [vmem:[%s473 + $0x770] sm:$0xff]
        %v1205 = vld [vmem:[%s473 + $0x778] sm:$0xff]
        %v1206 = vld [vmem:[%s473 + $0x780] sm:$0xff]
        %v1207 = vld [vmem:[%s473 + $0x788] sm:$0xff]
        %v1208 = vld [vmem:[%s473 + $0x790] sm:$0xff]
        %v1209 = vld [vmem:[%s473 + $0x798] sm:$0xff]
        %v1210 = vld [vmem:[%s473 + $0x7a0] sm:$0xff]
        %v1211 = vld [vmem:[%s473 + $0x7a8] sm:$0xff]
        %v1212 = vld [vmem:[%s473 + $0x7b0] sm:$0xff]
        %v1213 = vld [vmem:[%s473 + $0x7b8] sm:$0xff]
        %v1214 = vld [vmem:[%s473 + $0x7c0] sm:$0xff]
        %v1215 = vld [vmem:[%s473 + $0x7c8] sm:$0xff]
        %v1216 = vld [vmem:[%s473 + $0x7d0] sm:$0xff]
        %v1217 = vld [vmem:[%s473 + $0x7d8] sm:$0xff]
        %v1218 = vld [vmem:[%s473 + $0x7e0] sm:$0xff]
        %v1219 = vld [vmem:[%s473 + $0x7e8] sm:$0xff]
        %v1220 = vld [vmem:[%s473 + $0x7f0] sm:$0xff]
        %v1221 = vld [vmem:[%s473 + $0x7f8] sm:$0xff]
        %v1222 = vld [vmem:[%s482] sm:$0x3]
        %v1224 = vlaneseq
        %v1225 = vshrl.u32 %v1224, 7
        %v1226 = vsub.s32 0, %v1225
        %v1227 = vrot.slane %v1222, %v1226
        %v1228 = vlaneseq
        %v1229 = vshrl.u32 %v1228, 7
        %v1230 = vsub.s32 1, %v1229
        %v1231 = vrot.slane %v1222, %v1230
        %v1490 = vunpack.c.l.b16 %v966
        %v1491 = vunpack.c.h.b16 %v966
        %v1492 = vunpack.c.l.b16 %v967
        %v1493 = vunpack.c.h.b16 %v967
        %v1494 = vunpack.c.l.b16 %v968
        %v1495 = vunpack.c.h.b16 %v968
        %v1496 = vunpack.c.l.b16 %v969
        %v1497 = vunpack.c.h.b16 %v969
        %v1498 = vunpack.c.l.b16 %v970
        %v1499 = vunpack.c.h.b16 %v970
        %v1500 = vunpack.c.l.b16 %v971
        %v1501 = vunpack.c.h.b16 %v971
        %v1502 = vunpack.c.l.b16 %v972
        %v1503 = vunpack.c.h.b16 %v972
        %v1504 = vunpack.c.l.b16 %v973
        %v1505 = vunpack.c.h.b16 %v973
        %v1506 = vunpack.c.l.b16 %v974
        %v1507 = vunpack.c.h.b16 %v974
        %v1508 = vunpack.c.l.b16 %v975
        %v1509 = vunpack.c.h.b16 %v975
        %v1510 = vunpack.c.l.b16 %v976
        %v1511 = vunpack.c.h.b16 %v976
        %v1512 = vunpack.c.l.b16 %v977
        %v1513 = vunpack.c.h.b16 %v977
        %v1514 = vunpack.c.l.b16 %v978
        %v1515 = vunpack.c.h.b16 %v978
        %v1516 = vunpack.c.l.b16 %v979
        %v1517 = vunpack.c.h.b16 %v979
        %v1518 = vunpack.c.l.b16 %v980
        %v1519 = vunpack.c.h.b16 %v980
        %v1520 = vunpack.c.l.b16 %v981
        %v1521 = vunpack.c.h.b16 %v981
        %v1522 = vunpack.c.l.b16 %v982
        %v1523 = vunpack.c.h.b16 %v982
        %v1524 = vunpack.c.l.b16 %v983
        %v1525 = vunpack.c.h.b16 %v983
        %v1526 = vunpack.c.l.b16 %v984
        %v1527 = vunpack.c.h.b16 %v984
        %v1528 = vunpack.c.l.b16 %v985
        %v1529 = vunpack.c.h.b16 %v985
        %v1530 = vunpack.c.l.b16 %v986
        %v1531 = vunpack.c.h.b16 %v986
        %v1532 = vunpack.c.l.b16 %v987
        %v1533 = vunpack.c.h.b16 %v987
        %v1534 = vunpack.c.l.b16 %v988
        %v1535 = vunpack.c.h.b16 %v988
        %v1536 = vunpack.c.l.b16 %v989
        %v1537 = vunpack.c.h.b16 %v989
        %v1538 = vunpack.c.l.b16 %v990
        %v1539 = vunpack.c.h.b16 %v990
        %v1540 = vunpack.c.l.b16 %v991
        %v1541 = vunpack.c.h.b16 %v991
        %v1542 = vunpack.c.l.b16 %v992
        %v1543 = vunpack.c.h.b16 %v992
        %v1544 = vunpack.c.l.b16 %v993
        %v1545 = vunpack.c.h.b16 %v993
        %v1546 = vunpack.c.l.b16 %v994
        %v1547 = vunpack.c.h.b16 %v994
        %v1548 = vunpack.c.l.b16 %v995
        %v1549 = vunpack.c.h.b16 %v995
        %v1550 = vunpack.c.l.b16 %v996
        %v1551 = vunpack.c.h.b16 %v996
        %v1552 = vunpack.c.l.b16 %v997
        %v1553 = vunpack.c.h.b16 %v997
        %v1554 = vunpack.c.l.b16 %v998
        %v1555 = vunpack.c.h.b16 %v998
        %v1556 = vunpack.c.l.b16 %v999
        %v1557 = vunpack.c.h.b16 %v999
        %v1558 = vunpack.c.l.b16 %v1000
        %v1559 = vunpack.c.h.b16 %v1000
        %v1560 = vunpack.c.l.b16 %v1001
        %v1561 = vunpack.c.h.b16 %v1001
        %v1562 = vunpack.c.l.b16 %v1002
        %v1563 = vunpack.c.h.b16 %v1002
        %v1564 = vunpack.c.l.b16 %v1003
        %v1565 = vunpack.c.h.b16 %v1003
        %v1566 = vunpack.c.l.b16 %v1004
        %v1567 = vunpack.c.h.b16 %v1004
        %v1568 = vunpack.c.l.b16 %v1005
        %v1569 = vunpack.c.h.b16 %v1005
        %v1570 = vunpack.c.l.b16 %v1006
        %v1571 = vunpack.c.h.b16 %v1006
        %v1572 = vunpack.c.l.b16 %v1007
        %v1573 = vunpack.c.h.b16 %v1007
        %v1574 = vunpack.c.l.b16 %v1008
        %v1575 = vunpack.c.h.b16 %v1008
        %v1576 = vunpack.c.l.b16 %v1009
        %v1577 = vunpack.c.h.b16 %v1009
        %v1578 = vunpack.c.l.b16 %v1010
        %v1579 = vunpack.c.h.b16 %v1010
        %v1580 = vunpack.c.l.b16 %v1011
        %v1581 = vunpack.c.h.b16 %v1011
        %v1582 = vunpack.c.l.b16 %v1012
        %v1583 = vunpack.c.h.b16 %v1012
        %v1584 = vunpack.c.l.b16 %v1013
        %v1585 = vunpack.c.h.b16 %v1013
        %v1586 = vunpack.c.l.b16 %v1014
        %v1587 = vunpack.c.h.b16 %v1014
        %v1588 = vunpack.c.l.b16 %v1015
        %v1589 = vunpack.c.h.b16 %v1015
        %v1590 = vunpack.c.l.b16 %v1016
        %v1591 = vunpack.c.h.b16 %v1016
        %v1592 = vunpack.c.l.b16 %v1017
        %v1593 = vunpack.c.h.b16 %v1017
        %v1594 = vunpack.c.l.b16 %v1018
        %v1595 = vunpack.c.h.b16 %v1018
        %v1596 = vunpack.c.l.b16 %v1019
        %v1597 = vunpack.c.h.b16 %v1019
        %v1598 = vunpack.c.l.b16 %v1020
        %v1599 = vunpack.c.h.b16 %v1020
        %v1600 = vunpack.c.l.b16 %v1021
        %v1601 = vunpack.c.h.b16 %v1021
        %v1602 = vunpack.c.l.b16 %v1022
        %v1603 = vunpack.c.h.b16 %v1022
        %v1604 = vunpack.c.l.b16 %v1023
        %v1605 = vunpack.c.h.b16 %v1023
        %v1606 = vunpack.c.l.b16 %v1024
        %v1607 = vunpack.c.h.b16 %v1024
        %v1608 = vunpack.c.l.b16 %v1025
        %v1609 = vunpack.c.h.b16 %v1025
        %v1610 = vunpack.c.l.b16 %v1026
        %v1611 = vunpack.c.h.b16 %v1026
        %v1612 = vunpack.c.l.b16 %v1027
        %v1613 = vunpack.c.h.b16 %v1027
        %v1614 = vunpack.c.l.b16 %v1028
        %v1615 = vunpack.c.h.b16 %v1028
        %v1616 = vunpack.c.l.b16 %v1029
        %v1617 = vunpack.c.h.b16 %v1029
        %v1618 = vunpack.c.l.b16 %v1030
        %v1619 = vunpack.c.h.b16 %v1030
        %v1620 = vunpack.c.l.b16 %v1031
        %v1621 = vunpack.c.h.b16 %v1031
        %v1622 = vunpack.c.l.b16 %v1032
        %v1623 = vunpack.c.h.b16 %v1032
        %v1624 = vunpack.c.l.b16 %v1033
        %v1625 = vunpack.c.h.b16 %v1033
        %v1626 = vunpack.c.l.b16 %v1034
        %v1627 = vunpack.c.h.b16 %v1034
        %v1628 = vunpack.c.l.b16 %v1035
        %v1629 = vunpack.c.h.b16 %v1035
        %v1630 = vunpack.c.l.b16 %v1036
        %v1631 = vunpack.c.h.b16 %v1036
        %v1632 = vunpack.c.l.b16 %v1037
        %v1633 = vunpack.c.h.b16 %v1037
        %v1634 = vunpack.c.l.b16 %v1038
        %v1635 = vunpack.c.h.b16 %v1038
        %v1636 = vunpack.c.l.b16 %v1039
        %v1637 = vunpack.c.h.b16 %v1039
        %v1638 = vunpack.c.l.b16 %v1040
        %v1639 = vunpack.c.h.b16 %v1040
        %v1640 = vunpack.c.l.b16 %v1041
        %v1641 = vunpack.c.h.b16 %v1041
        %v1642 = vunpack.c.l.b16 %v1042
        %v1643 = vunpack.c.h.b16 %v1042
        %v1644 = vunpack.c.l.b16 %v1043
        %v1645 = vunpack.c.h.b16 %v1043
        %v1646 = vunpack.c.l.b16 %v1044
        %v1647 = vunpack.c.h.b16 %v1044
        %v1648 = vunpack.c.l.b16 %v1045
        %v1649 = vunpack.c.h.b16 %v1045
        %v1650 = vunpack.c.l.b16 %v1046
        %v1651 = vunpack.c.h.b16 %v1046
        %v1652 = vunpack.c.l.b16 %v1047
        %v1653 = vunpack.c.h.b16 %v1047
        %v1654 = vunpack.c.l.b16 %v1048
        %v1655 = vunpack.c.h.b16 %v1048
        %v1656 = vunpack.c.l.b16 %v1049
        %v1657 = vunpack.c.h.b16 %v1049
        %v1658 = vunpack.c.l.b16 %v1050
        %v1659 = vunpack.c.h.b16 %v1050
        %v1660 = vunpack.c.l.b16 %v1051
        %v1661 = vunpack.c.h.b16 %v1051
        %v1662 = vunpack.c.l.b16 %v1052
        %v1663 = vunpack.c.h.b16 %v1052
        %v1664 = vunpack.c.l.b16 %v1053
        %v1665 = vunpack.c.h.b16 %v1053
        %v1666 = vunpack.c.l.b16 %v1054
        %v1667 = vunpack.c.h.b16 %v1054
        %v1668 = vunpack.c.l.b16 %v1055
        %v1669 = vunpack.c.h.b16 %v1055
        %v1670 = vunpack.c.l.b16 %v1056
        %v1671 = vunpack.c.h.b16 %v1056
        %v1672 = vunpack.c.l.b16 %v1057
        %v1673 = vunpack.c.h.b16 %v1057
        %v1674 = vunpack.c.l.b16 %v1058
        %v1675 = vunpack.c.h.b16 %v1058
        %v1676 = vunpack.c.l.b16 %v1059
        %v1677 = vunpack.c.h.b16 %v1059
        %v1678 = vunpack.c.l.b16 %v1060
        %v1679 = vunpack.c.h.b16 %v1060
        %v1680 = vunpack.c.l.b16 %v1061
        %v1681 = vunpack.c.h.b16 %v1061
        %v1682 = vunpack.c.l.b16 %v1062
        %v1683 = vunpack.c.h.b16 %v1062
        %v1684 = vunpack.c.l.b16 %v1063
        %v1685 = vunpack.c.h.b16 %v1063
        %v1686 = vunpack.c.l.b16 %v1064
        %v1687 = vunpack.c.h.b16 %v1064
        %v1688 = vunpack.c.l.b16 %v1065
        %v1689 = vunpack.c.h.b16 %v1065
        %v1690 = vunpack.c.l.b16 %v1066
        %v1691 = vunpack.c.h.b16 %v1066
        %v1692 = vunpack.c.l.b16 %v1067
        %v1693 = vunpack.c.h.b16 %v1067
        %v1694 = vunpack.c.l.b16 %v1068
        %v1695 = vunpack.c.h.b16 %v1068
        %v1696 = vunpack.c.l.b16 %v1069
        %v1697 = vunpack.c.h.b16 %v1069
        %v1698 = vunpack.c.l.b16 %v1070
        %v1699 = vunpack.c.h.b16 %v1070
        %v1700 = vunpack.c.l.b16 %v1071
        %v1701 = vunpack.c.h.b16 %v1071
        %v1702 = vunpack.c.l.b16 %v1072
        %v1703 = vunpack.c.h.b16 %v1072
        %v1704 = vunpack.c.l.b16 %v1073
        %v1705 = vunpack.c.h.b16 %v1073
        %v1706 = vunpack.c.l.b16 %v1074
        %v1707 = vunpack.c.h.b16 %v1074
        %v1708 = vunpack.c.l.b16 %v1075
        %v1709 = vunpack.c.h.b16 %v1075
        %v1710 = vunpack.c.l.b16 %v1076
        %v1711 = vunpack.c.h.b16 %v1076
        %v1712 = vunpack.c.l.b16 %v1077
        %v1713 = vunpack.c.h.b16 %v1077
        %v1714 = vunpack.c.l.b16 %v1078
        %v1715 = vunpack.c.h.b16 %v1078
        %v1716 = vunpack.c.l.b16 %v1079
        %v1717 = vunpack.c.h.b16 %v1079
        %v1718 = vunpack.c.l.b16 %v1080
        %v1719 = vunpack.c.h.b16 %v1080
        %v1720 = vunpack.c.l.b16 %v1081
        %v1721 = vunpack.c.h.b16 %v1081
        %v1722 = vunpack.c.l.b16 %v1082
        %v1723 = vunpack.c.h.b16 %v1082
        %v1724 = vunpack.c.l.b16 %v1083
        %v1725 = vunpack.c.h.b16 %v1083
        %v1726 = vunpack.c.l.b16 %v1084
        %v1727 = vunpack.c.h.b16 %v1084
        %v1728 = vunpack.c.l.b16 %v1085
        %v1729 = vunpack.c.h.b16 %v1085
        %v1730 = vunpack.c.l.b16 %v1086
        %v1731 = vunpack.c.h.b16 %v1086
        %v1732 = vunpack.c.l.b16 %v1087
        %v1733 = vunpack.c.h.b16 %v1087
        %v1734 = vunpack.c.l.b16 %v1088
        %v1735 = vunpack.c.h.b16 %v1088
        %v1736 = vunpack.c.l.b16 %v1089
        %v1737 = vunpack.c.h.b16 %v1089
        %v1738 = vunpack.c.l.b16 %v1090
        %v1739 = vunpack.c.h.b16 %v1090
        %v1740 = vunpack.c.l.b16 %v1091
        %v1741 = vunpack.c.h.b16 %v1091
        %v1742 = vunpack.c.l.b16 %v1092
        %v1743 = vunpack.c.h.b16 %v1092
        %v1744 = vunpack.c.l.b16 %v1093
        %v1745 = vunpack.c.h.b16 %v1093
        %v1746 = vunpack.c.l.b16 %v1094
        %v1747 = vunpack.c.h.b16 %v1094
        %v1748 = vunpack.c.l.b16 %v1095
        %v1749 = vunpack.c.h.b16 %v1095
        %v1750 = vunpack.c.l.b16 %v1096
        %v1751 = vunpack.c.h.b16 %v1096
        %v1752 = vunpack.c.l.b16 %v1097
        %v1753 = vunpack.c.h.b16 %v1097
        %v1754 = vunpack.c.l.b16 %v1098
        %v1755 = vunpack.c.h.b16 %v1098
        %v1756 = vunpack.c.l.b16 %v1099
        %v1757 = vunpack.c.h.b16 %v1099
        %v1758 = vunpack.c.l.b16 %v1100
        %v1759 = vunpack.c.h.b16 %v1100
        %v1760 = vunpack.c.l.b16 %v1101
        %v1761 = vunpack.c.h.b16 %v1101
        %v1762 = vunpack.c.l.b16 %v1102
        %v1763 = vunpack.c.h.b16 %v1102
        %v1764 = vunpack.c.l.b16 %v1103
        %v1765 = vunpack.c.h.b16 %v1103
        %v1766 = vunpack.c.l.b16 %v1104
        %v1767 = vunpack.c.h.b16 %v1104
        %v1768 = vunpack.c.l.b16 %v1105
        %v1769 = vunpack.c.h.b16 %v1105
        %v1770 = vunpack.c.l.b16 %v1106
        %v1771 = vunpack.c.h.b16 %v1106
        %v1772 = vunpack.c.l.b16 %v1107
        %v1773 = vunpack.c.h.b16 %v1107
        %v1774 = vunpack.c.l.b16 %v1108
        %v1775 = vunpack.c.h.b16 %v1108
        %v1776 = vunpack.c.l.b16 %v1109
        %v1777 = vunpack.c.h.b16 %v1109
        %v1778 = vunpack.c.l.b16 %v1110
        %v1779 = vunpack.c.h.b16 %v1110
        %v1780 = vunpack.c.l.b16 %v1111
        %v1781 = vunpack.c.h.b16 %v1111
        %v1782 = vunpack.c.l.b16 %v1112
        %v1783 = vunpack.c.h.b16 %v1112
        %v1784 = vunpack.c.l.b16 %v1113
        %v1785 = vunpack.c.h.b16 %v1113
        %v1786 = vunpack.c.l.b16 %v1114
        %v1787 = vunpack.c.h.b16 %v1114
        %v1788 = vunpack.c.l.b16 %v1115
        %v1789 = vunpack.c.h.b16 %v1115
        %v1790 = vunpack.c.l.b16 %v1116
        %v1791 = vunpack.c.h.b16 %v1116
        %v1792 = vunpack.c.l.b16 %v1117
        %v1793 = vunpack.c.h.b16 %v1117
        %v1794 = vunpack.c.l.b16 %v1118
        %v1795 = vunpack.c.h.b16 %v1118
        %v1796 = vunpack.c.l.b16 %v1119
        %v1797 = vunpack.c.h.b16 %v1119
        %v1798 = vunpack.c.l.b16 %v1120
        %v1799 = vunpack.c.h.b16 %v1120
        %v1800 = vunpack.c.l.b16 %v1121
        %v1801 = vunpack.c.h.b16 %v1121
        %v1802 = vunpack.c.l.b16 %v1122
        %v1803 = vunpack.c.h.b16 %v1122
        %v1804 = vunpack.c.l.b16 %v1123
        %v1805 = vunpack.c.h.b16 %v1123
        %v1806 = vunpack.c.l.b16 %v1124
        %v1807 = vunpack.c.h.b16 %v1124
        %v1808 = vunpack.c.l.b16 %v1125
        %v1809 = vunpack.c.h.b16 %v1125
        %v1810 = vunpack.c.l.b16 %v1126
        %v1811 = vunpack.c.h.b16 %v1126
        %v1812 = vunpack.c.l.b16 %v1127
        %v1813 = vunpack.c.h.b16 %v1127
        %v1814 = vunpack.c.l.b16 %v1128
        %v1815 = vunpack.c.h.b16 %v1128
        %v1816 = vunpack.c.l.b16 %v1129
        %v1817 = vunpack.c.h.b16 %v1129
        %v1818 = vunpack.c.l.b16 %v1130
        %v1819 = vunpack.c.h.b16 %v1130
        %v1820 = vunpack.c.l.b16 %v1131
        %v1821 = vunpack.c.h.b16 %v1131
        %v1822 = vunpack.c.l.b16 %v1132
        %v1823 = vunpack.c.h.b16 %v1132
        %v1824 = vunpack.c.l.b16 %v1133
        %v1825 = vunpack.c.h.b16 %v1133
        %v1826 = vunpack.c.l.b16 %v1134
        %v1827 = vunpack.c.h.b16 %v1134
        %v1828 = vunpack.c.l.b16 %v1135
        %v1829 = vunpack.c.h.b16 %v1135
        %v1830 = vunpack.c.l.b16 %v1136
        %v1831 = vunpack.c.h.b16 %v1136
        %v1832 = vunpack.c.l.b16 %v1137
        %v1833 = vunpack.c.h.b16 %v1137
        %v1834 = vunpack.c.l.b16 %v1138
        %v1835 = vunpack.c.h.b16 %v1138
        %v1836 = vunpack.c.l.b16 %v1139
        %v1837 = vunpack.c.h.b16 %v1139
        %v1838 = vunpack.c.l.b16 %v1140
        %v1839 = vunpack.c.h.b16 %v1140
        %v1840 = vunpack.c.l.b16 %v1141
        %v1841 = vunpack.c.h.b16 %v1141
        %v1842 = vunpack.c.l.b16 %v1142
        %v1843 = vunpack.c.h.b16 %v1142
        %v1844 = vunpack.c.l.b16 %v1143
        %v1845 = vunpack.c.h.b16 %v1143
        %v1846 = vunpack.c.l.b16 %v1144
        %v1847 = vunpack.c.h.b16 %v1144
        %v1848 = vunpack.c.l.b16 %v1145
        %v1849 = vunpack.c.h.b16 %v1145
        %v1850 = vunpack.c.l.b16 %v1146
        %v1851 = vunpack.c.h.b16 %v1146
        %v1852 = vunpack.c.l.b16 %v1147
        %v1853 = vunpack.c.h.b16 %v1147
        %v1854 = vunpack.c.l.b16 %v1148
        %v1855 = vunpack.c.h.b16 %v1148
        %v1856 = vunpack.c.l.b16 %v1149
        %v1857 = vunpack.c.h.b16 %v1149
        %v1858 = vunpack.c.l.b16 %v1150
        %v1859 = vunpack.c.h.b16 %v1150
        %v1860 = vunpack.c.l.b16 %v1151
        %v1861 = vunpack.c.h.b16 %v1151
        %v1862 = vunpack.c.l.b16 %v1152
        %v1863 = vunpack.c.h.b16 %v1152
        %v1864 = vunpack.c.l.b16 %v1153
        %v1865 = vunpack.c.h.b16 %v1153
        %v1866 = vunpack.c.l.b16 %v1154
        %v1867 = vunpack.c.h.b16 %v1154
        %v1868 = vunpack.c.l.b16 %v1155
        %v1869 = vunpack.c.h.b16 %v1155
        %v1870 = vunpack.c.l.b16 %v1156
        %v1871 = vunpack.c.h.b16 %v1156
        %v1872 = vunpack.c.l.b16 %v1157
        %v1873 = vunpack.c.h.b16 %v1157
        %v1874 = vunpack.c.l.b16 %v1158
        %v1875 = vunpack.c.h.b16 %v1158
        %v1876 = vunpack.c.l.b16 %v1159
        %v1877 = vunpack.c.h.b16 %v1159
        %v1878 = vunpack.c.l.b16 %v1160
        %v1879 = vunpack.c.h.b16 %v1160
        %v1880 = vunpack.c.l.b16 %v1161
        %v1881 = vunpack.c.h.b16 %v1161
        %v1882 = vunpack.c.l.b16 %v1162
        %v1883 = vunpack.c.h.b16 %v1162
        %v1884 = vunpack.c.l.b16 %v1163
        %v1885 = vunpack.c.h.b16 %v1163
        %v1886 = vunpack.c.l.b16 %v1164
        %v1887 = vunpack.c.h.b16 %v1164
        %v1888 = vunpack.c.l.b16 %v1165
        %v1889 = vunpack.c.h.b16 %v1165
        %v1890 = vunpack.c.l.b16 %v1166
        %v1891 = vunpack.c.h.b16 %v1166
        %v1892 = vunpack.c.l.b16 %v1167
        %v1893 = vunpack.c.h.b16 %v1167
        %v1894 = vunpack.c.l.b16 %v1168
        %v1895 = vunpack.c.h.b16 %v1168
        %v1896 = vunpack.c.l.b16 %v1169
        %v1897 = vunpack.c.h.b16 %v1169
        %v1898 = vunpack.c.l.b16 %v1170
        %v1899 = vunpack.c.h.b16 %v1170
        %v1900 = vunpack.c.l.b16 %v1171
        %v1901 = vunpack.c.h.b16 %v1171
        %v1902 = vunpack.c.l.b16 %v1172
        %v1903 = vunpack.c.h.b16 %v1172
        %v1904 = vunpack.c.l.b16 %v1173
        %v1905 = vunpack.c.h.b16 %v1173
        %v1906 = vunpack.c.l.b16 %v1174
        %v1907 = vunpack.c.h.b16 %v1174
        %v1908 = vunpack.c.l.b16 %v1175
        %v1909 = vunpack.c.h.b16 %v1175
        %v1910 = vunpack.c.l.b16 %v1176
        %v1911 = vunpack.c.h.b16 %v1176
        %v1912 = vunpack.c.l.b16 %v1177
        %v1913 = vunpack.c.h.b16 %v1177
        %v1914 = vunpack.c.l.b16 %v1178
        %v1915 = vunpack.c.h.b16 %v1178
        %v1916 = vunpack.c.l.b16 %v1179
        %v1917 = vunpack.c.h.b16 %v1179
        %v1918 = vunpack.c.l.b16 %v1180
        %v1919 = vunpack.c.h.b16 %v1180
        %v1920 = vunpack.c.l.b16 %v1181
        %v1921 = vunpack.c.h.b16 %v1181
        %v1922 = vunpack.c.l.b16 %v1182
        %v1923 = vunpack.c.h.b16 %v1182
        %v1924 = vunpack.c.l.b16 %v1183
        %v1925 = vunpack.c.h.b16 %v1183
        %v1926 = vunpack.c.l.b16 %v1184
        %v1927 = vunpack.c.h.b16 %v1184
        %v1928 = vunpack.c.l.b16 %v1185
        %v1929 = vunpack.c.h.b16 %v1185
        %v1930 = vunpack.c.l.b16 %v1186
        %v1931 = vunpack.c.h.b16 %v1186
        %v1932 = vunpack.c.l.b16 %v1187
        %v1933 = vunpack.c.h.b16 %v1187
        %v1934 = vunpack.c.l.b16 %v1188
        %v1935 = vunpack.c.h.b16 %v1188
        %v1936 = vunpack.c.l.b16 %v1189
        %v1937 = vunpack.c.h.b16 %v1189
        %v1938 = vunpack.c.l.b16 %v1190
        %v1939 = vunpack.c.h.b16 %v1190
        %v1940 = vunpack.c.l.b16 %v1191
        %v1941 = vunpack.c.h.b16 %v1191
        %v1942 = vunpack.c.l.b16 %v1192
        %v1943 = vunpack.c.h.b16 %v1192
        %v1944 = vunpack.c.l.b16 %v1193
        %v1945 = vunpack.c.h.b16 %v1193
        %v1946 = vunpack.c.l.b16 %v1194
        %v1947 = vunpack.c.h.b16 %v1194
        %v1948 = vunpack.c.l.b16 %v1195
        %v1949 = vunpack.c.h.b16 %v1195
        %v1950 = vunpack.c.l.b16 %v1196
        %v1951 = vunpack.c.h.b16 %v1196
        %v1952 = vunpack.c.l.b16 %v1197
        %v1953 = vunpack.c.h.b16 %v1197
        %v1954 = vunpack.c.l.b16 %v1198
        %v1955 = vunpack.c.h.b16 %v1198
        %v1956 = vunpack.c.l.b16 %v1199
        %v1957 = vunpack.c.h.b16 %v1199
        %v1958 = vunpack.c.l.b16 %v1200
        %v1959 = vunpack.c.h.b16 %v1200
        %v1960 = vunpack.c.l.b16 %v1201
        %v1961 = vunpack.c.h.b16 %v1201
        %v1962 = vunpack.c.l.b16 %v1202
        %v1963 = vunpack.c.h.b16 %v1202
        %v1964 = vunpack.c.l.b16 %v1203
        %v1965 = vunpack.c.h.b16 %v1203
        %v1966 = vunpack.c.l.b16 %v1204
        %v1967 = vunpack.c.h.b16 %v1204
        %v1968 = vunpack.c.l.b16 %v1205
        %v1969 = vunpack.c.h.b16 %v1205
        %v1970 = vunpack.c.l.b16 %v1206
        %v1971 = vunpack.c.h.b16 %v1206
        %v1972 = vunpack.c.l.b16 %v1207
        %v1973 = vunpack.c.h.b16 %v1207
        %v1974 = vunpack.c.l.b16 %v1208
        %v1975 = vunpack.c.h.b16 %v1208
        %v1976 = vunpack.c.l.b16 %v1209
        %v1977 = vunpack.c.h.b16 %v1209
        %v1978 = vunpack.c.l.b16 %v1210
        %v1979 = vunpack.c.h.b16 %v1210
        %v1980 = vunpack.c.l.b16 %v1211
        %v1981 = vunpack.c.h.b16 %v1211
        %v1982 = vunpack.c.l.b16 %v1212
        %v1983 = vunpack.c.h.b16 %v1212
        %v1984 = vunpack.c.l.b16 %v1213
        %v1985 = vunpack.c.h.b16 %v1213
        %v1986 = vunpack.c.l.b16 %v1214
        %v1987 = vunpack.c.h.b16 %v1214
        %v1988 = vunpack.c.l.b16 %v1215
        %v1989 = vunpack.c.h.b16 %v1215
        %v1990 = vunpack.c.l.b16 %v1216
        %v1991 = vunpack.c.h.b16 %v1216
        %v1992 = vunpack.c.l.b16 %v1217
        %v1993 = vunpack.c.h.b16 %v1217
        %v1994 = vunpack.c.l.b16 %v1218
        %v1995 = vunpack.c.h.b16 %v1218
        %v1996 = vunpack.c.l.b16 %v1219
        %v1997 = vunpack.c.h.b16 %v1219
        %v1998 = vunpack.c.l.b16 %v1220
        %v1999 = vunpack.c.h.b16 %v1220
        %v2000 = vunpack.c.l.b16 %v1221
        %v2001 = vunpack.c.h.b16 %v1221
        %v2002 = vpack.c.b16 %v1492, %v1490
        %v2003 = vpack.c.b16 %v1493, %v1491
        %v2004 = vpack.c.b16 %v1496, %v1494
        %v2005 = vpack.c.b16 %v1497, %v1495
        %v2006 = vpack.c.b16 %v1500, %v1498
        %v2007 = vpack.c.b16 %v1501, %v1499
        %v2008 = vpack.c.b16 %v1504, %v1502
        %v2009 = vpack.c.b16 %v1505, %v1503
        %v2010 = vpack.c.b16 %v1508, %v1506
        %v2011 = vpack.c.b16 %v1509, %v1507
        %v2012 = vpack.c.b16 %v1512, %v1510
        %v2013 = vpack.c.b16 %v1513, %v1511
        %v2014 = vpack.c.b16 %v1516, %v1514
        %v2015 = vpack.c.b16 %v1517, %v1515
        %v2016 = vpack.c.b16 %v1520, %v1518
        %v2017 = vpack.c.b16 %v1521, %v1519
        %v2018 = vpack.c.b16 %v1524, %v1522
        %v2019 = vpack.c.b16 %v1525, %v1523
        %v2020 = vpack.c.b16 %v1528, %v1526
        %v2021 = vpack.c.b16 %v1529, %v1527
        %v2022 = vpack.c.b16 %v1532, %v1530
        %v2023 = vpack.c.b16 %v1533, %v1531
        %v2024 = vpack.c.b16 %v1536, %v1534
        %v2025 = vpack.c.b16 %v1537, %v1535
        %v2026 = vpack.c.b16 %v1540, %v1538
        %v2027 = vpack.c.b16 %v1541, %v1539
        %v2028 = vpack.c.b16 %v1544, %v1542
        %v2029 = vpack.c.b16 %v1545, %v1543
        %v2030 = vpack.c.b16 %v1548, %v1546
        %v2031 = vpack.c.b16 %v1549, %v1547
        %v2032 = vpack.c.b16 %v1552, %v1550
        %v2033 = vpack.c.b16 %v1553, %v1551
        %v2034 = vpack.c.b16 %v1556, %v1554
        %v2035 = vpack.c.b16 %v1557, %v1555
        %v2036 = vpack.c.b16 %v1560, %v1558
        %v2037 = vpack.c.b16 %v1561, %v1559
        %v2038 = vpack.c.b16 %v1564, %v1562
        %v2039 = vpack.c.b16 %v1565, %v1563
        %v2040 = vpack.c.b16 %v1568, %v1566
        %v2041 = vpack.c.b16 %v1569, %v1567
        %v2042 = vpack.c.b16 %v1572, %v1570
        %v2043 = vpack.c.b16 %v1573, %v1571
        %v2044 = vpack.c.b16 %v1576, %v1574
        %v2045 = vpack.c.b16 %v1577, %v1575
        %v2046 = vpack.c.b16 %v1580, %v1578
        %v2047 = vpack.c.b16 %v1581, %v1579
        %v2048 = vpack.c.b16 %v1584, %v1582
        %v2049 = vpack.c.b16 %v1585, %v1583
        %v2050 = vpack.c.b16 %v1588, %v1586
        %v2051 = vpack.c.b16 %v1589, %v1587
        %v2052 = vpack.c.b16 %v1592, %v1590
        %v2053 = vpack.c.b16 %v1593, %v1591
        %v2054 = vpack.c.b16 %v1596, %v1594
        %v2055 = vpack.c.b16 %v1597, %v1595
        %v2056 = vpack.c.b16 %v1600, %v1598
        %v2057 = vpack.c.b16 %v1601, %v1599
        %v2058 = vpack.c.b16 %v1604, %v1602
        %v2059 = vpack.c.b16 %v1605, %v1603
        %v2060 = vpack.c.b16 %v1608, %v1606
        %v2061 = vpack.c.b16 %v1609, %v1607
        %v2062 = vpack.c.b16 %v1612, %v1610
        %v2063 = vpack.c.b16 %v1613, %v1611
        %v2064 = vpack.c.b16 %v1616, %v1614
        %v2065 = vpack.c.b16 %v1617, %v1615
        %v2066 = vpack.c.b16 %v1620, %v1618
        %v2067 = vpack.c.b16 %v1621, %v1619
        %v2068 = vpack.c.b16 %v1624, %v1622
        %v2069 = vpack.c.b16 %v1625, %v1623
        %v2070 = vpack.c.b16 %v1628, %v1626
        %v2071 = vpack.c.b16 %v1629, %v1627
        %v2072 = vpack.c.b16 %v1632, %v1630
        %v2073 = vpack.c.b16 %v1633, %v1631
        %v2074 = vpack.c.b16 %v1636, %v1634
        %v2075 = vpack.c.b16 %v1637, %v1635
        %v2076 = vpack.c.b16 %v1640, %v1638
        %v2077 = vpack.c.b16 %v1641, %v1639
        %v2078 = vpack.c.b16 %v1644, %v1642
        %v2079 = vpack.c.b16 %v1645, %v1643
        %v2080 = vpack.c.b16 %v1648, %v1646
        %v2081 = vpack.c.b16 %v1649, %v1647
        %v2082 = vpack.c.b16 %v1652, %v1650
        %v2083 = vpack.c.b16 %v1653, %v1651
        %v2084 = vpack.c.b16 %v1656, %v1654
        %v2085 = vpack.c.b16 %v1657, %v1655
        %v2086 = vpack.c.b16 %v1660, %v1658
        %v2087 = vpack.c.b16 %v1661, %v1659
        %v2088 = vpack.c.b16 %v1664, %v1662
        %v2089 = vpack.c.b16 %v1665, %v1663
        %v2090 = vpack.c.b16 %v1668, %v1666
        %v2091 = vpack.c.b16 %v1669, %v1667
        %v2092 = vpack.c.b16 %v1672, %v1670
        %v2093 = vpack.c.b16 %v1673, %v1671
        %v2094 = vpack.c.b16 %v1676, %v1674
        %v2095 = vpack.c.b16 %v1677, %v1675
        %v2096 = vpack.c.b16 %v1680, %v1678
        %v2097 = vpack.c.b16 %v1681, %v1679
        %v2098 = vpack.c.b16 %v1684, %v1682
        %v2099 = vpack.c.b16 %v1685, %v1683
        %v2100 = vpack.c.b16 %v1688, %v1686
        %v2101 = vpack.c.b16 %v1689, %v1687
        %v2102 = vpack.c.b16 %v1692, %v1690
        %v2103 = vpack.c.b16 %v1693, %v1691
        %v2104 = vpack.c.b16 %v1696, %v1694
        %v2105 = vpack.c.b16 %v1697, %v1695
        %v2106 = vpack.c.b16 %v1700, %v1698
        %v2107 = vpack.c.b16 %v1701, %v1699
        %v2108 = vpack.c.b16 %v1704, %v1702
        %v2109 = vpack.c.b16 %v1705, %v1703
        %v2110 = vpack.c.b16 %v1708, %v1706
        %v2111 = vpack.c.b16 %v1709, %v1707
        %v2112 = vpack.c.b16 %v1712, %v1710
        %v2113 = vpack.c.b16 %v1713, %v1711
        %v2114 = vpack.c.b16 %v1716, %v1714
        %v2115 = vpack.c.b16 %v1717, %v1715
        %v2116 = vpack.c.b16 %v1720, %v1718
        %v2117 = vpack.c.b16 %v1721, %v1719
        %v2118 = vpack.c.b16 %v1724, %v1722
        %v2119 = vpack.c.b16 %v1725, %v1723
        %v2120 = vpack.c.b16 %v1728, %v1726
        %v2121 = vpack.c.b16 %v1729, %v1727
        %v2122 = vpack.c.b16 %v1732, %v1730
        %v2123 = vpack.c.b16 %v1733, %v1731
        %v2124 = vpack.c.b16 %v1736, %v1734
        %v2125 = vpack.c.b16 %v1737, %v1735
        %v2126 = vpack.c.b16 %v1740, %v1738
        %v2127 = vpack.c.b16 %v1741, %v1739
        %v2128 = vpack.c.b16 %v1744, %v1742
        %v2129 = vpack.c.b16 %v1745, %v1743
        %v2130 = vpack.c.b16 %v1748, %v1746
        %v2131 = vpack.c.b16 %v1749, %v1747
        %v2132 = vpack.c.b16 %v1752, %v1750
        %v2133 = vpack.c.b16 %v1753, %v1751
        %v2134 = vpack.c.b16 %v1756, %v1754
        %v2135 = vpack.c.b16 %v1757, %v1755
        %v2136 = vpack.c.b16 %v1760, %v1758
        %v2137 = vpack.c.b16 %v1761, %v1759
        %v2138 = vpack.c.b16 %v1764, %v1762
        %v2139 = vpack.c.b16 %v1765, %v1763
        %v2140 = vpack.c.b16 %v1768, %v1766
        %v2141 = vpack.c.b16 %v1769, %v1767
        %v2142 = vpack.c.b16 %v1772, %v1770
        %v2143 = vpack.c.b16 %v1773, %v1771
        %v2144 = vpack.c.b16 %v1776, %v1774
        %v2145 = vpack.c.b16 %v1777, %v1775
        %v2146 = vpack.c.b16 %v1780, %v1778
        %v2147 = vpack.c.b16 %v1781, %v1779
        %v2148 = vpack.c.b16 %v1784, %v1782
        %v2149 = vpack.c.b16 %v1785, %v1783
        %v2150 = vpack.c.b16 %v1788, %v1786
        %v2151 = vpack.c.b16 %v1789, %v1787
        %v2152 = vpack.c.b16 %v1792, %v1790
        %v2153 = vpack.c.b16 %v1793, %v1791
        %v2154 = vpack.c.b16 %v1796, %v1794
        %v2155 = vpack.c.b16 %v1797, %v1795
        %v2156 = vpack.c.b16 %v1800, %v1798
        %v2157 = vpack.c.b16 %v1801, %v1799
        %v2158 = vpack.c.b16 %v1804, %v1802
        %v2159 = vpack.c.b16 %v1805, %v1803
        %v2160 = vpack.c.b16 %v1808, %v1806
        %v2161 = vpack.c.b16 %v1809, %v1807
        %v2162 = vpack.c.b16 %v1812, %v1810
        %v2163 = vpack.c.b16 %v1813, %v1811
        %v2164 = vpack.c.b16 %v1816, %v1814
        %v2165 = vpack.c.b16 %v1817, %v1815
        %v2166 = vpack.c.b16 %v1820, %v1818
        %v2167 = vpack.c.b16 %v1821, %v1819
        %v2168 = vpack.c.b16 %v1824, %v1822
        %v2169 = vpack.c.b16 %v1825, %v1823
        %v2170 = vpack.c.b16 %v1828, %v1826
        %v2171 = vpack.c.b16 %v1829, %v1827
        %v2172 = vpack.c.b16 %v1832, %v1830
        %v2173 = vpack.c.b16 %v1833, %v1831
        %v2174 = vpack.c.b16 %v1836, %v1834
        %v2175 = vpack.c.b16 %v1837, %v1835
        %v2176 = vpack.c.b16 %v1840, %v1838
        %v2177 = vpack.c.b16 %v1841, %v1839
        %v2178 = vpack.c.b16 %v1844, %v1842
        %v2179 = vpack.c.b16 %v1845, %v1843
        %v2180 = vpack.c.b16 %v1848, %v1846
        %v2181 = vpack.c.b16 %v1849, %v1847
        %v2182 = vpack.c.b16 %v1852, %v1850
        %v2183 = vpack.c.b16 %v1853, %v1851
        %v2184 = vpack.c.b16 %v1856, %v1854
        %v2185 = vpack.c.b16 %v1857, %v1855
        %v2186 = vpack.c.b16 %v1860, %v1858
        %v2187 = vpack.c.b16 %v1861, %v1859
        %v2188 = vpack.c.b16 %v1864, %v1862
        %v2189 = vpack.c.b16 %v1865, %v1863
        %v2190 = vpack.c.b16 %v1868, %v1866
        %v2191 = vpack.c.b16 %v1869, %v1867
        %v2192 = vpack.c.b16 %v1872, %v1870
        %v2193 = vpack.c.b16 %v1873, %v1871
        %v2194 = vpack.c.b16 %v1876, %v1874
        %v2195 = vpack.c.b16 %v1877, %v1875
        %v2196 = vpack.c.b16 %v1880, %v1878
        %v2197 = vpack.c.b16 %v1881, %v1879
        %v2198 = vpack.c.b16 %v1884, %v1882
        %v2199 = vpack.c.b16 %v1885, %v1883
        %v2200 = vpack.c.b16 %v1888, %v1886
        %v2201 = vpack.c.b16 %v1889, %v1887
        %v2202 = vpack.c.b16 %v1892, %v1890
        %v2203 = vpack.c.b16 %v1893, %v1891
        %v2204 = vpack.c.b16 %v1896, %v1894
        %v2205 = vpack.c.b16 %v1897, %v1895
        %v2206 = vpack.c.b16 %v1900, %v1898
        %v2207 = vpack.c.b16 %v1901, %v1899
        %v2208 = vpack.c.b16 %v1904, %v1902
        %v2209 = vpack.c.b16 %v1905, %v1903
        %v2210 = vpack.c.b16 %v1908, %v1906
        %v2211 = vpack.c.b16 %v1909, %v1907
        %v2212 = vpack.c.b16 %v1912, %v1910
        %v2213 = vpack.c.b16 %v1913, %v1911
        %v2214 = vpack.c.b16 %v1916, %v1914
        %v2215 = vpack.c.b16 %v1917, %v1915
        %v2216 = vpack.c.b16 %v1920, %v1918
        %v2217 = vpack.c.b16 %v1921, %v1919
        %v2218 = vpack.c.b16 %v1924, %v1922
        %v2219 = vpack.c.b16 %v1925, %v1923
        %v2220 = vpack.c.b16 %v1928, %v1926
        %v2221 = vpack.c.b16 %v1929, %v1927
        %v2222 = vpack.c.b16 %v1932, %v1930
        %v2223 = vpack.c.b16 %v1933, %v1931
        %v2224 = vpack.c.b16 %v1936, %v1934
        %v2225 = vpack.c.b16 %v1937, %v1935
        %v2226 = vpack.c.b16 %v1940, %v1938
        %v2227 = vpack.c.b16 %v1941, %v1939
        %v2228 = vpack.c.b16 %v1944, %v1942
        %v2229 = vpack.c.b16 %v1945, %v1943
        %v2230 = vpack.c.b16 %v1948, %v1946
        %v2231 = vpack.c.b16 %v1949, %v1947
        %v2232 = vpack.c.b16 %v1952, %v1950
        %v2233 = vpack.c.b16 %v1953, %v1951
        %v2234 = vpack.c.b16 %v1956, %v1954
        %v2235 = vpack.c.b16 %v1957, %v1955
        %v2236 = vpack.c.b16 %v1960, %v1958
        %v2237 = vpack.c.b16 %v1961, %v1959
        %v2238 = vpack.c.b16 %v1964, %v1962
        %v2239 = vpack.c.b16 %v1965, %v1963
        %v2240 = vpack.c.b16 %v1968, %v1966
        %v2241 = vpack.c.b16 %v1969, %v1967
        %v2242 = vpack.c.b16 %v1972, %v1970
        %v2243 = vpack.c.b16 %v1973, %v1971
        %v2244 = vpack.c.b16 %v1976, %v1974
        %v2245 = vpack.c.b16 %v1977, %v1975
        %v2246 = vpack.c.b16 %v1980, %v1978
        %v2247 = vpack.c.b16 %v1981, %v1979
        %v2248 = vpack.c.b16 %v1984, %v1982
        %v2249 = vpack.c.b16 %v1985, %v1983
        %v2250 = vpack.c.b16 %v1988, %v1986
        %v2251 = vpack.c.b16 %v1989, %v1987
        %v2252 = vpack.c.b16 %v1992, %v1990
        %v2253 = vpack.c.b16 %v1993, %v1991
        %v2254 = vpack.c.b16 %v1996, %v1994
        %v2255 = vpack.c.b16 %v1997, %v1995
        %v2256 = vpack.c.b16 %v2000, %v1998
        %v2257 = vpack.c.b16 %v2001, %v1999
        %2514 = vmatprep.subr.bf16.mxu0 %v2003
        %2515 = vmatpush1.bf16.msra.mxu0 %v2002
        %2516 = vmatprep.subr.bf16.mxu0 %v2005
        %2517 = vmatpush1.bf16.msra.mxu0 %v2004
        %2518 = vmatprep.subr.bf16.mxu0 %v2007
        %2519 = vmatpush1.bf16.msra.mxu0 %v2006
        %2520 = vmatprep.subr.bf16.mxu0 %v2009
        %2521 = vmatpush1.bf16.msra.mxu0 %v2008
        %2522 = vmatprep.subr.bf16.mxu0 %v2011
        %2523 = vmatpush1.bf16.msra.mxu0 %v2010
        %2524 = vmatprep.subr.bf16.mxu0 %v2013
        %2525 = vmatpush1.bf16.msra.mxu0 %v2012
        %2526 = vmatprep.subr.bf16.mxu0 %v2015
        %2527 = vmatpush1.bf16.msra.mxu0 %v2014
        %2528 = vmatprep.subr.bf16.mxu0 %v2017
        %2529 = vmatpush1.bf16.msra.mxu0 %v2016
        %2530 = vmatprep.subr.bf16.mxu0 %v2019
        %2531 = vmatpush1.bf16.msra.mxu0 %v2018
        %2532 = vmatprep.subr.bf16.mxu0 %v2021
        %2533 = vmatpush1.bf16.msra.mxu0 %v2020
        %2534 = vmatprep.subr.bf16.mxu0 %v2023
        %2535 = vmatpush1.bf16.msra.mxu0 %v2022
        %2536 = vmatprep.subr.bf16.mxu0 %v2025
        %2537 = vmatpush1.bf16.msra.mxu0 %v2024
        %2538 = vmatprep.subr.bf16.mxu0 %v2027
        %2539 = vmatpush1.bf16.msra.mxu0 %v2026
        %2540 = vmatprep.subr.bf16.mxu0 %v2029
        %2541 = vmatpush1.bf16.msra.mxu0 %v2028
        %2542 = vmatprep.subr.bf16.mxu0 %v2031
        %2543 = vmatpush1.bf16.msra.mxu0 %v2030
        %2544 = vmatprep.subr.bf16.mxu0 %v2033
        %2545 = vmatpush1.bf16.msra.mxu0 %v2032
        %2546 = vmatprep.mubr.bf16.mxu0 %v935
        %2547 = vmatmul.mubr.bf16.gmra.mrb[0].mxu0 %v934
        %v2548 = vpop.f32.mrb[0].mxu0
        %v2549 = vadd.f32 %v1227, %v2548
        %v2550 = vpop.f32.mrb[0].mxu0
        %v2551 = vadd.f32 %v1231, %v2550
        %v2552 = vpop.f32.mrb[0].mxu0
        %v2553 = vadd.f32 %v1227, %v2552
        %v2554 = vpop.f32.mrb[0].mxu0
        %v2555 = vadd.f32 %v1231, %v2554
        %2556 = vmatprep.mubr.bf16.mxu0 %v951
        %2557 = vmatmul.mubr.bf16.gmra.mrb[0].mxu0 %v950
        %v2558 = vpop.f32.mrb[0].mxu0
        %v2559 = vadd.f32 %v1227, %v2558
        %v2560 = vpop.f32.mrb[0].mxu0
        %v2561 = vadd.f32 %v1231, %v2560
        %v2562 = vpop.f32.mrb[0].mxu0
        %v2563 = vadd.f32 %v1227, %v2562
        %v2564 = vpop.f32.mrb[0].mxu0
        %v2565 = vadd.f32 %v1231, %v2564
        %2566 = vdwg.mxu0
        %2567 = vmatprep.subr.bf16.mxu0 %v2035
        %2568 = vmatpush1.bf16.msra.mxu0 %v2034
        %2569 = vmatprep.subr.bf16.mxu0 %v2037
        %2570 = vmatpush1.bf16.msra.mxu0 %v2036
        %2571 = vmatprep.subr.bf16.mxu0 %v2039
        %2572 = vmatpush1.bf16.msra.mxu0 %v2038
        %2573 = vmatprep.subr.bf16.mxu0 %v2041
        %2574 = vmatpush1.bf16.msra.mxu0 %v2040
        %2575 = vmatprep.subr.bf16.mxu0 %v2043
        %2576 = vmatpush1.bf16.msra.mxu0 %v2042
        %2577 = vmatprep.subr.bf16.mxu0 %v2045
        %2578 = vmatpush1.bf16.msra.mxu0 %v2044
        %2579 = vmatprep.subr.bf16.mxu0 %v2047
        %2580 = vmatpush1.bf16.msra.mxu0 %v2046
        %2581 = vmatprep.subr.bf16.mxu0 %v2049
        %2582 = vmatpush1.bf16.msra.mxu0 %v2048
        %2583 = vmatprep.subr.bf16.mxu0 %v2051
        %2584 = vmatpush1.bf16.msra.mxu0 %v2050
        %2585 = vmatprep.subr.bf16.mxu0 %v2053
        %2586 = vmatpush1.bf16.msra.mxu0 %v2052
        %2587 = vmatprep.subr.bf16.mxu0 %v2055
        %2588 = vmatpush1.bf16.msra.mxu0 %v2054
        %2589 = vmatprep.subr.bf16.mxu0 %v2057
        %2590 = vmatpush1.bf16.msra.mxu0 %v2056
        %2591 = vmatprep.subr.bf16.mxu0 %v2059
        %2592 = vmatpush1.bf16.msra.mxu0 %v2058
        %2593 = vmatprep.subr.bf16.mxu0 %v2061
        %2594 = vmatpush1.bf16.msra.mxu0 %v2060
        %2595 = vmatprep.subr.bf16.mxu0 %v2063
        %2596 = vmatpush1.bf16.msra.mxu0 %v2062
        %2597 = vmatprep.subr.bf16.mxu0 %v2065
        %2598 = vmatpush1.bf16.msra.mxu0 %v2064
        %2599 = vmatprep.mubr.bf16.mxu0 %v937
        %2600 = vmatmul.mubr.bf16.gmra.mrb[0].mxu0 %v936
        %v2601 = vpop.f32.mrb[0].mxu0
        %v2602 = vadd.f32 %v2549, %v2601
        %v2603 = vpop.f32.mrb[0].mxu0
        %v2604 = vadd.f32 %v2551, %v2603
        %v2605 = vpop.f32.mrb[0].mxu0
        %v2606 = vadd.f32 %v2553, %v2605
        %v2607 = vpop.f32.mrb[0].mxu0
        %v2608 = vadd.f32 %v2555, %v2607
        %2609 = vmatprep.mubr.bf16.mxu0 %v953
        %2610 = vmatmul.mubr.bf16.gmra.mrb[0].mxu0 %v952
        %v2611 = vpop.f32.mrb[0].mxu0
        %v2612 = vadd.f32 %v2559, %v2611
        %v2613 = vpop.f32.mrb[0].mxu0
        %v2614 = vadd.f32 %v2561, %v2613
        %v2615 = vpop.f32.mrb[0].mxu0
        %v2616 = vadd.f32 %v2563, %v2615
        %v2617 = vpop.f32.mrb[0].mxu0
        %v2618 = vadd.f32 %v2565, %v2617
        %2619 = vdwg.mxu0
        %2620 = vmatprep.subr.bf16.mxu0 %v2067
        %2621 = vmatpush1.bf16.msra.mxu0 %v2066
        %2622 = vmatprep.subr.bf16.mxu0 %v2069
        %2623 = vmatpush1.bf16.msra.mxu0 %v2068
        %2624 = vmatprep.subr.bf16.mxu0 %v2071
        %2625 = vmatpush1.bf16.msra.mxu0 %v2070
        %2626 = vmatprep.subr.bf16.mxu0 %v2073
        %2627 = vmatpush1.bf16.msra.mxu0 %v2072
        %2628 = vmatprep.subr.bf16.mxu0 %v2075
        %2629 = vmatpush1.bf16.msra.mxu0 %v2074
        %2630 = vmatprep.subr.bf16.mxu0 %v2077
        %2631 = vmatpush1.bf16.msra.mxu0 %v2076
        %2632 = vmatprep.subr.bf16.mxu0 %v2079
        %2633 = vmatpush1.bf16.msra.mxu0 %v2078
        %2634 = vmatprep.subr.bf16.mxu0 %v2081
        %2635 = vmatpush1.bf16.msra.mxu0 %v2080
        %2636 = vmatprep.subr.bf16.mxu0 %v2083
        %2637 = vmatpush1.bf16.msra.mxu0 %v2082
        %2638 = vmatprep.subr.bf16.mxu0 %v2085
        %2639 = vmatpush1.bf16.msra.mxu0 %v2084
        %2640 = vmatprep.subr.bf16.mxu0 %v2087
        %2641 = vmatpush1.bf16.msra.mxu0 %v2086
        %2642 = vmatprep.subr.bf16.mxu0 %v2089
        %2643 = vmatpush1.bf16.msra.mxu0 %v2088
        %2644 = vmatprep.subr.bf16.mxu0 %v2091
        %2645 = vmatpush1.bf16.msra.mxu0 %v2090
        %2646 = vmatprep.subr.bf16.mxu0 %v2093
        %2647 = vmatpush1.bf16.msra.mxu0 %v2092
        %2648 = vmatprep.subr.bf16.mxu0 %v2095
        %2649 = vmatpush1.bf16.msra.mxu0 %v2094
        %2650 = vmatprep.subr.bf16.mxu0 %v2097
        %2651 = vmatpush1.bf16.msra.mxu0 %v2096
        %2652 = vmatprep.mubr.bf16.mxu0 %v939
        %2653 = vmatmul.mubr.bf16.gmra.mrb[0].mxu0 %v938
        %v2654 = vpop.f32.mrb[0].mxu0
        %v2655 = vadd.f32 %v2602, %v2654
        %v2656 = vpop.f32.mrb[0].mxu0
        %v2657 = vadd.f32 %v2604, %v2656
        %v2658 = vpop.f32.mrb[0].mxu0
        %v2659 = vadd.f32 %v2606, %v2658
        %v2660 = vpop.f32.mrb[0].mxu0
        %v2661 = vadd.f32 %v2608, %v2660
        %2662 = vmatprep.mubr.bf16.mxu0 %v955
        %2663 = vmatmul.mubr.bf16.gmra.mrb[0].mxu0 %v954
        %v2664 = vpop.f32.mrb[0].mxu0
        %v2665 = vadd.f32 %v2612, %v2664
        %v2666 = vpop.f32.mrb[0].mxu0
        %v2667 = vadd.f32 %v2614, %v2666
        %v2668 = vpop.f32.mrb[0].mxu0
        %v2669 = vadd.f32 %v2616, %v2668
        %v2670 = vpop.f32.mrb[0].mxu0
        %v2671 = vadd.f32 %v2618, %v2670
        %2672 = vdwg.mxu0
        %2673 = vmatprep.subr.bf16.mxu0 %v2099
        %2674 = vmatpush1.bf16.msra.mxu0 %v2098
        %2675 = vmatprep.subr.bf16.mxu0 %v2101
        %2676 = vmatpush1.bf16.msra.mxu0 %v2100
        %2677 = vmatprep.subr.bf16.mxu0 %v2103
        %2678 = vmatpush1.bf16.msra.mxu0 %v2102
        %2679 = vmatprep.subr.bf16.mxu0 %v2105
        %2680 = vmatpush1.bf16.msra.mxu0 %v2104
        %2681 = vmatprep.subr.bf16.mxu0 %v2107
        %2682 = vmatpush1.bf16.msra.mxu0 %v2106
        %2683 = vmatprep.subr.bf16.mxu0 %v2109
        %2684 = vmatpush1.bf16.msra.mxu0 %v2108
        %2685 = vmatprep.subr.bf16.mxu0 %v2111
        %2686 = vmatpush1.bf16.msra.mxu0 %v2110
        %2687 = vmatprep.subr.bf16.mxu0 %v2113
        %2688 = vmatpush1.bf16.msra.mxu0 %v2112
        %2689 = vmatprep.subr.bf16.mxu0 %v2115
        %2690 = vmatpush1.bf16.msra.mxu0 %v2114
        %2691 = vmatprep.subr.bf16.mxu0 %v2117
        %2692 = vmatpush1.bf16.msra.mxu0 %v2116
        %2693 = vmatprep.subr.bf16.mxu0 %v2119
        %2694 = vmatpush1.bf16.msra.mxu0 %v2118
        %2695 = vmatprep.subr.bf16.mxu0 %v2121
        %2696 = vmatpush1.bf16.msra.mxu0 %v2120
        %2697 = vmatprep.subr.bf16.mxu0 %v2123
        %2698 = vmatpush1.bf16.msra.mxu0 %v2122
        %2699 = vmatprep.subr.bf16.mxu0 %v2125
        %2700 = vmatpush1.bf16.msra.mxu0 %v2124
        %2701 = vmatprep.subr.bf16.mxu0 %v2127
        %2702 = vmatpush1.bf16.msra.mxu0 %v2126
        %2703 = vmatprep.subr.bf16.mxu0 %v2129
        %2704 = vmatpush1.bf16.msra.mxu0 %v2128
        %2705 = vmatprep.mubr.bf16.mxu0 %v941
        %2706 = vmatmul.mubr.bf16.gmra.mrb[0].mxu0 %v940
        %v2707 = vpop.f32.mrb[0].mxu0
        %v2708 = vadd.f32 %v2655, %v2707
        %v2709 = vpop.f32.mrb[0].mxu0
        %v2710 = vadd.f32 %v2657, %v2709
        %v2711 = vpop.f32.mrb[0].mxu0
        %v2712 = vadd.f32 %v2659, %v2711
        %v2713 = vpop.f32.mrb[0].mxu0
        %v2714 = vadd.f32 %v2661, %v2713
        %2715 = vmatprep.mubr.bf16.mxu0 %v957
        %2716 = vmatmul.mubr.bf16.gmra.mrb[0].mxu0 %v956
        %v2717 = vpop.f32.mrb[0].mxu0
        %v2718 = vadd.f32 %v2665, %v2717
        %v2719 = vpop.f32.mrb[0].mxu0
        %v2720 = vadd.f32 %v2667, %v2719
        %v2721 = vpop.f32.mrb[0].mxu0
        %v2722 = vadd.f32 %v2669, %v2721
        %v2723 = vpop.f32.mrb[0].mxu0
        %v2724 = vadd.f32 %v2671, %v2723
        %2725 = vdwg.mxu0
        %2726 = vmatprep.subr.bf16.mxu0 %v2131
        %2727 = vmatpush1.bf16.msra.mxu0 %v2130
        %2728 = vmatprep.subr.bf16.mxu0 %v2133
        %2729 = vmatpush1.bf16.msra.mxu0 %v2132
        %2730 = vmatprep.subr.bf16.mxu0 %v2135
        %2731 = vmatpush1.bf16.msra.mxu0 %v2134
        %2732 = vmatprep.subr.bf16.mxu0 %v2137
        %2733 = vmatpush1.bf16.msra.mxu0 %v2136
        %2734 = vmatprep.subr.bf16.mxu0 %v2139
        %2735 = vmatpush1.bf16.msra.mxu0 %v2138
        %2736 = vmatprep.subr.bf16.mxu0 %v2141
        %2737 = vmatpush1.bf16.msra.mxu0 %v2140
        %2738 = vmatprep.subr.bf16.mxu0 %v2143
        %2739 = vmatpush1.bf16.msra.mxu0 %v2142
        %2740 = vmatprep.subr.bf16.mxu0 %v2145
        %2741 = vmatpush1.bf16.msra.mxu0 %v2144
        %2742 = vmatprep.subr.bf16.mxu0 %v2147
        %2743 = vmatpush1.bf16.msra.mxu0 %v2146
        %2744 = vmatprep.subr.bf16.mxu0 %v2149
        %2745 = vmatpush1.bf16.msra.mxu0 %v2148
        %2746 = vmatprep.subr.bf16.mxu0 %v2151
        %2747 = vmatpush1.bf16.msra.mxu0 %v2150
        %2748 = vmatprep.subr.bf16.mxu0 %v2153
        %2749 = vmatpush1.bf16.msra.mxu0 %v2152
        %2750 = vmatprep.subr.bf16.mxu0 %v2155
        %2751 = vmatpush1.bf16.msra.mxu0 %v2154
        %2752 = vmatprep.subr.bf16.mxu0 %v2157
        %2753 = vmatpush1.bf16.msra.mxu0 %v2156
        %2754 = vmatprep.subr.bf16.mxu0 %v2159
        %2755 = vmatpush1.bf16.msra.mxu0 %v2158
        %2756 = vmatprep.subr.bf16.mxu0 %v2161
        %2757 = vmatpush1.bf16.msra.mxu0 %v2160
        %2758 = vmatprep.mubr.bf16.mxu0 %v943
        %2759 = vmatmul.mubr.bf16.gmra.mrb[0].mxu0 %v942
        %v2760 = vpop.f32.mrb[0].mxu0
        %v2761 = vadd.f32 %v2708, %v2760
        %v2762 = vpop.f32.mrb[0].mxu0
        %v2763 = vadd.f32 %v2710, %v2762
        %v2764 = vpop.f32.mrb[0].mxu0
        %v2765 = vadd.f32 %v2712, %v2764
        %v2766 = vpop.f32.mrb[0].mxu0
        %v2767 = vadd.f32 %v2714, %v2766
        %2768 = vmatprep.mubr.bf16.mxu0 %v959
        %2769 = vmatmul.mubr.bf16.gmra.mrb[0].mxu0 %v958
        %v2770 = vpop.f32.mrb[0].mxu0
        %v2771 = vadd.f32 %v2718, %v2770
        %v2772 = vpop.f32.mrb[0].mxu0
        %v2773 = vadd.f32 %v2720, %v2772
        %v2774 = vpop.f32.mrb[0].mxu0
        %v2775 = vadd.f32 %v2722, %v2774
        %v2776 = vpop.f32.mrb[0].mxu0
        %v2777 = vadd.f32 %v2724, %v2776
        %2778 = vdwg.mxu0
        %2779 = vmatprep.subr.bf16.mxu0 %v2163
        %2780 = vmatpush1.bf16.msra.mxu0 %v2162
        %2781 = vmatprep.subr.bf16.mxu0 %v2165
        %2782 = vmatpush1.bf16.msra.mxu0 %v2164
        %2783 = vmatprep.subr.bf16.mxu0 %v2167
        %2784 = vmatpush1.bf16.msra.mxu0 %v2166
        %2785 = vmatprep.subr.bf16.mxu0 %v2169
        %2786 = vmatpush1.bf16.msra.mxu0 %v2168
        %2787 = vmatprep.subr.bf16.mxu0 %v2171
        %2788 = vmatpush1.bf16.msra.mxu0 %v2170
        %2789 = vmatprep.subr.bf16.mxu0 %v2173
        %2790 = vmatpush1.bf16.msra.mxu0 %v2172
        %2791 = vmatprep.subr.bf16.mxu0 %v2175
        %2792 = vmatpush1.bf16.msra.mxu0 %v2174
        %2793 = vmatprep.subr.bf16.mxu0 %v2177
        %2794 = vmatpush1.bf16.msra.mxu0 %v2176
        %2795 = vmatprep.subr.bf16.mxu0 %v2179
        %2796 = vmatpush1.bf16.msra.mxu0 %v2178
        %2797 = vmatprep.subr.bf16.mxu0 %v2181
        %2798 = vmatpush1.bf16.msra.mxu0 %v2180
        %2799 = vmatprep.subr.bf16.mxu0 %v2183
        %2800 = vmatpush1.bf16.msra.mxu0 %v2182
        %2801 = vmatprep.subr.bf16.mxu0 %v2185
        %2802 = vmatpush1.bf16.msra.mxu0 %v2184
        %2803 = vmatprep.subr.bf16.mxu0 %v2187
        %2804 = vmatpush1.bf16.msra.mxu0 %v2186
        %2805 = vmatprep.subr.bf16.mxu0 %v2189
        %2806 = vmatpush1.bf16.msra.mxu0 %v2188
        %2807 = vmatprep.subr.bf16.mxu0 %v2191
        %2808 = vmatpush1.bf16.msra.mxu0 %v2190
        %2809 = vmatprep.subr.bf16.mxu0 %v2193
        %2810 = vmatpush1.bf16.msra.mxu0 %v2192
        %2811 = vmatprep.mubr.bf16.mxu0 %v945
        %2812 = vmatmul.mubr.bf16.gmra.mrb[0].mxu0 %v944
        %v2813 = vpop.f32.mrb[0].mxu0
        %v2814 = vadd.f32 %v2761, %v2813
        %v2815 = vpop.f32.mrb[0].mxu0
        %v2816 = vadd.f32 %v2763, %v2815
        %v2817 = vpop.f32.mrb[0].mxu0
        %v2818 = vadd.f32 %v2765, %v2817
        %v2819 = vpop.f32.mrb[0].mxu0
        %v2820 = vadd.f32 %v2767, %v2819
        %2821 = vmatprep.mubr.bf16.mxu0 %v961
        %2822 = vmatmul.mubr.bf16.gmra.mrb[0].mxu0 %v960
        %v2823 = vpop.f32.mrb[0].mxu0
        %v2824 = vadd.f32 %v2771, %v2823
        %v2825 = vpop.f32.mrb[0].mxu0
        %v2826 = vadd.f32 %v2773, %v2825
        %v2827 = vpop.f32.mrb[0].mxu0
        %v2828 = vadd.f32 %v2775, %v2827
        %v2829 = vpop.f32.mrb[0].mxu0
        %v2830 = vadd.f32 %v2777, %v2829
        %2831 = vdwg.mxu0
        %2832 = vmatprep.subr.bf16.mxu0 %v2195
        %2833 = vmatpush1.bf16.msra.mxu0 %v2194
        %2834 = vmatprep.subr.bf16.mxu0 %v2197
        %2835 = vmatpush1.bf16.msra.mxu0 %v2196
        %2836 = vmatprep.subr.bf16.mxu0 %v2199
        %2837 = vmatpush1.bf16.msra.mxu0 %v2198
        %2838 = vmatprep.subr.bf16.mxu0 %v2201
        %2839 = vmatpush1.bf16.msra.mxu0 %v2200
        %2840 = vmatprep.subr.bf16.mxu0 %v2203
        %2841 = vmatpush1.bf16.msra.mxu0 %v2202
        %2842 = vmatprep.subr.bf16.mxu0 %v2205
        %2843 = vmatpush1.bf16.msra.mxu0 %v2204
        %2844 = vmatprep.subr.bf16.mxu0 %v2207
        %2845 = vmatpush1.bf16.msra.mxu0 %v2206
        %2846 = vmatprep.subr.bf16.mxu0 %v2209
        %2847 = vmatpush1.bf16.msra.mxu0 %v2208
        %2848 = vmatprep.subr.bf16.mxu0 %v2211
        %2849 = vmatpush1.bf16.msra.mxu0 %v2210
        %2850 = vmatprep.subr.bf16.mxu0 %v2213
        %2851 = vmatpush1.bf16.msra.mxu0 %v2212
        %2852 = vmatprep.subr.bf16.mxu0 %v2215
        %2853 = vmatpush1.bf16.msra.mxu0 %v2214
        %2854 = vmatprep.subr.bf16.mxu0 %v2217
        %2855 = vmatpush1.bf16.msra.mxu0 %v2216
        %2856 = vmatprep.subr.bf16.mxu0 %v2219
        %2857 = vmatpush1.bf16.msra.mxu0 %v2218
        %2858 = vmatprep.subr.bf16.mxu0 %v2221
        %2859 = vmatpush1.bf16.msra.mxu0 %v2220
        %2860 = vmatprep.subr.bf16.mxu0 %v2223
        %2861 = vmatpush1.bf16.msra.mxu0 %v2222
        %2862 = vmatprep.subr.bf16.mxu0 %v2225
        %2863 = vmatpush1.bf16.msra.mxu0 %v2224
        %2864 = vmatprep.mubr.bf16.mxu0 %v947
        %2865 = vmatmul.mubr.bf16.gmra.mrb[0].mxu0 %v946
        %v2866 = vpop.f32.mrb[0].mxu0
        %v2867 = vadd.f32 %v2814, %v2866
        %v2868 = vpop.f32.mrb[0].mxu0
        %v2869 = vadd.f32 %v2816, %v2868
        %v2870 = vpop.f32.mrb[0].mxu0
        %v2871 = vadd.f32 %v2818, %v2870
        %v2872 = vpop.f32.mrb[0].mxu0
        %v2873 = vadd.f32 %v2820, %v2872
        %2874 = vmatprep.mubr.bf16.mxu0 %v963
        %2875 = vmatmul.mubr.bf16.gmra.mrb[0].mxu0 %v962
        %v2876 = vpop.f32.mrb[0].mxu0
        %v2877 = vadd.f32 %v2824, %v2876
        %v2878 = vpop.f32.mrb[0].mxu0
        %v2879 = vadd.f32 %v2826, %v2878
        %v2880 = vpop.f32.mrb[0].mxu0
        %v2881 = vadd.f32 %v2828, %v2880
        %v2882 = vpop.f32.mrb[0].mxu0
        %v2883 = vadd.f32 %v2830, %v2882
        %2884 = vdwg.mxu0
        %2885 = vmatprep.subr.bf16.mxu0 %v2227
        %2886 = vmatpush1.bf16.msra.mxu0 %v2226
        %2887 = vmatprep.subr.bf16.mxu0 %v2229
        %2888 = vmatpush1.bf16.msra.mxu0 %v2228
        %2889 = vmatprep.subr.bf16.mxu0 %v2231
        %2890 = vmatpush1.bf16.msra.mxu0 %v2230
        %2891 = vmatprep.subr.bf16.mxu0 %v2233
        %2892 = vmatpush1.bf16.msra.mxu0 %v2232
        %2893 = vmatprep.subr.bf16.mxu0 %v2235
        %2894 = vmatpush1.bf16.msra.mxu0 %v2234
        %2895 = vmatprep.subr.bf16.mxu0 %v2237
        %2896 = vmatpush1.bf16.msra.mxu0 %v2236
        %2897 = vmatprep.subr.bf16.mxu0 %v2239
        %2898 = vmatpush1.bf16.msra.mxu0 %v2238
        %2899 = vmatprep.subr.bf16.mxu0 %v2241
        %2900 = vmatpush1.bf16.msra.mxu0 %v2240
        %2901 = vmatprep.subr.bf16.mxu0 %v2243
        %2902 = vmatpush1.bf16.msra.mxu0 %v2242
        %2903 = vmatprep.subr.bf16.mxu0 %v2245
        %2904 = vmatpush1.bf16.msra.mxu0 %v2244
        %2905 = vmatprep.subr.bf16.mxu0 %v2247
        %2906 = vmatpush1.bf16.msra.mxu0 %v2246
        %2907 = vmatprep.subr.bf16.mxu0 %v2249
        %2908 = vmatpush1.bf16.msra.mxu0 %v2248
        %2909 = vmatprep.subr.bf16.mxu0 %v2251
        %2910 = vmatpush1.bf16.msra.mxu0 %v2250
        %2911 = vmatprep.subr.bf16.mxu0 %v2253
        %2912 = vmatpush1.bf16.msra.mxu0 %v2252
        %2913 = vmatprep.subr.bf16.mxu0 %v2255
        %2914 = vmatpush1.bf16.msra.mxu0 %v2254
        %2915 = vmatprep.subr.bf16.mxu0 %v2257
        %2916 = vmatpush1.bf16.msra.mxu0 %v2256
        %2917 = vmatprep.mubr.bf16.mxu0 %v949
        %2918 = vmatmul.mubr.bf16.gmra.mrb[0].mxu0 %v948
        %v2919 = vpop.f32.mrb[0].mxu0
        %v2920 = vadd.f32 %v2867, %v2919
        %v2921 = vpop.f32.mrb[0].mxu0
        %v2922 = vadd.f32 %v2869, %v2921
        %v2923 = vpop.f32.mrb[0].mxu0
        %v2924 = vadd.f32 %v2871, %v2923
        %v2925 = vpop.f32.mrb[0].mxu0
        %v2926 = vadd.f32 %v2873, %v2925
        %2927 = vmatprep.mubr.bf16.mxu0 %v965
        %2928 = vmatmul.mubr.bf16.gmra.mrb[0].mxu0 %v964
        %v2929 = vpop.f32.mrb[0].mxu0
        %v2930 = vadd.f32 %v2877, %v2929
        %v2931 = vpop.f32.mrb[0].mxu0
        %v2932 = vadd.f32 %v2879, %v2931
        %v2933 = vpop.f32.mrb[0].mxu0
        %v2934 = vadd.f32 %v2881, %v2933
        %v2935 = vpop.f32.mrb[0].mxu0
        %v2936 = vadd.f32 %v2883, %v2935
        %2937 = vdwg.mxu0
        %v2938 = vmax.f32 %v2920, 0.0
        %v2939 = vmax.f32 %v2922, 0.0
        %v2940 = vmax.f32 %v2924, 0.0
        %v2941 = vmax.f32 %v2926, 0.0
        %v2942 = vmax.f32 %v2930, 0.0
        %v2943 = vmax.f32 %v2932, 0.0
        %v2944 = vmax.f32 %v2934, 0.0
        %v2945 = vmax.f32 %v2936, 0.0
        %v2946 = vpack.c.bf16 %v2940, %v2938
        %v2947 = vpack.c.bf16 %v2941, %v2939
        %v2948 = vpack.c.bf16 %v2944, %v2942
        %v2949 = vpack.c.bf16 %v2945, %v2943
        %v2950 = vld [vmem:[%s491] sm:$0xff]
        %v2951 = vld [vmem:[%s491 + $0x8] sm:$0xff]
        %v2952 = vld [vmem:[%s491 + $0x10] sm:$0xff]
        %v2953 = vld [vmem:[%s491 + $0x18] sm:$0xff]
        %v2954 = vld [vmem:[%s491 + $0x20] sm:$0xff]
        %v2955 = vld [vmem:[%s491 + $0x28] sm:$0xff]
        %v2956 = vld [vmem:[%s491 + $0x30] sm:$0xff]
        %v2957 = vld [vmem:[%s491 + $0x38] sm:$0xff]
        %v2958 = vld [vmem:[%s491 + $0x40] sm:$0xff]
        %v2959 = vld [vmem:[%s491 + $0x48] sm:$0xff]
        %v2960 = vld [vmem:[%s491 + $0x50] sm:$0xff]
        %v2961 = vld [vmem:[%s491 + $0x58] sm:$0xff]
        %v2962 = vld [vmem:[%s491 + $0x60] sm:$0xff]
        %v2963 = vld [vmem:[%s491 + $0x68] sm:$0xff]
        %v2964 = vld [vmem:[%s491 + $0x70] sm:$0xff]
        %v2965 = vld [vmem:[%s491 + $0x78] sm:$0xff]
        %v2966 = vld [vmem:[%s491 + $0x80] sm:$0xff]
        %v2967 = vld [vmem:[%s491 + $0x88] sm:$0xff]
        %v2968 = vld [vmem:[%s491 + $0x90] sm:$0xff]
        %v2969 = vld [vmem:[%s491 + $0x98] sm:$0xff]
        %v2970 = vld [vmem:[%s491 + $0xa0] sm:$0xff]
        %v2971 = vld [vmem:[%s491 + $0xa8] sm:$0xff]
        %v2972 = vld [vmem:[%s491 + $0xb0] sm:$0xff]
        %v2973 = vld [vmem:[%s491 + $0xb8] sm:$0xff]
        %v2974 = vld [vmem:[%s491 + $0xc0] sm:$0xff]
        %v2975 = vld [vmem:[%s491 + $0xc8] sm:$0xff]
        %v2976 = vld [vmem:[%s491 + $0xd0] sm:$0xff]
        %v2977 = vld [vmem:[%s491 + $0xd8] sm:$0xff]
        %v2978 = vld [vmem:[%s491 + $0xe0] sm:$0xff]
        %v2979 = vld [vmem:[%s491 + $0xe8] sm:$0xff]
        %v2980 = vld [vmem:[%s491 + $0xf0] sm:$0xff]
        %v2981 = vld [vmem:[%s491 + $0xf8] sm:$0xff]
        %v2982 = vld [vmem:[%s491 + $0x100] sm:$0xff]
        %v2983 = vld [vmem:[%s491 + $0x108] sm:$0xff]
        %v2984 = vld [vmem:[%s491 + $0x110] sm:$0xff]
        %v2985 = vld [vmem:[%s491 + $0x118] sm:$0xff]
        %v2986 = vld [vmem:[%s491 + $0x120] sm:$0xff]
        %v2987 = vld [vmem:[%s491 + $0x128] sm:$0xff]
        %v2988 = vld [vmem:[%s491 + $0x130] sm:$0xff]
        %v2989 = vld [vmem:[%s491 + $0x138] sm:$0xff]
        %v2990 = vld [vmem:[%s491 + $0x140] sm:$0xff]
        %v2991 = vld [vmem:[%s491 + $0x148] sm:$0xff]
        %v2992 = vld [vmem:[%s491 + $0x150] sm:$0xff]
        %v2993 = vld [vmem:[%s491 + $0x158] sm:$0xff]
        %v2994 = vld [vmem:[%s491 + $0x160] sm:$0xff]
        %v2995 = vld [vmem:[%s491 + $0x168] sm:$0xff]
        %v2996 = vld [vmem:[%s491 + $0x170] sm:$0xff]
        %v2997 = vld [vmem:[%s491 + $0x178] sm:$0xff]
        %v2998 = vld [vmem:[%s491 + $0x180] sm:$0xff]
        %v2999 = vld [vmem:[%s491 + $0x188] sm:$0xff]
        %v3000 = vld [vmem:[%s491 + $0x190] sm:$0xff]
        %v3001 = vld [vmem:[%s491 + $0x198] sm:$0xff]
        %v3002 = vld [vmem:[%s491 + $0x1a0] sm:$0xff]
        %v3003 = vld [vmem:[%s491 + $0x1a8] sm:$0xff]
        %v3004 = vld [vmem:[%s491 + $0x1b0] sm:$0xff]
        %v3005 = vld [vmem:[%s491 + $0x1b8] sm:$0xff]
        %v3006 = vld [vmem:[%s491 + $0x1c0] sm:$0xff]
        %v3007 = vld [vmem:[%s491 + $0x1c8] sm:$0xff]
        %v3008 = vld [vmem:[%s491 + $0x1d0] sm:$0xff]
        %v3009 = vld [vmem:[%s491 + $0x1d8] sm:$0xff]
        %v3010 = vld [vmem:[%s491 + $0x1e0] sm:$0xff]
        %v3011 = vld [vmem:[%s491 + $0x1e8] sm:$0xff]
        %v3012 = vld [vmem:[%s491 + $0x1f0] sm:$0xff]
        %v3013 = vld [vmem:[%s491 + $0x1f8] sm:$0xff]
        %v3014 = vld [vmem:[%s491 + $0x200] sm:$0xff]
        %v3015 = vld [vmem:[%s491 + $0x208] sm:$0xff]
        %v3016 = vld [vmem:[%s491 + $0x210] sm:$0xff]
        %v3017 = vld [vmem:[%s491 + $0x218] sm:$0xff]
        %v3018 = vld [vmem:[%s491 + $0x220] sm:$0xff]
        %v3019 = vld [vmem:[%s491 + $0x228] sm:$0xff]
        %v3020 = vld [vmem:[%s491 + $0x230] sm:$0xff]
        %v3021 = vld [vmem:[%s491 + $0x238] sm:$0xff]
        %v3022 = vld [vmem:[%s491 + $0x240] sm:$0xff]
        %v3023 = vld [vmem:[%s491 + $0x248] sm:$0xff]
        %v3024 = vld [vmem:[%s491 + $0x250] sm:$0xff]
        %v3025 = vld [vmem:[%s491 + $0x258] sm:$0xff]
        %v3026 = vld [vmem:[%s491 + $0x260] sm:$0xff]
        %v3027 = vld [vmem:[%s491 + $0x268] sm:$0xff]
        %v3028 = vld [vmem:[%s491 + $0x270] sm:$0xff]
        %v3029 = vld [vmem:[%s491 + $0x278] sm:$0xff]
        %v3030 = vld [vmem:[%s491 + $0x280] sm:$0xff]
        %v3031 = vld [vmem:[%s491 + $0x288] sm:$0xff]
        %v3032 = vld [vmem:[%s491 + $0x290] sm:$0xff]
        %v3033 = vld [vmem:[%s491 + $0x298] sm:$0xff]
        %v3034 = vld [vmem:[%s491 + $0x2a0] sm:$0xff]
        %v3035 = vld [vmem:[%s491 + $0x2a8] sm:$0xff]
        %v3036 = vld [vmem:[%s491 + $0x2b0] sm:$0xff]
        %v3037 = vld [vmem:[%s491 + $0x2b8] sm:$0xff]
        %v3038 = vld [vmem:[%s491 + $0x2c0] sm:$0xff]
        %v3039 = vld [vmem:[%s491 + $0x2c8] sm:$0xff]
        %v3040 = vld [vmem:[%s491 + $0x2d0] sm:$0xff]
        %v3041 = vld [vmem:[%s491 + $0x2d8] sm:$0xff]
        %v3042 = vld [vmem:[%s491 + $0x2e0] sm:$0xff]
        %v3043 = vld [vmem:[%s491 + $0x2e8] sm:$0xff]
        %v3044 = vld [vmem:[%s491 + $0x2f0] sm:$0xff]
        %v3045 = vld [vmem:[%s491 + $0x2f8] sm:$0xff]
        %v3142 = vunpack.c.l.b16 %v2950
        %v3143 = vunpack.c.h.b16 %v2950
        %v3144 = vunpack.c.l.b16 %v2951
        %v3145 = vunpack.c.h.b16 %v2951
        %v3146 = vunpack.c.l.b16 %v2952
        %v3147 = vunpack.c.h.b16 %v2952
        %v3148 = vunpack.c.l.b16 %v2953
        %v3149 = vunpack.c.h.b16 %v2953
        %v3150 = vunpack.c.l.b16 %v2954
        %v3151 = vunpack.c.h.b16 %v2954
        %v3152 = vunpack.c.l.b16 %v2955
        %v3153 = vunpack.c.h.b16 %v2955
        %v3154 = vunpack.c.l.b16 %v2956
        %v3155 = vunpack.c.h.b16 %v2956
        %v3156 = vunpack.c.l.b16 %v2957
        %v3157 = vunpack.c.h.b16 %v2957
        %v3158 = vunpack.c.l.b16 %v2958
        %v3159 = vunpack.c.h.b16 %v2958
        %v3160 = vunpack.c.l.b16 %v2959
        %v3161 = vunpack.c.h.b16 %v2959
        %v3162 = vunpack.c.l.b16 %v2960
        %v3163 = vunpack.c.h.b16 %v2960
        %v3164 = vunpack.c.l.b16 %v2961
        %v3165 = vunpack.c.h.b16 %v2961
        %v3166 = vunpack.c.l.b16 %v2962
        %v3167 = vunpack.c.h.b16 %v2962
        %v3168 = vunpack.c.l.b16 %v2963
        %v3169 = vunpack.c.h.b16 %v2963
        %v3170 = vunpack.c.l.b16 %v2964
        %v3171 = vunpack.c.h.b16 %v2964
        %v3172 = vunpack.c.l.b16 %v2965
        %v3173 = vunpack.c.h.b16 %v2965
        %v3174 = vunpack.c.l.b16 %v2966
        %v3175 = vunpack.c.h.b16 %v2966
        %v3176 = vunpack.c.l.b16 %v2967
        %v3177 = vunpack.c.h.b16 %v2967
        %v3178 = vunpack.c.l.b16 %v2968
        %v3179 = vunpack.c.h.b16 %v2968
        %v3180 = vunpack.c.l.b16 %v2969
        %v3181 = vunpack.c.h.b16 %v2969
        %v3182 = vunpack.c.l.b16 %v2970
        %v3183 = vunpack.c.h.b16 %v2970
        %v3184 = vunpack.c.l.b16 %v2971
        %v3185 = vunpack.c.h.b16 %v2971
        %v3186 = vunpack.c.l.b16 %v2972
        %v3187 = vunpack.c.h.b16 %v2972
        %v3188 = vunpack.c.l.b16 %v2973
        %v3189 = vunpack.c.h.b16 %v2973
        %v3190 = vunpack.c.l.b16 %v2974
        %v3191 = vunpack.c.h.b16 %v2974
        %v3192 = vunpack.c.l.b16 %v2975
        %v3193 = vunpack.c.h.b16 %v2975
        %v3194 = vunpack.c.l.b16 %v2976
        %v3195 = vunpack.c.h.b16 %v2976
        %v3196 = vunpack.c.l.b16 %v2977
        %v3197 = vunpack.c.h.b16 %v2977
        %v3198 = vunpack.c.l.b16 %v2978
        %v3199 = vunpack.c.h.b16 %v2978
        %v3200 = vunpack.c.l.b16 %v2979
        %v3201 = vunpack.c.h.b16 %v2979
        %v3202 = vunpack.c.l.b16 %v2980
        %v3203 = vunpack.c.h.b16 %v2980
        %v3204 = vunpack.c.l.b16 %v2981
        %v3205 = vunpack.c.h.b16 %v2981
        %v3206 = vunpack.c.l.b16 %v2982
        %v3207 = vunpack.c.h.b16 %v2982
        %v3208 = vunpack.c.l.b16 %v2983
        %v3209 = vunpack.c.h.b16 %v2983
        %v3210 = vunpack.c.l.b16 %v2984
        %v3211 = vunpack.c.h.b16 %v2984
        %v3212 = vunpack.c.l.b16 %v2985
        %v3213 = vunpack.c.h.b16 %v2985
        %v3214 = vunpack.c.l.b16 %v2986
        %v3215 = vunpack.c.h.b16 %v2986
        %v3216 = vunpack.c.l.b16 %v2987
        %v3217 = vunpack.c.h.b16 %v2987
        %v3218 = vunpack.c.l.b16 %v2988
        %v3219 = vunpack.c.h.b16 %v2988
        %v3220 = vunpack.c.l.b16 %v2989
        %v3221 = vunpack.c.h.b16 %v2989
        %v3222 = vunpack.c.l.b16 %v2990
        %v3223 = vunpack.c.h.b16 %v2990
        %v3224 = vunpack.c.l.b16 %v2991
        %v3225 = vunpack.c.h.b16 %v2991
        %v3226 = vunpack.c.l.b16 %v2992
        %v3227 = vunpack.c.h.b16 %v2992
        %v3228 = vunpack.c.l.b16 %v2993
        %v3229 = vunpack.c.h.b16 %v2993
        %v3230 = vunpack.c.l.b16 %v2994
        %v3231 = vunpack.c.h.b16 %v2994
        %v3232 = vunpack.c.l.b16 %v2995
        %v3233 = vunpack.c.h.b16 %v2995
        %v3234 = vunpack.c.l.b16 %v2996
        %v3235 = vunpack.c.h.b16 %v2996
        %v3236 = vunpack.c.l.b16 %v2997
        %v3237 = vunpack.c.h.b16 %v2997
        %v3238 = vunpack.c.l.b16 %v2998
        %v3239 = vunpack.c.h.b16 %v2998
        %v3240 = vunpack.c.l.b16 %v2999
        %v3241 = vunpack.c.h.b16 %v2999
        %v3242 = vunpack.c.l.b16 %v3000
        %v3243 = vunpack.c.h.b16 %v3000
        %v3244 = vunpack.c.l.b16 %v3001
        %v3245 = vunpack.c.h.b16 %v3001
        %v3246 = vunpack.c.l.b16 %v3002
        %v3247 = vunpack.c.h.b16 %v3002
        %v3248 = vunpack.c.l.b16 %v3003
        %v3249 = vunpack.c.h.b16 %v3003
        %v3250 = vunpack.c.l.b16 %v3004
        %v3251 = vunpack.c.h.b16 %v3004
        %v3252 = vunpack.c.l.b16 %v3005
        %v3253 = vunpack.c.h.b16 %v3005
        %v3254 = vunpack.c.l.b16 %v3006
        %v3255 = vunpack.c.h.b16 %v3006
        %v3256 = vunpack.c.l.b16 %v3007
        %v3257 = vunpack.c.h.b16 %v3007
        %v3258 = vunpack.c.l.b16 %v3008
        %v3259 = vunpack.c.h.b16 %v3008
        %v3260 = vunpack.c.l.b16 %v3009
        %v3261 = vunpack.c.h.b16 %v3009
        %v3262 = vunpack.c.l.b16 %v3010
        %v3263 = vunpack.c.h.b16 %v3010
        %v3264 = vunpack.c.l.b16 %v3011
        %v3265 = vunpack.c.h.b16 %v3011
        %v3266 = vunpack.c.l.b16 %v3012
        %v3267 = vunpack.c.h.b16 %v3012
        %v3268 = vunpack.c.l.b16 %v3013
        %v3269 = vunpack.c.h.b16 %v3013
        %v3270 = vunpack.c.l.b16 %v3014
        %v3271 = vunpack.c.h.b16 %v3014
        %v3272 = vunpack.c.l.b16 %v3015
        %v3273 = vunpack.c.h.b16 %v3015
        %v3274 = vunpack.c.l.b16 %v3016
        %v3275 = vunpack.c.h.b16 %v3016
        %v3276 = vunpack.c.l.b16 %v3017
        %v3277 = vunpack.c.h.b16 %v3017
        %v3278 = vunpack.c.l.b16 %v3018
        %v3279 = vunpack.c.h.b16 %v3018
        %v3280 = vunpack.c.l.b16 %v3019
        %v3281 = vunpack.c.h.b16 %v3019
        %v3282 = vunpack.c.l.b16 %v3020
        %v3283 = vunpack.c.h.b16 %v3020
        %v3284 = vunpack.c.l.b16 %v3021
        %v3285 = vunpack.c.h.b16 %v3021
        %v3286 = vunpack.c.l.b16 %v3022
        %v3287 = vunpack.c.h.b16 %v3022
        %v3288 = vunpack.c.l.b16 %v3023
        %v3289 = vunpack.c.h.b16 %v3023
        %v3290 = vunpack.c.l.b16 %v3024
        %v3291 = vunpack.c.h.b16 %v3024
        %v3292 = vunpack.c.l.b16 %v3025
        %v3293 = vunpack.c.h.b16 %v3025
        %v3294 = vunpack.c.l.b16 %v3026
        %v3295 = vunpack.c.h.b16 %v3026
        %v3296 = vunpack.c.l.b16 %v3027
        %v3297 = vunpack.c.h.b16 %v3027
        %v3298 = vunpack.c.l.b16 %v3028
        %v3299 = vunpack.c.h.b16 %v3028
        %v3300 = vunpack.c.l.b16 %v3029
        %v3301 = vunpack.c.h.b16 %v3029
        %v3302 = vunpack.c.l.b16 %v3030
        %v3303 = vunpack.c.h.b16 %v3030
        %v3304 = vunpack.c.l.b16 %v3031
        %v3305 = vunpack.c.h.b16 %v3031
        %v3306 = vunpack.c.l.b16 %v3032
        %v3307 = vunpack.c.h.b16 %v3032
        %v3308 = vunpack.c.l.b16 %v3033
        %v3309 = vunpack.c.h.b16 %v3033
        %v3310 = vunpack.c.l.b16 %v3034
        %v3311 = vunpack.c.h.b16 %v3034
        %v3312 = vunpack.c.l.b16 %v3035
        %v3313 = vunpack.c.h.b16 %v3035
        %v3314 = vunpack.c.l.b16 %v3036
        %v3315 = vunpack.c.h.b16 %v3036
        %v3316 = vunpack.c.l.b16 %v3037
        %v3317 = vunpack.c.h.b16 %v3037
        %v3318 = vunpack.c.l.b16 %v3038
        %v3319 = vunpack.c.h.b16 %v3038
        %v3320 = vunpack.c.l.b16 %v3039
        %v3321 = vunpack.c.h.b16 %v3039
        %v3322 = vunpack.c.l.b16 %v3040
        %v3323 = vunpack.c.h.b16 %v3040
        %v3324 = vunpack.c.l.b16 %v3041
        %v3325 = vunpack.c.h.b16 %v3041
        %v3326 = vunpack.c.l.b16 %v3042
        %v3327 = vunpack.c.h.b16 %v3042
        %v3328 = vunpack.c.l.b16 %v3043
        %v3329 = vunpack.c.h.b16 %v3043
        %v3330 = vunpack.c.l.b16 %v3044
        %v3331 = vunpack.c.h.b16 %v3044
        %v3332 = vunpack.c.l.b16 %v3045
        %v3333 = vunpack.c.h.b16 %v3045
        %v3334 = vpack.c.b16 %v3148, %v3142
        %v3335 = vpack.c.b16 %v3149, %v3143
        %v3336 = vpack.c.b16 %v3150, %v3144
        %v3337 = vpack.c.b16 %v3151, %v3145
        %v3338 = vpack.c.b16 %v3152, %v3146
        %v3339 = vpack.c.b16 %v3153, %v3147
        %v3340 = vpack.c.b16 %v3160, %v3154
        %v3341 = vpack.c.b16 %v3161, %v3155
        %v3342 = vpack.c.b16 %v3162, %v3156
        %v3343 = vpack.c.b16 %v3163, %v3157
        %v3344 = vpack.c.b16 %v3164, %v3158
        %v3345 = vpack.c.b16 %v3165, %v3159
        %v3346 = vpack.c.b16 %v3172, %v3166
        %v3347 = vpack.c.b16 %v3173, %v3167
        %v3348 = vpack.c.b16 %v3174, %v3168
        %v3349 = vpack.c.b16 %v3175, %v3169
        %v3350 = vpack.c.b16 %v3176, %v3170
        %v3351 = vpack.c.b16 %v3177, %v3171
        %v3352 = vpack.c.b16 %v3184, %v3178
        %v3353 = vpack.c.b16 %v3185, %v3179
        %v3354 = vpack.c.b16 %v3186, %v3180
        %v3355 = vpack.c.b16 %v3187, %v3181
        %v3356 = vpack.c.b16 %v3188, %v3182
        %v3357 = vpack.c.b16 %v3189, %v3183
        %v3358 = vpack.c.b16 %v3196, %v3190
        %v3359 = vpack.c.b16 %v3197, %v3191
        %v3360 = vpack.c.b16 %v3198, %v3192
        %v3361 = vpack.c.b16 %v3199, %v3193
        %v3362 = vpack.c.b16 %v3200, %v3194
        %v3363 = vpack.c.b16 %v3201, %v3195
        %v3364 = vpack.c.b16 %v3208, %v3202
        %v3365 = vpack.c.b16 %v3209, %v3203
        %v3366 = vpack.c.b16 %v3210, %v3204
        %v3367 = vpack.c.b16 %v3211, %v3205
        %v3368 = vpack.c.b16 %v3212, %v3206
        %v3369 = vpack.c.b16 %v3213, %v3207
        %v3370 = vpack.c.b16 %v3220, %v3214
        %v3371 = vpack.c.b16 %v3221, %v3215
        %v3372 = vpack.c.b16 %v3222, %v3216
        %v3373 = vpack.c.b16 %v3223, %v3217
        %v3374 = vpack.c.b16 %v3224, %v3218
        %v3375 = vpack.c.b16 %v3225, %v3219
        %v3376 = vpack.c.b16 %v3232, %v3226
        %v3377 = vpack.c.b16 %v3233, %v3227
        %v3378 = vpack.c.b16 %v3234, %v3228
        %v3379 = vpack.c.b16 %v3235, %v3229
        %v3380 = vpack.c.b16 %v3236, %v3230
        %v3381 = vpack.c.b16 %v3237, %v3231
        %v3382 = vpack.c.b16 %v3244, %v3238
        %v3383 = vpack.c.b16 %v3245, %v3239
        %v3384 = vpack.c.b16 %v3246, %v3240
        %v3385 = vpack.c.b16 %v3247, %v3241
        %v3386 = vpack.c.b16 %v3248, %v3242
        %v3387 = vpack.c.b16 %v3249, %v3243
        %v3388 = vpack.c.b16 %v3256, %v3250
        %v3389 = vpack.c.b16 %v3257, %v3251
        %v3390 = vpack.c.b16 %v3258, %v3252
        %v3391 = vpack.c.b16 %v3259, %v3253
        %v3392 = vpack.c.b16 %v3260, %v3254
        %v3393 = vpack.c.b16 %v3261, %v3255
        %v3394 = vpack.c.b16 %v3268, %v3262
        %v3395 = vpack.c.b16 %v3269, %v3263
        %v3396 = vpack.c.b16 %v3270, %v3264
        %v3397 = vpack.c.b16 %v3271, %v3265
        %v3398 = vpack.c.b16 %v3272, %v3266
        %v3399 = vpack.c.b16 %v3273, %v3267
        %v3400 = vpack.c.b16 %v3280, %v3274
        %v3401 = vpack.c.b16 %v3281, %v3275
        %v3402 = vpack.c.b16 %v3282, %v3276
        %v3403 = vpack.c.b16 %v3283, %v3277
        %v3404 = vpack.c.b16 %v3284, %v3278
        %v3405 = vpack.c.b16 %v3285, %v3279
        %v3406 = vpack.c.b16 %v3292, %v3286
        %v3407 = vpack.c.b16 %v3293, %v3287
        %v3408 = vpack.c.b16 %v3294, %v3288
        %v3409 = vpack.c.b16 %v3295, %v3289
        %v3410 = vpack.c.b16 %v3296, %v3290
        %v3411 = vpack.c.b16 %v3297, %v3291
        %v3412 = vpack.c.b16 %v3304, %v3298
        %v3413 = vpack.c.b16 %v3305, %v3299
        %v3414 = vpack.c.b16 %v3306, %v3300
        %v3415 = vpack.c.b16 %v3307, %v3301
        %v3416 = vpack.c.b16 %v3308, %v3302
        %v3417 = vpack.c.b16 %v3309, %v3303
        %v3418 = vpack.c.b16 %v3316, %v3310
        %v3419 = vpack.c.b16 %v3317, %v3311
        %v3420 = vpack.c.b16 %v3318, %v3312
        %v3421 = vpack.c.b16 %v3319, %v3313
        %v3422 = vpack.c.b16 %v3320, %v3314
        %v3423 = vpack.c.b16 %v3321, %v3315
        %v3424 = vpack.c.b16 %v3328, %v3322
        %v3425 = vpack.c.b16 %v3329, %v3323
        %v3426 = vpack.c.b16 %v3330, %v3324
        %v3427 = vpack.c.b16 %v3331, %v3325
        %v3428 = vpack.c.b16 %v3332, %v3326
        %v3429 = vpack.c.b16 %v3333, %v3327
        %3526 = vmatprep.subr.bf16.mxu0 %v3335
        %3527 = vmatpush1.bf16.msra.mxu0 %v3334
        %3528 = vmatprep.subr.bf16.mxu0 %v3341
        %3529 = vmatpush1.bf16.msra.mxu0 %v3340
        %3530 = vmatprep.subr.bf16.mxu0 %v3347
        %3531 = vmatpush1.bf16.msra.mxu0 %v3346
        %3532 = vmatprep.subr.bf16.mxu0 %v3353
        %3533 = vmatpush1.bf16.msra.mxu0 %v3352
        %3534 = vmatprep.subr.bf16.mxu0 %v3359
        %3535 = vmatpush1.bf16.msra.mxu0 %v3358
        %3536 = vmatprep.subr.bf16.mxu0 %v3365
        %3537 = vmatpush1.bf16.msra.mxu0 %v3364
        %3538 = vmatprep.subr.bf16.mxu0 %v3371
        %3539 = vmatpush1.bf16.msra.mxu0 %v3370
        %3540 = vmatprep.subr.bf16.mxu0 %v3377
        %3541 = vmatpush1.bf16.msra.mxu0 %v3376
        %3542 = vmatprep.subr.bf16.mxu0 %v3383
        %3543 = vmatpush1.bf16.msra.mxu0 %v3382
        %3544 = vmatprep.subr.bf16.mxu0 %v3389
        %3545 = vmatpush1.bf16.msra.mxu0 %v3388
        %3546 = vmatprep.subr.bf16.mxu0 %v3395
        %3547 = vmatpush1.bf16.msra.mxu0 %v3394
        %3548 = vmatprep.subr.bf16.mxu0 %v3401
        %3549 = vmatpush1.bf16.msra.mxu0 %v3400
        %3550 = vmatprep.subr.bf16.mxu0 %v3407
        %3551 = vmatpush1.bf16.msra.mxu0 %v3406
        %3552 = vmatprep.subr.bf16.mxu0 %v3413
        %3553 = vmatpush1.bf16.msra.mxu0 %v3412
        %3554 = vmatprep.subr.bf16.mxu0 %v3419
        %3555 = vmatpush1.bf16.msra.mxu0 %v3418
        %3556 = vmatprep.subr.bf16.mxu0 %v3425
        %3557 = vmatpush1.bf16.msra.mxu0 %v3424
        %3558 = vmatprep.mubr.bf16.mxu0 %v2947
        %3559 = vmatmul.mubr.bf16.gmra.mrb[0].mxu0 %v2946
        %v3560 = vpop.f32.mrb[0].mxu0
        %v3561 = vadd.f32 0.0, %v3560
        %v3562 = vpop.f32.mrb[0].mxu0
        %v3563 = vadd.f32 0.0, %v3562
        %v3564 = vpop.f32.mrb[0].mxu0
        %v3565 = vadd.f32 0.0, %v3564
        %v3566 = vpop.f32.mrb[0].mxu0
        %v3567 = vadd.f32 0.0, %v3566
        %3568 = vmatprep.mubr.bf16.mxu0 %v2949
        %3569 = vmatmul.mubr.bf16.gmra.mrb[0].mxu0 %v2948
        %v3570 = vpop.f32.mrb[0].mxu0
        %v3571 = vadd.f32 0.0, %v3570
        %v3572 = vpop.f32.mrb[0].mxu0
        %v3573 = vadd.f32 0.0, %v3572
        %v3574 = vpop.f32.mrb[0].mxu0
        %v3575 = vadd.f32 0.0, %v3574
        %v3576 = vpop.f32.mrb[0].mxu0
        %v3577 = vadd.f32 0.0, %v3576
        %3578 = vdwg.mxu0
        %3579 = vmatprep.subr.bf16.mxu0 %v3337
        %3580 = vmatpush1.bf16.msra.mxu0 %v3336
        %3581 = vmatprep.subr.bf16.mxu0 %v3343
        %3582 = vmatpush1.bf16.msra.mxu0 %v3342
        %3583 = vmatprep.subr.bf16.mxu0 %v3349
        %3584 = vmatpush1.bf16.msra.mxu0 %v3348
        %3585 = vmatprep.subr.bf16.mxu0 %v3355
        %3586 = vmatpush1.bf16.msra.mxu0 %v3354
        %3587 = vmatprep.subr.bf16.mxu0 %v3361
        %3588 = vmatpush1.bf16.msra.mxu0 %v3360
        %3589 = vmatprep.subr.bf16.mxu0 %v3367
        %3590 = vmatpush1.bf16.msra.mxu0 %v3366
        %3591 = vmatprep.subr.bf16.mxu0 %v3373
        %3592 = vmatpush1.bf16.msra.mxu0 %v3372
        %3593 = vmatprep.subr.bf16.mxu0 %v3379
        %3594 = vmatpush1.bf16.msra.mxu0 %v3378
        %3595 = vmatprep.subr.bf16.mxu0 %v3385
        %3596 = vmatpush1.bf16.msra.mxu0 %v3384
        %3597 = vmatprep.subr.bf16.mxu0 %v3391
        %3598 = vmatpush1.bf16.msra.mxu0 %v3390
        %3599 = vmatprep.subr.bf16.mxu0 %v3397
        %3600 = vmatpush1.bf16.msra.mxu0 %v3396
        %3601 = vmatprep.subr.bf16.mxu0 %v3403
        %3602 = vmatpush1.bf16.msra.mxu0 %v3402
        %3603 = vmatprep.subr.bf16.mxu0 %v3409
        %3604 = vmatpush1.bf16.msra.mxu0 %v3408
        %3605 = vmatprep.subr.bf16.mxu0 %v3415
        %3606 = vmatpush1.bf16.msra.mxu0 %v3414
        %3607 = vmatprep.subr.bf16.mxu0 %v3421
        %3608 = vmatpush1.bf16.msra.mxu0 %v3420
        %3609 = vmatprep.subr.bf16.mxu0 %v3427
        %3610 = vmatpush1.bf16.msra.mxu0 %v3426
        %3611 = vmatprep.mubr.bf16.mxu0 %v2947
        %3612 = vmatmul.mubr.bf16.gmra.mrb[0].mxu0 %v2946
        %v3613 = vpop.f32.mrb[0].mxu0
        %v3614 = vadd.f32 0.0, %v3613
        %v3615 = vpop.f32.mrb[0].mxu0
        %v3616 = vadd.f32 0.0, %v3615
        %v3617 = vpop.f32.mrb[0].mxu0
        %v3618 = vadd.f32 0.0, %v3617
        %v3619 = vpop.f32.mrb[0].mxu0
        %v3620 = vadd.f32 0.0, %v3619
        %3621 = vmatprep.mubr.bf16.mxu0 %v2949
        %3622 = vmatmul.mubr.bf16.gmra.mrb[0].mxu0 %v2948
        %v3623 = vpop.f32.mrb[0].mxu0
        %v3624 = vadd.f32 0.0, %v3623
        %v3625 = vpop.f32.mrb[0].mxu0
        %v3626 = vadd.f32 0.0, %v3625
        %v3627 = vpop.f32.mrb[0].mxu0
        %v3628 = vadd.f32 0.0, %v3627
        %v3629 = vpop.f32.mrb[0].mxu0
        %v3630 = vadd.f32 0.0, %v3629
        %3631 = vdwg.mxu0
        %3632 = vmatprep.subr.bf16.mxu0 %v3339
        %3633 = vmatpush1.bf16.msra.mxu0 %v3338
        %3634 = vmatprep.subr.bf16.mxu0 %v3345
        %3635 = vmatpush1.bf16.msra.mxu0 %v3344
        %3636 = vmatprep.subr.bf16.mxu0 %v3351
        %3637 = vmatpush1.bf16.msra.mxu0 %v3350
        %3638 = vmatprep.subr.bf16.mxu0 %v3357
        %3639 = vmatpush1.bf16.msra.mxu0 %v3356
        %3640 = vmatprep.subr.bf16.mxu0 %v3363
        %3641 = vmatpush1.bf16.msra.mxu0 %v3362
        %3642 = vmatprep.subr.bf16.mxu0 %v3369
        %3643 = vmatpush1.bf16.msra.mxu0 %v3368
        %3644 = vmatprep.subr.bf16.mxu0 %v3375
        %3645 = vmatpush1.bf16.msra.mxu0 %v3374
        %3646 = vmatprep.subr.bf16.mxu0 %v3381
        %3647 = vmatpush1.bf16.msra.mxu0 %v3380
        %3648 = vmatprep.subr.bf16.mxu0 %v3387
        %3649 = vmatpush1.bf16.msra.mxu0 %v3386
        %3650 = vmatprep.subr.bf16.mxu0 %v3393
        %3651 = vmatpush1.bf16.msra.mxu0 %v3392
        %3652 = vmatprep.subr.bf16.mxu0 %v3399
        %3653 = vmatpush1.bf16.msra.mxu0 %v3398
        %3654 = vmatprep.subr.bf16.mxu0 %v3405
        %3655 = vmatpush1.bf16.msra.mxu0 %v3404
        %3656 = vmatprep.subr.bf16.mxu0 %v3411
        %3657 = vmatpush1.bf16.msra.mxu0 %v3410
        %3658 = vmatprep.subr.bf16.mxu0 %v3417
        %3659 = vmatpush1.bf16.msra.mxu0 %v3416
        %3660 = vmatprep.subr.bf16.mxu0 %v3423
        %3661 = vmatpush1.bf16.msra.mxu0 %v3422
        %3662 = vmatprep.subr.bf16.mxu0 %v3429
        %3663 = vmatpush1.bf16.msra.mxu0 %v3428
        %3664 = vmatprep.mubr.bf16.mxu0 %v2947
        %3665 = vmatmul.mubr.bf16.gmra.mrb[0].mxu0 %v2946
        %v3666 = vpop.f32.mrb[0].mxu0
        %v3667 = vadd.f32 0.0, %v3666
        %v3668 = vpop.f32.mrb[0].mxu0
        %v3669 = vadd.f32 0.0, %v3668
        %v3670 = vpop.f32.mrb[0].mxu0
        %v3671 = vadd.f32 0.0, %v3670
        %v3672 = vpop.f32.mrb[0].mxu0
        %v3673 = vadd.f32 0.0, %v3672
        %3674 = vmatprep.mubr.bf16.mxu0 %v2949
        %3675 = vmatmul.mubr.bf16.gmra.mrb[0].mxu0 %v2948
        %v3676 = vpop.f32.mrb[0].mxu0
        %v3677 = vadd.f32 0.0, %v3676
        %v3678 = vpop.f32.mrb[0].mxu0
        %v3679 = vadd.f32 0.0, %v3678
        %v3680 = vpop.f32.mrb[0].mxu0
        %v3681 = vadd.f32 0.0, %v3680
        %v3682 = vpop.f32.mrb[0].mxu0
        %v3683 = vadd.f32 0.0, %v3682
        %3684 = vdwg.mxu0
        %v3687 = vrot.slane %v3575, 7
        %v3688 = vrot.slane %v3577, 7
        %vm3697 = vcmask 1040384
        %v3698 = vrot.slane %v3561, 7
        %v3699 = vrot.slane %v3563, 7
        %v3700 = vrot.slane %v3565, 7
        %v3701 = vsel %vm3697, %v3698, %v3700
        %v3702 = vrot.slane %v3567, 7
        %v3703 = vsel %vm3697, %v3699, %v3702
        %v3704 = vrot.slane %v3571, 7
        %v3705 = vsel %vm3697, %v3700, %v3704
        %v3706 = vrot.slane %v3573, 7
        %v3707 = vsel %vm3697, %v3702, %v3706
        %v3708 = vsel %vm3697, %v3704, %v3687
        %v3709 = vsel %vm3697, %v3706, %v3688
        %v3718 = vsel %vm3697, %v3687, %v3698
        %v3719 = vsel %vm3697, %v3688, %v3699
        %v3720 = vmul.f32 %v3718, %v794
        %v3721 = vmul.f32 %v3719, %v794
        %v3722 = vmul.f32 %v3701, %v795
        %v3723 = vmul.f32 %v3703, %v795
        %v3724 = vmul.f32 %v3705, %v796
        %v3725 = vmul.f32 %v3707, %v796
        %v3726 = vmul.f32 %v3708, %v797
        %v3727 = vmul.f32 %v3709, %v797
        %vm3736 = vcmask 1046528
        %v3737 = vrot.slane %v3667, 1
        %v3738 = vrot.slane %v3671, 1
        %v3739 = vsel %vm3736, %v3737, %v3738
        %v3740 = vrot.slane %v3669, 1
        %v3741 = vrot.slane %v3673, 1
        %v3742 = vsel %vm3736, %v3740, %v3741
        %v3743 = vrot.slane %v3677, 1
        %v3744 = vsel %vm3736, %v3738, %v3743
        %v3745 = vrot.slane %v3679, 1
        %v3746 = vsel %vm3736, %v3741, %v3745
        %v3747 = vrot.slane %v3681, 1
        %v3748 = vsel %vm3736, %v3743, %v3747
        %v3749 = vrot.slane %v3683, 1
        %v3750 = vsel %vm3736, %v3745, %v3749
        %v3761 = vsel %vm3736, %v3747, %v3737
        %v3762 = vsel %vm3736, %v3749, %v3740
        %v3763 = vmul.f32 %v3739, %v806
        %v3764 = vmul.f32 %v3742, %v806
        %v3765 = vmul.f32 %v3744, %v807
        %v3766 = vmul.f32 %v3746, %v807
        %v3767 = vmul.f32 %v3748, %v808
        %v3768 = vmul.f32 %v3750, %v808
        %v3769 = vmul.f32 %v3761, %v809
        %v3770 = vmul.f32 %v3762, %v809
        %v3771 = vadd.f32 %v3720, %v3614
        %v3772 = vadd.f32 %v3721, %v3616
        %v3773 = vadd.f32 %v3722, %v3618
        %v3774 = vadd.f32 %v3723, %v3620
        %v3775 = vadd.f32 %v3724, %v3624
        %v3776 = vadd.f32 %v3725, %v3626
        %v3777 = vadd.f32 %v3726, %v3628
        %v3778 = vadd.f32 %v3727, %v3630
        %v3779 = vadd.f32 %v3771, %v3763
        %v3780 = vadd.f32 %v3772, %v3764
        %v3781 = vadd.f32 %v3773, %v3765
        %v3782 = vadd.f32 %v3774, %v3766
        %v3783 = vadd.f32 %v3775, %v3767
        %v3784 = vadd.f32 %v3776, %v3768
        %v3785 = vadd.f32 %v3777, %v3769
        %v3786 = vadd.f32 %v3778, %v3770
        %v3787 = vld [vmem:[%s500] sm:$0x3]
        %v3789 = vlaneseq
        %v3790 = vshrl.u32 %v3789, 7
        %v3791 = vsub.s32 0, %v3790
        %v3792 = vrot.slane %v3787, %v3791
        %v3793 = vlaneseq
        %v3794 = vshrl.u32 %v3793, 7
        %v3795 = vsub.s32 1, %v3794
        %v3796 = vrot.slane %v3787, %v3795
        %v3799 = vadd.f32 %v3779, %v3792
        %v3800 = vadd.f32 %v3780, %v3796
        %v3801 = vadd.f32 %v3781, %v3792
        %v3802 = vadd.f32 %v3782, %v3796
        %v3803 = vadd.f32 %v3783, %v3792
        %v3804 = vadd.f32 %v3784, %v3796
        %v3805 = vadd.f32 %v3785, %v3792
        %v3806 = vadd.f32 %v3786, %v3796
        %v3807 = vmax.f32 %v3799, 0.0
        %v3808 = vmax.f32 %v3800, 0.0
        %v3809 = vmax.f32 %v3801, 0.0
        %v3810 = vmax.f32 %v3802, 0.0
        %v3811 = vmax.f32 %v3803, 0.0
        %v3812 = vmax.f32 %v3804, 0.0
        %v3813 = vmax.f32 %v3805, 0.0
        %v3814 = vmax.f32 %v3806, 0.0
        %v3815 = vpack.c.bf16 %v3809, %v3807
        %v3816 = vpack.c.bf16 %v3810, %v3808
        %v3817 = vpack.c.bf16 %v3813, %v3811
        %v3818 = vpack.c.bf16 %v3814, %v3812
        %v3819 = vld [vmem:[%s509] sm:$0xff]
        %v3820 = vld [vmem:[%s509 + $0x8] sm:$0xff]
        %v3821 = vld [vmem:[%s509 + $0x10] sm:$0xff]
        %v3822 = vld [vmem:[%s509 + $0x18] sm:$0xff]
        %v3823 = vld [vmem:[%s509 + $0x20] sm:$0xff]
        %v3824 = vld [vmem:[%s509 + $0x28] sm:$0xff]
        %v3825 = vld [vmem:[%s509 + $0x30] sm:$0xff]
        %v3826 = vld [vmem:[%s509 + $0x38] sm:$0xff]
        %v3827 = vld [vmem:[%s509 + $0x40] sm:$0xff]
        %v3828 = vld [vmem:[%s509 + $0x48] sm:$0xff]
        %v3829 = vld [vmem:[%s509 + $0x50] sm:$0xff]
        %v3830 = vld [vmem:[%s509 + $0x58] sm:$0xff]
        %v3831 = vld [vmem:[%s509 + $0x60] sm:$0xff]
        %v3832 = vld [vmem:[%s509 + $0x68] sm:$0xff]
        %v3833 = vld [vmem:[%s509 + $0x70] sm:$0xff]
        %v3834 = vld [vmem:[%s509 + $0x78] sm:$0xff]
        %v3835 = vld [vmem:[%s509 + $0x80] sm:$0xff]
        %v3836 = vld [vmem:[%s509 + $0x88] sm:$0xff]
        %v3837 = vld [vmem:[%s509 + $0x90] sm:$0xff]
        %v3838 = vld [vmem:[%s509 + $0x98] sm:$0xff]
        %v3839 = vld [vmem:[%s509 + $0xa0] sm:$0xff]
        %v3840 = vld [vmem:[%s509 + $0xa8] sm:$0xff]
        %v3841 = vld [vmem:[%s509 + $0xb0] sm:$0xff]
        %v3842 = vld [vmem:[%s509 + $0xb8] sm:$0xff]
        %v3843 = vld [vmem:[%s509 + $0xc0] sm:$0xff]
        %v3844 = vld [vmem:[%s509 + $0xc8] sm:$0xff]
        %v3845 = vld [vmem:[%s509 + $0xd0] sm:$0xff]
        %v3846 = vld [vmem:[%s509 + $0xd8] sm:$0xff]
        %v3847 = vld [vmem:[%s509 + $0xe0] sm:$0xff]
        %v3848 = vld [vmem:[%s509 + $0xe8] sm:$0xff]
        %v3849 = vld [vmem:[%s509 + $0xf0] sm:$0xff]
        %v3850 = vld [vmem:[%s509 + $0xf8] sm:$0xff]
        %v3851 = vld [vmem:[%s509 + $0x100] sm:$0xff]
        %v3852 = vld [vmem:[%s509 + $0x108] sm:$0xff]
        %v3853 = vld [vmem:[%s509 + $0x110] sm:$0xff]
        %v3854 = vld [vmem:[%s509 + $0x118] sm:$0xff]
        %v3855 = vld [vmem:[%s509 + $0x120] sm:$0xff]
        %v3856 = vld [vmem:[%s509 + $0x128] sm:$0xff]
        %v3857 = vld [vmem:[%s509 + $0x130] sm:$0xff]
        %v3858 = vld [vmem:[%s509 + $0x138] sm:$0xff]
        %v3859 = vld [vmem:[%s509 + $0x140] sm:$0xff]
        %v3860 = vld [vmem:[%s509 + $0x148] sm:$0xff]
        %v3861 = vld [vmem:[%s509 + $0x150] sm:$0xff]
        %v3862 = vld [vmem:[%s509 + $0x158] sm:$0xff]
        %v3863 = vld [vmem:[%s509 + $0x160] sm:$0xff]
        %v3864 = vld [vmem:[%s509 + $0x168] sm:$0xff]
        %v3865 = vld [vmem:[%s509 + $0x170] sm:$0xff]
        %v3866 = vld [vmem:[%s509 + $0x178] sm:$0xff]
        %v3867 = vld [vmem:[%s509 + $0x180] sm:$0xff]
        %v3868 = vld [vmem:[%s509 + $0x188] sm:$0xff]
        %v3869 = vld [vmem:[%s509 + $0x190] sm:$0xff]
        %v3870 = vld [vmem:[%s509 + $0x198] sm:$0xff]
        %v3871 = vld [vmem:[%s509 + $0x1a0] sm:$0xff]
        %v3872 = vld [vmem:[%s509 + $0x1a8] sm:$0xff]
        %v3873 = vld [vmem:[%s509 + $0x1b0] sm:$0xff]
        %v3874 = vld [vmem:[%s509 + $0x1b8] sm:$0xff]
        %v3875 = vld [vmem:[%s509 + $0x1c0] sm:$0xff]
        %v3876 = vld [vmem:[%s509 + $0x1c8] sm:$0xff]
        %v3877 = vld [vmem:[%s509 + $0x1d0] sm:$0xff]
        %v3878 = vld [vmem:[%s509 + $0x1d8] sm:$0xff]
        %v3879 = vld [vmem:[%s509 + $0x1e0] sm:$0xff]
        %v3880 = vld [vmem:[%s509 + $0x1e8] sm:$0xff]
        %v3881 = vld [vmem:[%s509 + $0x1f0] sm:$0xff]
        %v3882 = vld [vmem:[%s509 + $0x1f8] sm:$0xff]
        %v3947 = vunpack.c.l.b16 %v3819
        %v3948 = vunpack.c.h.b16 %v3819
        %v3949 = vunpack.c.l.b16 %v3820
        %v3950 = vunpack.c.h.b16 %v3820
        %v3951 = vunpack.c.l.b16 %v3821
        %v3952 = vunpack.c.h.b16 %v3821
        %v3953 = vunpack.c.l.b16 %v3822
        %v3954 = vunpack.c.h.b16 %v3822
        %v3955 = vunpack.c.l.b16 %v3823
        %v3956 = vunpack.c.h.b16 %v3823
        %v3957 = vunpack.c.l.b16 %v3824
        %v3958 = vunpack.c.h.b16 %v3824
        %v3959 = vunpack.c.l.b16 %v3825
        %v3960 = vunpack.c.h.b16 %v3825
        %v3961 = vunpack.c.l.b16 %v3826
        %v3962 = vunpack.c.h.b16 %v3826
        %v3963 = vunpack.c.l.b16 %v3827
        %v3964 = vunpack.c.h.b16 %v3827
        %v3965 = vunpack.c.l.b16 %v3828
        %v3966 = vunpack.c.h.b16 %v3828
        %v3967 = vunpack.c.l.b16 %v3829
        %v3968 = vunpack.c.h.b16 %v3829
        %v3969 = vunpack.c.l.b16 %v3830
        %v3970 = vunpack.c.h.b16 %v3830
        %v3971 = vunpack.c.l.b16 %v3831
        %v3972 = vunpack.c.h.b16 %v3831
        %v3973 = vunpack.c.l.b16 %v3832
        %v3974 = vunpack.c.h.b16 %v3832
        %v3975 = vunpack.c.l.b16 %v3833
        %v3976 = vunpack.c.h.b16 %v3833
        %v3977 = vunpack.c.l.b16 %v3834
        %v3978 = vunpack.c.h.b16 %v3834
        %v3979 = vunpack.c.l.b16 %v3835
        %v3980 = vunpack.c.h.b16 %v3835
        %v3981 = vunpack.c.l.b16 %v3836
        %v3982 = vunpack.c.h.b16 %v3836
        %v3983 = vunpack.c.l.b16 %v3837
        %v3984 = vunpack.c.h.b16 %v3837
        %v3985 = vunpack.c.l.b16 %v3838
        %v3986 = vunpack.c.h.b16 %v3838
        %v3987 = vunpack.c.l.b16 %v3839
        %v3988 = vunpack.c.h.b16 %v3839
        %v3989 = vunpack.c.l.b16 %v3840
        %v3990 = vunpack.c.h.b16 %v3840
        %v3991 = vunpack.c.l.b16 %v3841
        %v3992 = vunpack.c.h.b16 %v3841
        %v3993 = vunpack.c.l.b16 %v3842
        %v3994 = vunpack.c.h.b16 %v3842
        %v3995 = vunpack.c.l.b16 %v3843
        %v3996 = vunpack.c.h.b16 %v3843
        %v3997 = vunpack.c.l.b16 %v3844
        %v3998 = vunpack.c.h.b16 %v3844
        %v3999 = vunpack.c.l.b16 %v3845
        %v4000 = vunpack.c.h.b16 %v3845
        %v4001 = vunpack.c.l.b16 %v3846
        %v4002 = vunpack.c.h.b16 %v3846
        %v4003 = vunpack.c.l.b16 %v3847
        %v4004 = vunpack.c.h.b16 %v3847
        %v4005 = vunpack.c.l.b16 %v3848
        %v4006 = vunpack.c.h.b16 %v3848
        %v4007 = vunpack.c.l.b16 %v3849
        %v4008 = vunpack.c.h.b16 %v3849
        %v4009 = vunpack.c.l.b16 %v3850
        %v4010 = vunpack.c.h.b16 %v3850
        %v4011 = vunpack.c.l.b16 %v3851
        %v4012 = vunpack.c.h.b16 %v3851
        %v4013 = vunpack.c.l.b16 %v3852
        %v4014 = vunpack.c.h.b16 %v3852
        %v4015 = vunpack.c.l.b16 %v3853
        %v4016 = vunpack.c.h.b16 %v3853
        %v4017 = vunpack.c.l.b16 %v3854
        %v4018 = vunpack.c.h.b16 %v3854
        %v4019 = vunpack.c.l.b16 %v3855
        %v4020 = vunpack.c.h.b16 %v3855
        %v4021 = vunpack.c.l.b16 %v3856
        %v4022 = vunpack.c.h.b16 %v3856
        %v4023 = vunpack.c.l.b16 %v3857
        %v4024 = vunpack.c.h.b16 %v3857
        %v4025 = vunpack.c.l.b16 %v3858
        %v4026 = vunpack.c.h.b16 %v3858
        %v4027 = vunpack.c.l.b16 %v3859
        %v4028 = vunpack.c.h.b16 %v3859
        %v4029 = vunpack.c.l.b16 %v3860
        %v4030 = vunpack.c.h.b16 %v3860
        %v4031 = vunpack.c.l.b16 %v3861
        %v4032 = vunpack.c.h.b16 %v3861
        %v4033 = vunpack.c.l.b16 %v3862
        %v4034 = vunpack.c.h.b16 %v3862
        %v4035 = vunpack.c.l.b16 %v3863
        %v4036 = vunpack.c.h.b16 %v3863
        %v4037 = vunpack.c.l.b16 %v3864
        %v4038 = vunpack.c.h.b16 %v3864
        %v4039 = vunpack.c.l.b16 %v3865
        %v4040 = vunpack.c.h.b16 %v3865
        %v4041 = vunpack.c.l.b16 %v3866
        %v4042 = vunpack.c.h.b16 %v3866
        %v4043 = vunpack.c.l.b16 %v3867
        %v4044 = vunpack.c.h.b16 %v3867
        %v4045 = vunpack.c.l.b16 %v3868
        %v4046 = vunpack.c.h.b16 %v3868
        %v4047 = vunpack.c.l.b16 %v3869
        %v4048 = vunpack.c.h.b16 %v3869
        %v4049 = vunpack.c.l.b16 %v3870
        %v4050 = vunpack.c.h.b16 %v3870
        %v4051 = vunpack.c.l.b16 %v3871
        %v4052 = vunpack.c.h.b16 %v3871
        %v4053 = vunpack.c.l.b16 %v3872
        %v4054 = vunpack.c.h.b16 %v3872
        %v4055 = vunpack.c.l.b16 %v3873
        %v4056 = vunpack.c.h.b16 %v3873
        %v4057 = vunpack.c.l.b16 %v3874
        %v4058 = vunpack.c.h.b16 %v3874
        %v4059 = vunpack.c.l.b16 %v3875
        %v4060 = vunpack.c.h.b16 %v3875
        %v4061 = vunpack.c.l.b16 %v3876
        %v4062 = vunpack.c.h.b16 %v3876
        %v4063 = vunpack.c.l.b16 %v3877
        %v4064 = vunpack.c.h.b16 %v3877
        %v4065 = vunpack.c.l.b16 %v3878
        %v4066 = vunpack.c.h.b16 %v3878
        %v4067 = vunpack.c.l.b16 %v3879
        %v4068 = vunpack.c.h.b16 %v3879
        %v4069 = vunpack.c.l.b16 %v3880
        %v4070 = vunpack.c.h.b16 %v3880
        %v4071 = vunpack.c.l.b16 %v3881
        %v4072 = vunpack.c.h.b16 %v3881
        %v4073 = vunpack.c.l.b16 %v3882
        %v4074 = vunpack.c.h.b16 %v3882
        %v4075 = vpack.c.b16 %v3951, %v3947
        %v4076 = vpack.c.b16 %v3952, %v3948
        %v4077 = vpack.c.b16 %v3953, %v3949
        %v4078 = vpack.c.b16 %v3954, %v3950
        %v4079 = vpack.c.b16 %v3959, %v3955
        %v4080 = vpack.c.b16 %v3960, %v3956
        %v4081 = vpack.c.b16 %v3961, %v3957
        %v4082 = vpack.c.b16 %v3962, %v3958
        %v4083 = vpack.c.b16 %v3967, %v3963
        %v4084 = vpack.c.b16 %v3968, %v3964
        %v4085 = vpack.c.b16 %v3969, %v3965
        %v4086 = vpack.c.b16 %v3970, %v3966
        %v4087 = vpack.c.b16 %v3975, %v3971
        %v4088 = vpack.c.b16 %v3976, %v3972
        %v4089 = vpack.c.b16 %v3977, %v3973
        %v4090 = vpack.c.b16 %v3978, %v3974
        %v4091 = vpack.c.b16 %v3983, %v3979
        %v4092 = vpack.c.b16 %v3984, %v3980
        %v4093 = vpack.c.b16 %v3985, %v3981
        %v4094 = vpack.c.b16 %v3986, %v3982
        %v4095 = vpack.c.b16 %v3991, %v3987
        %v4096 = vpack.c.b16 %v3992, %v3988
        %v4097 = vpack.c.b16 %v3993, %v3989
        %v4098 = vpack.c.b16 %v3994, %v3990
        %v4099 = vpack.c.b16 %v3999, %v3995
        %v4100 = vpack.c.b16 %v4000, %v3996
        %v4101 = vpack.c.b16 %v4001, %v3997
        %v4102 = vpack.c.b16 %v4002, %v3998
        %v4103 = vpack.c.b16 %v4007, %v4003
        %v4104 = vpack.c.b16 %v4008, %v4004
        %v4105 = vpack.c.b16 %v4009, %v4005
        %v4106 = vpack.c.b16 %v4010, %v4006
        %v4107 = vpack.c.b16 %v4015, %v4011
        %v4108 = vpack.c.b16 %v4016, %v4012
        %v4109 = vpack.c.b16 %v4017, %v4013
        %v4110 = vpack.c.b16 %v4018, %v4014
        %v4111 = vpack.c.b16 %v4023, %v4019
        %v4112 = vpack.c.b16 %v4024, %v4020
        %v4113 = vpack.c.b16 %v4025, %v4021
        %v4114 = vpack.c.b16 %v4026, %v4022
        %v4115 = vpack.c.b16 %v4031, %v4027
        %v4116 = vpack.c.b16 %v4032, %v4028
        %v4117 = vpack.c.b16 %v4033, %v4029
        %v4118 = vpack.c.b16 %v4034, %v4030
        %v4119 = vpack.c.b16 %v4039, %v4035
        %v4120 = vpack.c.b16 %v4040, %v4036
        %v4121 = vpack.c.b16 %v4041, %v4037
        %v4122 = vpack.c.b16 %v4042, %v4038
        %v4123 = vpack.c.b16 %v4047, %v4043
        %v4124 = vpack.c.b16 %v4048, %v4044
        %v4125 = vpack.c.b16 %v4049, %v4045
        %v4126 = vpack.c.b16 %v4050, %v4046
        %v4127 = vpack.c.b16 %v4055, %v4051
        %v4128 = vpack.c.b16 %v4056, %v4052
        %v4129 = vpack.c.b16 %v4057, %v4053
        %v4130 = vpack.c.b16 %v4058, %v4054
        %v4131 = vpack.c.b16 %v4063, %v4059
        %v4132 = vpack.c.b16 %v4064, %v4060
        %v4133 = vpack.c.b16 %v4065, %v4061
        %v4134 = vpack.c.b16 %v4066, %v4062
        %v4135 = vpack.c.b16 %v4071, %v4067
        %v4136 = vpack.c.b16 %v4072, %v4068
        %v4137 = vpack.c.b16 %v4073, %v4069
        %v4138 = vpack.c.b16 %v4074, %v4070
        %4203 = vmatprep.subr.bf16.mxu0 %v4076
        %4204 = vmatpush1.bf16.msra.mxu0 %v4075
        %4205 = vmatprep.subr.bf16.mxu0 %v4080
        %4206 = vmatpush1.bf16.msra.mxu0 %v4079
        %4207 = vmatprep.subr.bf16.mxu0 %v4084
        %4208 = vmatpush1.bf16.msra.mxu0 %v4083
        %4209 = vmatprep.subr.bf16.mxu0 %v4088
        %4210 = vmatpush1.bf16.msra.mxu0 %v4087
        %4211 = vmatprep.subr.bf16.mxu0 %v4092
        %4212 = vmatpush1.bf16.msra.mxu0 %v4091
        %4213 = vmatprep.subr.bf16.mxu0 %v4096
        %4214 = vmatpush1.bf16.msra.mxu0 %v4095
        %4215 = vmatprep.subr.bf16.mxu0 %v4100
        %4216 = vmatpush1.bf16.msra.mxu0 %v4099
        %4217 = vmatprep.subr.bf16.mxu0 %v4104
        %4218 = vmatpush1.bf16.msra.mxu0 %v4103
        %4219 = vmatprep.subr.bf16.mxu0 %v4108
        %4220 = vmatpush1.bf16.msra.mxu0 %v4107
        %4221 = vmatprep.subr.bf16.mxu0 %v4112
        %4222 = vmatpush1.bf16.msra.mxu0 %v4111
        %4223 = vmatprep.subr.bf16.mxu0 %v4116
        %4224 = vmatpush1.bf16.msra.mxu0 %v4115
        %4225 = vmatprep.subr.bf16.mxu0 %v4120
        %4226 = vmatpush1.bf16.msra.mxu0 %v4119
        %4227 = vmatprep.subr.bf16.mxu0 %v4124
        %4228 = vmatpush1.bf16.msra.mxu0 %v4123
        %4229 = vmatprep.subr.bf16.mxu0 %v4128
        %4230 = vmatpush1.bf16.msra.mxu0 %v4127
        %4231 = vmatprep.subr.bf16.mxu0 %v4132
        %4232 = vmatpush1.bf16.msra.mxu0 %v4131
        %4233 = vmatprep.subr.bf16.mxu0 %v4136
        %4234 = vmatpush1.bf16.msra.mxu0 %v4135
        %4235 = vmatprep.mubr.bf16.mxu0 %v3816
        %4236 = vmatmul.mubr.bf16.gmra.mrb[0].mxu0 %v3815
        %v4237 = vpop.f32.mrb[0].mxu0
        %v4238 = vadd.f32 0.0, %v4237
        %v4239 = vpop.f32.mrb[0].mxu0
        %v4240 = vadd.f32 0.0, %v4239
        %v4241 = vpop.f32.mrb[0].mxu0
        %v4242 = vadd.f32 0.0, %v4241
        %v4243 = vpop.f32.mrb[0].mxu0
        %v4244 = vadd.f32 0.0, %v4243
        %4245 = vmatprep.mubr.bf16.mxu0 %v3818
        %4246 = vmatmul.mubr.bf16.gmra.mrb[0].mxu0 %v3817
        %v4247 = vpop.f32.mrb[0].mxu0
        %v4248 = vadd.f32 0.0, %v4247
        %v4249 = vpop.f32.mrb[0].mxu0
        %v4250 = vadd.f32 0.0, %v4249
        %v4251 = vpop.f32.mrb[0].mxu0
        %v4252 = vadd.f32 0.0, %v4251
        %v4253 = vpop.f32.mrb[0].mxu0
        %v4254 = vadd.f32 0.0, %v4253
        %4255 = vdwg.mxu0
        %4256 = vmatprep.subr.bf16.mxu0 %v4078
        %4257 = vmatpush1.bf16.msra.mxu0 %v4077
        %4258 = vmatprep.subr.bf16.mxu0 %v4082
        %4259 = vmatpush1.bf16.msra.mxu0 %v4081
        %4260 = vmatprep.subr.bf16.mxu0 %v4086
        %4261 = vmatpush1.bf16.msra.mxu0 %v4085
        %4262 = vmatprep.subr.bf16.mxu0 %v4090
        %4263 = vmatpush1.bf16.msra.mxu0 %v4089
        %4264 = vmatprep.subr.bf16.mxu0 %v4094
        %4265 = vmatpush1.bf16.msra.mxu0 %v4093
        %4266 = vmatprep.subr.bf16.mxu0 %v4098
        %4267 = vmatpush1.bf16.msra.mxu0 %v4097
        %4268 = vmatprep.subr.bf16.mxu0 %v4102
        %4269 = vmatpush1.bf16.msra.mxu0 %v4101
        %4270 = vmatprep.subr.bf16.mxu0 %v4106
        %4271 = vmatpush1.bf16.msra.mxu0 %v4105
        %4272 = vmatprep.subr.bf16.mxu0 %v4110
        %4273 = vmatpush1.bf16.msra.mxu0 %v4109
        %4274 = vmatprep.subr.bf16.mxu0 %v4114
        %4275 = vmatpush1.bf16.msra.mxu0 %v4113
        %4276 = vmatprep.subr.bf16.mxu0 %v4118
        %4277 = vmatpush1.bf16.msra.mxu0 %v4117
        %4278 = vmatprep.subr.bf16.mxu0 %v4122
        %4279 = vmatpush1.bf16.msra.mxu0 %v4121
        %4280 = vmatprep.subr.bf16.mxu0 %v4126
        %4281 = vmatpush1.bf16.msra.mxu0 %v4125
        %4282 = vmatprep.subr.bf16.mxu0 %v4130
        %4283 = vmatpush1.bf16.msra.mxu0 %v4129
        %4284 = vmatprep.subr.bf16.mxu0 %v4134
        %4285 = vmatpush1.bf16.msra.mxu0 %v4133
        %4286 = vmatprep.subr.bf16.mxu0 %v4138
        %4287 = vmatpush1.bf16.msra.mxu0 %v4137
        %4288 = vmatprep.mubr.bf16.mxu0 %v3816
        %4289 = vmatmul.mubr.bf16.gmra.mrb[0].mxu0 %v3815
        %v4290 = vpop.f32.mrb[0].mxu0
        %v4291 = vadd.f32 0.0, %v4290
        %v4292 = vpop.f32.mrb[0].mxu0
        %v4293 = vadd.f32 0.0, %v4292
        %v4294 = vpop.f32.mrb[0].mxu0
        %v4295 = vadd.f32 0.0, %v4294
        %v4296 = vpop.f32.mrb[0].mxu0
        %v4297 = vadd.f32 0.0, %v4296
        %4298 = vmatprep.mubr.bf16.mxu0 %v3818
        %4299 = vmatmul.mubr.bf16.gmra.mrb[0].mxu0 %v3817
        %v4300 = vpop.f32.mrb[0].mxu0
        %v4301 = vadd.f32 0.0, %v4300
        %v4302 = vpop.f32.mrb[0].mxu0
        %v4303 = vadd.f32 0.0, %v4302
        %v4304 = vpop.f32.mrb[0].mxu0
        %v4305 = vadd.f32 0.0, %v4304
        %v4306 = vpop.f32.mrb[0].mxu0
        %v4307 = vadd.f32 0.0, %v4306
        %4308 = vdwg.mxu0
        %v4311 = vrot.slane %v4252, 4
        %v4312 = vrot.slane %v4254, 4
        %vm4321 = vcmask 1043456
        %v4322 = vrot.slane %v4238, 4
        %v4323 = vrot.slane %v4240, 4
        %v4324 = vrot.slane %v4242, 4
        %v4325 = vsel %vm4321, %v4322, %v4324
        %v4326 = vrot.slane %v4244, 4
        %v4327 = vsel %vm4321, %v4323, %v4326
        %v4328 = vrot.slane %v4248, 4
        %v4329 = vsel %vm4321, %v4324, %v4328
        %v4330 = vrot.slane %v4250, 4
        %v4331 = vsel %vm4321, %v4326, %v4330
        %v4332 = vsel %vm4321, %v4328, %v4311
        %v4333 = vsel %vm4321, %v4330, %v4312
        %v4342 = vsel %vm4321, %v4311, %v4322
        %v4343 = vsel %vm4321, %v4312, %v4323
        %v4344 = vmul.f32 %v4342, %v866
        %v4345 = vmul.f32 %v4343, %v866
        %v4346 = vmul.f32 %v4325, %v867
        %v4347 = vmul.f32 %v4327, %v867
        %v4348 = vmul.f32 %v4329, %v868
        %v4349 = vmul.f32 %v4331, %v868
        %v4350 = vmul.f32 %v4332, %v869
        %v4351 = vmul.f32 %v4333, %v869
        %v4352 = vadd.f32 %v4344, %v4291
        %v4353 = vadd.f32 %v4345, %v4293
        %v4354 = vadd.f32 %v4346, %v4295
        %v4355 = vadd.f32 %v4347, %v4297
        %v4356 = vadd.f32 %v4348, %v4301
        %v4357 = vadd.f32 %v4349, %v4303
        %v4358 = vadd.f32 %v4350, %v4305
        %v4359 = vadd.f32 %v4351, %v4307
        %v4360 = vld [vmem:[%s518] sm:$0x3]
        %v4362 = vlaneseq
        %v4363 = vshrl.u32 %v4362, 7
        %v4364 = vsub.s32 0, %v4363
        %v4365 = vrot.slane %v4360, %v4364
        %v4366 = vlaneseq
        %v4367 = vshrl.u32 %v4366, 7
        %v4368 = vsub.s32 1, %v4367
        %v4369 = vrot.slane %v4360, %v4368
        %v4372 = vadd.f32 %v4352, %v4365
        %v4373 = vadd.f32 %v4353, %v4369
        %v4374 = vadd.f32 %v4354, %v4365
        %v4375 = vadd.f32 %v4355, %v4369
        %v4376 = vadd.f32 %v4356, %v4365
        %v4377 = vadd.f32 %v4357, %v4369
        %v4378 = vadd.f32 %v4358, %v4365
        %v4379 = vadd.f32 %v4359, %v4369
        %v4380 = vmax.f32 %v4372, 0.0
        %v4381 = vmax.f32 %v4373, 0.0
        %v4382 = vmax.f32 %v4374, 0.0
        %v4383 = vmax.f32 %v4375, 0.0
        %v4384 = vmax.f32 %v4376, 0.0
        %v4385 = vmax.f32 %v4377, 0.0
        %v4386 = vmax.f32 %v4378, 0.0
        %v4387 = vmax.f32 %v4379, 0.0
        %v4388 = vpack.c.bf16 %v4382, %v4380
        %v4389 = vpack.c.bf16 %v4383, %v4381
        %v4390 = vpack.c.bf16 %v4386, %v4384
        %v4391 = vpack.c.bf16 %v4387, %v4385
        %v4392 = vld [vmem:[%s527] sm:$0xff]
        %v4393 = vld [vmem:[%s527 + $0x8] sm:$0xff]
        %v4394 = vld [vmem:[%s527 + $0x10] sm:$0xff]
        %v4395 = vld [vmem:[%s527 + $0x18] sm:$0xff]
        %v4396 = vld [vmem:[%s527 + $0x20] sm:$0xff]
        %v4397 = vld [vmem:[%s527 + $0x28] sm:$0xff]
        %v4398 = vld [vmem:[%s527 + $0x30] sm:$0xff]
        %v4399 = vld [vmem:[%s527 + $0x38] sm:$0xff]
        %v4400 = vld [vmem:[%s527 + $0x40] sm:$0xff]
        %v4401 = vld [vmem:[%s527 + $0x48] sm:$0xff]
        %v4402 = vld [vmem:[%s527 + $0x50] sm:$0xff]
        %v4403 = vld [vmem:[%s527 + $0x58] sm:$0xff]
        %v4404 = vld [vmem:[%s527 + $0x60] sm:$0xff]
        %v4405 = vld [vmem:[%s527 + $0x68] sm:$0xff]
        %v4406 = vld [vmem:[%s527 + $0x70] sm:$0xff]
        %v4407 = vld [vmem:[%s527 + $0x78] sm:$0xff]
        %v4408 = vld [vmem:[%s527 + $0x80] sm:$0xff]
        %v4409 = vld [vmem:[%s527 + $0x88] sm:$0xff]
        %v4410 = vld [vmem:[%s527 + $0x90] sm:$0xff]
        %v4411 = vld [vmem:[%s527 + $0x98] sm:$0xff]
        %v4412 = vld [vmem:[%s527 + $0xa0] sm:$0xff]
        %v4413 = vld [vmem:[%s527 + $0xa8] sm:$0xff]
        %v4414 = vld [vmem:[%s527 + $0xb0] sm:$0xff]
        %v4415 = vld [vmem:[%s527 + $0xb8] sm:$0xff]
        %v4416 = vld [vmem:[%s527 + $0xc0] sm:$0xff]
        %v4417 = vld [vmem:[%s527 + $0xc8] sm:$0xff]
        %v4418 = vld [vmem:[%s527 + $0xd0] sm:$0xff]
        %v4419 = vld [vmem:[%s527 + $0xd8] sm:$0xff]
        %v4420 = vld [vmem:[%s527 + $0xe0] sm:$0xff]
        %v4421 = vld [vmem:[%s527 + $0xe8] sm:$0xff]
        %v4422 = vld [vmem:[%s527 + $0xf0] sm:$0xff]
        %v4423 = vld [vmem:[%s527 + $0xf8] sm:$0xff]
        %v4424 = vld [vmem:[%s527 + $0x100] sm:$0xff]
        %v4425 = vld [vmem:[%s527 + $0x108] sm:$0xff]
        %v4426 = vld [vmem:[%s527 + $0x110] sm:$0xff]
        %v4427 = vld [vmem:[%s527 + $0x118] sm:$0xff]
        %v4428 = vld [vmem:[%s527 + $0x120] sm:$0xff]
        %v4429 = vld [vmem:[%s527 + $0x128] sm:$0xff]
        %v4430 = vld [vmem:[%s527 + $0x130] sm:$0xff]
        %v4431 = vld [vmem:[%s527 + $0x138] sm:$0xff]
        %v4432 = vld [vmem:[%s527 + $0x140] sm:$0xff]
        %v4433 = vld [vmem:[%s527 + $0x148] sm:$0xff]
        %v4434 = vld [vmem:[%s527 + $0x150] sm:$0xff]
        %v4435 = vld [vmem:[%s527 + $0x158] sm:$0xff]
        %v4436 = vld [vmem:[%s527 + $0x160] sm:$0xff]
        %v4437 = vld [vmem:[%s527 + $0x168] sm:$0xff]
        %v4438 = vld [vmem:[%s527 + $0x170] sm:$0xff]
        %v4439 = vld [vmem:[%s527 + $0x178] sm:$0xff]
        %v4440 = vld [vmem:[%s527 + $0x180] sm:$0xff]
        %v4441 = vld [vmem:[%s527 + $0x188] sm:$0xff]
        %v4442 = vld [vmem:[%s527 + $0x190] sm:$0xff]
        %v4443 = vld [vmem:[%s527 + $0x198] sm:$0xff]
        %v4444 = vld [vmem:[%s527 + $0x1a0] sm:$0xff]
        %v4445 = vld [vmem:[%s527 + $0x1a8] sm:$0xff]
        %v4446 = vld [vmem:[%s527 + $0x1b0] sm:$0xff]
        %v4447 = vld [vmem:[%s527 + $0x1b8] sm:$0xff]
        %v4448 = vld [vmem:[%s527 + $0x1c0] sm:$0xff]
        %v4449 = vld [vmem:[%s527 + $0x1c8] sm:$0xff]
        %v4450 = vld [vmem:[%s527 + $0x1d0] sm:$0xff]
        %v4451 = vld [vmem:[%s527 + $0x1d8] sm:$0xff]
        %v4452 = vld [vmem:[%s527 + $0x1e0] sm:$0xff]
        %v4453 = vld [vmem:[%s527 + $0x1e8] sm:$0xff]
        %v4454 = vld [vmem:[%s527 + $0x1f0] sm:$0xff]
        %v4455 = vld [vmem:[%s527 + $0x1f8] sm:$0xff]
        %v4456 = vld [vmem:[%s527 + $0x200] sm:$0xff]
        %v4457 = vld [vmem:[%s527 + $0x208] sm:$0xff]
        %v4458 = vld [vmem:[%s527 + $0x210] sm:$0xff]
        %v4459 = vld [vmem:[%s527 + $0x218] sm:$0xff]
        %v4460 = vld [vmem:[%s527 + $0x220] sm:$0xff]
        %v4461 = vld [vmem:[%s527 + $0x228] sm:$0xff]
        %v4462 = vld [vmem:[%s527 + $0x230] sm:$0xff]
        %v4463 = vld [vmem:[%s527 + $0x238] sm:$0xff]
        %v4464 = vld [vmem:[%s527 + $0x240] sm:$0xff]
        %v4465 = vld [vmem:[%s527 + $0x248] sm:$0xff]
        %v4466 = vld [vmem:[%s527 + $0x250] sm:$0xff]
        %v4467 = vld [vmem:[%s527 + $0x258] sm:$0xff]
        %v4468 = vld [vmem:[%s527 + $0x260] sm:$0xff]
        %v4469 = vld [vmem:[%s527 + $0x268] sm:$0xff]
        %v4470 = vld [vmem:[%s527 + $0x270] sm:$0xff]
        %v4471 = vld [vmem:[%s527 + $0x278] sm:$0xff]
        %v4472 = vld [vmem:[%s527 + $0x280] sm:$0xff]
        %v4473 = vld [vmem:[%s527 + $0x288] sm:$0xff]
        %v4474 = vld [vmem:[%s527 + $0x290] sm:$0xff]
        %v4475 = vld [vmem:[%s527 + $0x298] sm:$0xff]
        %v4476 = vld [vmem:[%s527 + $0x2a0] sm:$0xff]
        %v4477 = vld [vmem:[%s527 + $0x2a8] sm:$0xff]
        %v4478 = vld [vmem:[%s527 + $0x2b0] sm:$0xff]
        %v4479 = vld [vmem:[%s527 + $0x2b8] sm:$0xff]
        %v4480 = vld [vmem:[%s527 + $0x2c0] sm:$0xff]
        %v4481 = vld [vmem:[%s527 + $0x2c8] sm:$0xff]
        %v4482 = vld [vmem:[%s527 + $0x2d0] sm:$0xff]
        %v4483 = vld [vmem:[%s527 + $0x2d8] sm:$0xff]
        %v4484 = vld [vmem:[%s527 + $0x2e0] sm:$0xff]
        %v4485 = vld [vmem:[%s527 + $0x2e8] sm:$0xff]
        %v4486 = vld [vmem:[%s527 + $0x2f0] sm:$0xff]
        %v4487 = vld [vmem:[%s527 + $0x2f8] sm:$0xff]
        %v4488 = vld [vmem:[%s527 + $0x300] sm:$0xff]
        %v4489 = vld [vmem:[%s527 + $0x308] sm:$0xff]
        %v4490 = vld [vmem:[%s527 + $0x310] sm:$0xff]
        %v4491 = vld [vmem:[%s527 + $0x318] sm:$0xff]
        %v4492 = vld [vmem:[%s527 + $0x320] sm:$0xff]
        %v4493 = vld [vmem:[%s527 + $0x328] sm:$0xff]
        %v4494 = vld [vmem:[%s527 + $0x330] sm:$0xff]
        %v4495 = vld [vmem:[%s527 + $0x338] sm:$0xff]
        %v4496 = vld [vmem:[%s527 + $0x340] sm:$0xff]
        %v4497 = vld [vmem:[%s527 + $0x348] sm:$0xff]
        %v4498 = vld [vmem:[%s527 + $0x350] sm:$0xff]
        %v4499 = vld [vmem:[%s527 + $0x358] sm:$0xff]
        %v4500 = vld [vmem:[%s527 + $0x360] sm:$0xff]
        %v4501 = vld [vmem:[%s527 + $0x368] sm:$0xff]
        %v4502 = vld [vmem:[%s527 + $0x370] sm:$0xff]
        %v4503 = vld [vmem:[%s527 + $0x378] sm:$0xff]
        %v4504 = vld [vmem:[%s527 + $0x380] sm:$0xff]
        %v4505 = vld [vmem:[%s527 + $0x388] sm:$0xff]
        %v4506 = vld [vmem:[%s527 + $0x390] sm:$0xff]
        %v4507 = vld [vmem:[%s527 + $0x398] sm:$0xff]
        %v4508 = vld [vmem:[%s527 + $0x3a0] sm:$0xff]
        %v4509 = vld [vmem:[%s527 + $0x3a8] sm:$0xff]
        %v4510 = vld [vmem:[%s527 + $0x3b0] sm:$0xff]
        %v4511 = vld [vmem:[%s527 + $0x3b8] sm:$0xff]
        %v4512 = vld [vmem:[%s527 + $0x3c0] sm:$0xff]
        %v4513 = vld [vmem:[%s527 + $0x3c8] sm:$0xff]
        %v4514 = vld [vmem:[%s527 + $0x3d0] sm:$0xff]
        %v4515 = vld [vmem:[%s527 + $0x3d8] sm:$0xff]
        %v4516 = vld [vmem:[%s527 + $0x3e0] sm:$0xff]
        %v4517 = vld [vmem:[%s527 + $0x3e8] sm:$0xff]
        %v4518 = vld [vmem:[%s527 + $0x3f0] sm:$0xff]
        %v4519 = vld [vmem:[%s527 + $0x3f8] sm:$0xff]
        %v4520 = vld [vmem:[%s527 + $0x400] sm:$0xff]
        %v4521 = vld [vmem:[%s527 + $0x408] sm:$0xff]
        %v4522 = vld [vmem:[%s527 + $0x410] sm:$0xff]
        %v4523 = vld [vmem:[%s527 + $0x418] sm:$0xff]
        %v4524 = vld [vmem:[%s527 + $0x420] sm:$0xff]
        %v4525 = vld [vmem:[%s527 + $0x428] sm:$0xff]
        %v4526 = vld [vmem:[%s527 + $0x430] sm:$0xff]
        %v4527 = vld [vmem:[%s527 + $0x438] sm:$0xff]
        %v4528 = vld [vmem:[%s527 + $0x440] sm:$0xff]
        %v4529 = vld [vmem:[%s527 + $0x448] sm:$0xff]
        %v4530 = vld [vmem:[%s527 + $0x450] sm:$0xff]
        %v4531 = vld [vmem:[%s527 + $0x458] sm:$0xff]
        %v4532 = vld [vmem:[%s527 + $0x460] sm:$0xff]
        %v4533 = vld [vmem:[%s527 + $0x468] sm:$0xff]
        %v4534 = vld [vmem:[%s527 + $0x470] sm:$0xff]
        %v4535 = vld [vmem:[%s527 + $0x478] sm:$0xff]
        %v4536 = vld [vmem:[%s527 + $0x480] sm:$0xff]
        %v4537 = vld [vmem:[%s527 + $0x488] sm:$0xff]
        %v4538 = vld [vmem:[%s527 + $0x490] sm:$0xff]
        %v4539 = vld [vmem:[%s527 + $0x498] sm:$0xff]
        %v4540 = vld [vmem:[%s527 + $0x4a0] sm:$0xff]
        %v4541 = vld [vmem:[%s527 + $0x4a8] sm:$0xff]
        %v4542 = vld [vmem:[%s527 + $0x4b0] sm:$0xff]
        %v4543 = vld [vmem:[%s527 + $0x4b8] sm:$0xff]
        %v4544 = vld [vmem:[%s527 + $0x4c0] sm:$0xff]
        %v4545 = vld [vmem:[%s527 + $0x4c8] sm:$0xff]
        %v4546 = vld [vmem:[%s527 + $0x4d0] sm:$0xff]
        %v4547 = vld [vmem:[%s527 + $0x4d8] sm:$0xff]
        %v4548 = vld [vmem:[%s527 + $0x4e0] sm:$0xff]
        %v4549 = vld [vmem:[%s527 + $0x4e8] sm:$0xff]
        %v4550 = vld [vmem:[%s527 + $0x4f0] sm:$0xff]
        %v4551 = vld [vmem:[%s527 + $0x4f8] sm:$0xff]
        %v4552 = vld [vmem:[%s527 + $0x500] sm:$0xff]
        %v4553 = vld [vmem:[%s527 + $0x508] sm:$0xff]
        %v4554 = vld [vmem:[%s527 + $0x510] sm:$0xff]
        %v4555 = vld [vmem:[%s527 + $0x518] sm:$0xff]
        %v4556 = vld [vmem:[%s527 + $0x520] sm:$0xff]
        %v4557 = vld [vmem:[%s527 + $0x528] sm:$0xff]
        %v4558 = vld [vmem:[%s527 + $0x530] sm:$0xff]
        %v4559 = vld [vmem:[%s527 + $0x538] sm:$0xff]
        %v4560 = vld [vmem:[%s527 + $0x540] sm:$0xff]
        %v4561 = vld [vmem:[%s527 + $0x548] sm:$0xff]
        %v4562 = vld [vmem:[%s527 + $0x550] sm:$0xff]
        %v4563 = vld [vmem:[%s527 + $0x558] sm:$0xff]
        %v4564 = vld [vmem:[%s527 + $0x560] sm:$0xff]
        %v4565 = vld [vmem:[%s527 + $0x568] sm:$0xff]
        %v4566 = vld [vmem:[%s527 + $0x570] sm:$0xff]
        %v4567 = vld [vmem:[%s527 + $0x578] sm:$0xff]
        %v4568 = vld [vmem:[%s527 + $0x580] sm:$0xff]
        %v4569 = vld [vmem:[%s527 + $0x588] sm:$0xff]
        %v4570 = vld [vmem:[%s527 + $0x590] sm:$0xff]
        %v4571 = vld [vmem:[%s527 + $0x598] sm:$0xff]
        %v4572 = vld [vmem:[%s527 + $0x5a0] sm:$0xff]
        %v4573 = vld [vmem:[%s527 + $0x5a8] sm:$0xff]
        %v4574 = vld [vmem:[%s527 + $0x5b0] sm:$0xff]
        %v4575 = vld [vmem:[%s527 + $0x5b8] sm:$0xff]
        %v4576 = vld [vmem:[%s527 + $0x5c0] sm:$0xff]
        %v4577 = vld [vmem:[%s527 + $0x5c8] sm:$0xff]
        %v4578 = vld [vmem:[%s527 + $0x5d0] sm:$0xff]
        %v4579 = vld [vmem:[%s527 + $0x5d8] sm:$0xff]
        %v4580 = vld [vmem:[%s527 + $0x5e0] sm:$0xff]
        %v4581 = vld [vmem:[%s527 + $0x5e8] sm:$0xff]
        %v4582 = vld [vmem:[%s527 + $0x5f0] sm:$0xff]
        %v4583 = vld [vmem:[%s527 + $0x5f8] sm:$0xff]
        %v4584 = vld [vmem:[%s527 + $0x600] sm:$0xff]
        %v4585 = vld [vmem:[%s527 + $0x608] sm:$0xff]
        %v4586 = vld [vmem:[%s527 + $0x610] sm:$0xff]
        %v4587 = vld [vmem:[%s527 + $0x618] sm:$0xff]
        %v4588 = vld [vmem:[%s527 + $0x620] sm:$0xff]
        %v4589 = vld [vmem:[%s527 + $0x628] sm:$0xff]
        %v4590 = vld [vmem:[%s527 + $0x630] sm:$0xff]
        %v4591 = vld [vmem:[%s527 + $0x638] sm:$0xff]
        %v4592 = vld [vmem:[%s527 + $0x640] sm:$0xff]
        %v4593 = vld [vmem:[%s527 + $0x648] sm:$0xff]
        %v4594 = vld [vmem:[%s527 + $0x650] sm:$0xff]
        %v4595 = vld [vmem:[%s527 + $0x658] sm:$0xff]
        %v4596 = vld [vmem:[%s527 + $0x660] sm:$0xff]
        %v4597 = vld [vmem:[%s527 + $0x668] sm:$0xff]
        %v4598 = vld [vmem:[%s527 + $0x670] sm:$0xff]
        %v4599 = vld [vmem:[%s527 + $0x678] sm:$0xff]
        %v4600 = vld [vmem:[%s527 + $0x680] sm:$0xff]
        %v4601 = vld [vmem:[%s527 + $0x688] sm:$0xff]
        %v4602 = vld [vmem:[%s527 + $0x690] sm:$0xff]
        %v4603 = vld [vmem:[%s527 + $0x698] sm:$0xff]
        %v4604 = vld [vmem:[%s527 + $0x6a0] sm:$0xff]
        %v4605 = vld [vmem:[%s527 + $0x6a8] sm:$0xff]
        %v4606 = vld [vmem:[%s527 + $0x6b0] sm:$0xff]
        %v4607 = vld [vmem:[%s527 + $0x6b8] sm:$0xff]
        %v4608 = vld [vmem:[%s527 + $0x6c0] sm:$0xff]
        %v4609 = vld [vmem:[%s527 + $0x6c8] sm:$0xff]
        %v4610 = vld [vmem:[%s527 + $0x6d0] sm:$0xff]
        %v4611 = vld [vmem:[%s527 + $0x6d8] sm:$0xff]
        %v4612 = vld [vmem:[%s527 + $0x6e0] sm:$0xff]
        %v4613 = vld [vmem:[%s527 + $0x6e8] sm:$0xff]
        %v4614 = vld [vmem:[%s527 + $0x6f0] sm:$0xff]
        %v4615 = vld [vmem:[%s527 + $0x6f8] sm:$0xff]
        %v4616 = vld [vmem:[%s527 + $0x700] sm:$0xff]
        %v4617 = vld [vmem:[%s527 + $0x708] sm:$0xff]
        %v4618 = vld [vmem:[%s527 + $0x710] sm:$0xff]
        %v4619 = vld [vmem:[%s527 + $0x718] sm:$0xff]
        %v4620 = vld [vmem:[%s527 + $0x720] sm:$0xff]
        %v4621 = vld [vmem:[%s527 + $0x728] sm:$0xff]
        %v4622 = vld [vmem:[%s527 + $0x730] sm:$0xff]
        %v4623 = vld [vmem:[%s527 + $0x738] sm:$0xff]
        %v4624 = vld [vmem:[%s527 + $0x740] sm:$0xff]
        %v4625 = vld [vmem:[%s527 + $0x748] sm:$0xff]
        %v4626 = vld [vmem:[%s527 + $0x750] sm:$0xff]
        %v4627 = vld [vmem:[%s527 + $0x758] sm:$0xff]
        %v4628 = vld [vmem:[%s527 + $0x760] sm:$0xff]
        %v4629 = vld [vmem:[%s527 + $0x768] sm:$0xff]
        %v4630 = vld [vmem:[%s527 + $0x770] sm:$0xff]
        %v4631 = vld [vmem:[%s527 + $0x778] sm:$0xff]
        %v4632 = vld [vmem:[%s527 + $0x780] sm:$0xff]
        %v4633 = vld [vmem:[%s527 + $0x788] sm:$0xff]
        %v4634 = vld [vmem:[%s527 + $0x790] sm:$0xff]
        %v4635 = vld [vmem:[%s527 + $0x798] sm:$0xff]
        %v4636 = vld [vmem:[%s527 + $0x7a0] sm:$0xff]
        %v4637 = vld [vmem:[%s527 + $0x7a8] sm:$0xff]
        %v4638 = vld [vmem:[%s527 + $0x7b0] sm:$0xff]
        %v4639 = vld [vmem:[%s527 + $0x7b8] sm:$0xff]
        %v4640 = vld [vmem:[%s527 + $0x7c0] sm:$0xff]
        %v4641 = vld [vmem:[%s527 + $0x7c8] sm:$0xff]
        %v4642 = vld [vmem:[%s527 + $0x7d0] sm:$0xff]
        %v4643 = vld [vmem:[%s527 + $0x7d8] sm:$0xff]
        %v4644 = vld [vmem:[%s527 + $0x7e0] sm:$0xff]
        %v4645 = vld [vmem:[%s527 + $0x7e8] sm:$0xff]
        %v4646 = vld [vmem:[%s527 + $0x7f0] sm:$0xff]
        %v4647 = vld [vmem:[%s527 + $0x7f8] sm:$0xff]
        %v4648 = vld [vmem:[%s536] sm:$0xff]
        %v4649 = vld [vmem:[%s536 + $0x8] sm:$0xff]
        %v4652 = vlaneseq
        %v4653 = vshrl.u32 %v4652, 7
        %v4654 = vsub.s32 0, %v4653
        %v4655 = vrot.slane %v4648, %v4654
        %v4656 = vlaneseq
        %v4657 = vshrl.u32 %v4656, 7
        %v4658 = vsub.s32 1, %v4657
        %v4659 = vrot.slane %v4648, %v4658
        %v4660 = vlaneseq
        %v4661 = vshrl.u32 %v4660, 7
        %v4662 = vsub.s32 2, %v4661
        %v4663 = vrot.slane %v4648, %v4662
        %v4664 = vlaneseq
        %v4665 = vshrl.u32 %v4664, 7
        %v4666 = vsub.s32 3, %v4665
        %v4667 = vrot.slane %v4648, %v4666
        %v4668 = vlaneseq
        %v4669 = vshrl.u32 %v4668, 7
        %v4670 = vsub.s32 4, %v4669
        %v4671 = vrot.slane %v4648, %v4670
        %v4672 = vlaneseq
        %v4673 = vshrl.u32 %v4672, 7
        %v4674 = vsub.s32 5, %v4673
        %v4675 = vrot.slane %v4648, %v4674
        %v4676 = vlaneseq
        %v4677 = vshrl.u32 %v4676, 7
        %v4678 = vsub.s32 6, %v4677
        %v4679 = vrot.slane %v4648, %v4678
        %v4680 = vlaneseq
        %v4681 = vshrl.u32 %v4680, 7
        %v4682 = vsub.s32 7, %v4681
        %v4683 = vrot.slane %v4648, %v4682
        %v4684 = vlaneseq
        %v4685 = vshrl.u32 %v4684, 7
        %v4686 = vsub.s32 0, %v4685
        %v4687 = vrot.slane %v4649, %v4686
        %v4688 = vlaneseq
        %v4689 = vshrl.u32 %v4688, 7
        %v4690 = vsub.s32 1, %v4689
        %v4691 = vrot.slane %v4649, %v4690
        %v4692 = vlaneseq
        %v4693 = vshrl.u32 %v4692, 7
        %v4694 = vsub.s32 2, %v4693
        %v4695 = vrot.slane %v4649, %v4694
        %v4696 = vlaneseq
        %v4697 = vshrl.u32 %v4696, 7
        %v4698 = vsub.s32 3, %v4697
        %v4699 = vrot.slane %v4649, %v4698
        %v4700 = vlaneseq
        %v4701 = vshrl.u32 %v4700, 7
        %v4702 = vsub.s32 4, %v4701
        %v4703 = vrot.slane %v4649, %v4702
        %v4704 = vlaneseq
        %v4705 = vshrl.u32 %v4704, 7
        %v4706 = vsub.s32 5, %v4705
        %v4707 = vrot.slane %v4649, %v4706
        %v4708 = vlaneseq
        %v4709 = vshrl.u32 %v4708, 7
        %v4710 = vsub.s32 6, %v4709
        %v4711 = vrot.slane %v4649, %v4710
        %v4712 = vlaneseq
        %v4713 = vshrl.u32 %v4712, 7
        %v4714 = vsub.s32 7, %v4713
        %v4715 = vrot.slane %v4649, %v4714
        %v4988 = vunpack.c.l.b16 %v4392
        %v4989 = vunpack.c.h.b16 %v4392
        %v4990 = vunpack.c.l.b16 %v4393
        %v4991 = vunpack.c.h.b16 %v4393
        %v4992 = vunpack.c.l.b16 %v4394
        %v4993 = vunpack.c.h.b16 %v4394
        %v4994 = vunpack.c.l.b16 %v4395
        %v4995 = vunpack.c.h.b16 %v4395
        %v4996 = vunpack.c.l.b16 %v4396
        %v4997 = vunpack.c.h.b16 %v4396
        %v4998 = vunpack.c.l.b16 %v4397
        %v4999 = vunpack.c.h.b16 %v4397
        %v5000 = vunpack.c.l.b16 %v4398
        %v5001 = vunpack.c.h.b16 %v4398
        %v5002 = vunpack.c.l.b16 %v4399
        %v5003 = vunpack.c.h.b16 %v4399
        %v5004 = vunpack.c.l.b16 %v4400
        %v5005 = vunpack.c.h.b16 %v4400
        %v5006 = vunpack.c.l.b16 %v4401
        %v5007 = vunpack.c.h.b16 %v4401
        %v5008 = vunpack.c.l.b16 %v4402
        %v5009 = vunpack.c.h.b16 %v4402
        %v5010 = vunpack.c.l.b16 %v4403
        %v5011 = vunpack.c.h.b16 %v4403
        %v5012 = vunpack.c.l.b16 %v4404
        %v5013 = vunpack.c.h.b16 %v4404
        %v5014 = vunpack.c.l.b16 %v4405
        %v5015 = vunpack.c.h.b16 %v4405
        %v5016 = vunpack.c.l.b16 %v4406
        %v5017 = vunpack.c.h.b16 %v4406
        %v5018 = vunpack.c.l.b16 %v4407
        %v5019 = vunpack.c.h.b16 %v4407
        %v5020 = vunpack.c.l.b16 %v4408
        %v5021 = vunpack.c.h.b16 %v4408
        %v5022 = vunpack.c.l.b16 %v4409
        %v5023 = vunpack.c.h.b16 %v4409
        %v5024 = vunpack.c.l.b16 %v4410
        %v5025 = vunpack.c.h.b16 %v4410
        %v5026 = vunpack.c.l.b16 %v4411
        %v5027 = vunpack.c.h.b16 %v4411
        %v5028 = vunpack.c.l.b16 %v4412
        %v5029 = vunpack.c.h.b16 %v4412
        %v5030 = vunpack.c.l.b16 %v4413
        %v5031 = vunpack.c.h.b16 %v4413
        %v5032 = vunpack.c.l.b16 %v4414
        %v5033 = vunpack.c.h.b16 %v4414
        %v5034 = vunpack.c.l.b16 %v4415
        %v5035 = vunpack.c.h.b16 %v4415
        %v5036 = vunpack.c.l.b16 %v4416
        %v5037 = vunpack.c.h.b16 %v4416
        %v5038 = vunpack.c.l.b16 %v4417
        %v5039 = vunpack.c.h.b16 %v4417
        %v5040 = vunpack.c.l.b16 %v4418
        %v5041 = vunpack.c.h.b16 %v4418
        %v5042 = vunpack.c.l.b16 %v4419
        %v5043 = vunpack.c.h.b16 %v4419
        %v5044 = vunpack.c.l.b16 %v4420
        %v5045 = vunpack.c.h.b16 %v4420
        %v5046 = vunpack.c.l.b16 %v4421
        %v5047 = vunpack.c.h.b16 %v4421
        %v5048 = vunpack.c.l.b16 %v4422
        %v5049 = vunpack.c.h.b16 %v4422
        %v5050 = vunpack.c.l.b16 %v4423
        %v5051 = vunpack.c.h.b16 %v4423
        %v5052 = vunpack.c.l.b16 %v4424
        %v5053 = vunpack.c.h.b16 %v4424
        %v5054 = vunpack.c.l.b16 %v4425
        %v5055 = vunpack.c.h.b16 %v4425
        %v5056 = vunpack.c.l.b16 %v4426
        %v5057 = vunpack.c.h.b16 %v4426
        %v5058 = vunpack.c.l.b16 %v4427
        %v5059 = vunpack.c.h.b16 %v4427
        %v5060 = vunpack.c.l.b16 %v4428
        %v5061 = vunpack.c.h.b16 %v4428
        %v5062 = vunpack.c.l.b16 %v4429
        %v5063 = vunpack.c.h.b16 %v4429
        %v5064 = vunpack.c.l.b16 %v4430
        %v5065 = vunpack.c.h.b16 %v4430
        %v5066 = vunpack.c.l.b16 %v4431
        %v5067 = vunpack.c.h.b16 %v4431
        %v5068 = vunpack.c.l.b16 %v4432
        %v5069 = vunpack.c.h.b16 %v4432
        %v5070 = vunpack.c.l.b16 %v4433
        %v5071 = vunpack.c.h.b16 %v4433
        %v5072 = vunpack.c.l.b16 %v4434
        %v5073 = vunpack.c.h.b16 %v4434
        %v5074 = vunpack.c.l.b16 %v4435
        %v5075 = vunpack.c.h.b16 %v4435
        %v5076 = vunpack.c.l.b16 %v4436
        %v5077 = vunpack.c.h.b16 %v4436
        %v5078 = vunpack.c.l.b16 %v4437
        %v5079 = vunpack.c.h.b16 %v4437
        %v5080 = vunpack.c.l.b16 %v4438
        %v5081 = vunpack.c.h.b16 %v4438
        %v5082 = vunpack.c.l.b16 %v4439
        %v5083 = vunpack.c.h.b16 %v4439
        %v5084 = vunpack.c.l.b16 %v4440
        %v5085 = vunpack.c.h.b16 %v4440
        %v5086 = vunpack.c.l.b16 %v4441
        %v5087 = vunpack.c.h.b16 %v4441
        %v5088 = vunpack.c.l.b16 %v4442
        %v5089 = vunpack.c.h.b16 %v4442
        %v5090 = vunpack.c.l.b16 %v4443
        %v5091 = vunpack.c.h.b16 %v4443
        %v5092 = vunpack.c.l.b16 %v4444
        %v5093 = vunpack.c.h.b16 %v4444
        %v5094 = vunpack.c.l.b16 %v4445
        %v5095 = vunpack.c.h.b16 %v4445
        %v5096 = vunpack.c.l.b16 %v4446
        %v5097 = vunpack.c.h.b16 %v4446
        %v5098 = vunpack.c.l.b16 %v4447
        %v5099 = vunpack.c.h.b16 %v4447
        %v5100 = vunpack.c.l.b16 %v4448
        %v5101 = vunpack.c.h.b16 %v4448
        %v5102 = vunpack.c.l.b16 %v4449
        %v5103 = vunpack.c.h.b16 %v4449
        %v5104 = vunpack.c.l.b16 %v4450
        %v5105 = vunpack.c.h.b16 %v4450
        %v5106 = vunpack.c.l.b16 %v4451
        %v5107 = vunpack.c.h.b16 %v4451
        %v5108 = vunpack.c.l.b16 %v4452
        %v5109 = vunpack.c.h.b16 %v4452
        %v5110 = vunpack.c.l.b16 %v4453
        %v5111 = vunpack.c.h.b16 %v4453
        %v5112 = vunpack.c.l.b16 %v4454
        %v5113 = vunpack.c.h.b16 %v4454
        %v5114 = vunpack.c.l.b16 %v4455
        %v5115 = vunpack.c.h.b16 %v4455
        %v5116 = vunpack.c.l.b16 %v4456
        %v5117 = vunpack.c.h.b16 %v4456
        %v5118 = vunpack.c.l.b16 %v4457
        %v5119 = vunpack.c.h.b16 %v4457
        %v5120 = vunpack.c.l.b16 %v4458
        %v5121 = vunpack.c.h.b16 %v4458
        %v5122 = vunpack.c.l.b16 %v4459
        %v5123 = vunpack.c.h.b16 %v4459
        %v5124 = vunpack.c.l.b16 %v4460
        %v5125 = vunpack.c.h.b16 %v4460
        %v5126 = vunpack.c.l.b16 %v4461
        %v5127 = vunpack.c.h.b16 %v4461
        %v5128 = vunpack.c.l.b16 %v4462
        %v5129 = vunpack.c.h.b16 %v4462
        %v5130 = vunpack.c.l.b16 %v4463
        %v5131 = vunpack.c.h.b16 %v4463
        %v5132 = vunpack.c.l.b16 %v4464
        %v5133 = vunpack.c.h.b16 %v4464
        %v5134 = vunpack.c.l.b16 %v4465
        %v5135 = vunpack.c.h.b16 %v4465
        %v5136 = vunpack.c.l.b16 %v4466
        %v5137 = vunpack.c.h.b16 %v4466
        %v5138 = vunpack.c.l.b16 %v4467
        %v5139 = vunpack.c.h.b16 %v4467
        %v5140 = vunpack.c.l.b16 %v4468
        %v5141 = vunpack.c.h.b16 %v4468
        %v5142 = vunpack.c.l.b16 %v4469
        %v5143 = vunpack.c.h.b16 %v4469
        %v5144 = vunpack.c.l.b16 %v4470
        %v5145 = vunpack.c.h.b16 %v4470
        %v5146 = vunpack.c.l.b16 %v4471
        %v5147 = vunpack.c.h.b16 %v4471
        %v5148 = vunpack.c.l.b16 %v4472
        %v5149 = vunpack.c.h.b16 %v4472
        %v5150 = vunpack.c.l.b16 %v4473
        %v5151 = vunpack.c.h.b16 %v4473
        %v5152 = vunpack.c.l.b16 %v4474
        %v5153 = vunpack.c.h.b16 %v4474
        %v5154 = vunpack.c.l.b16 %v4475
        %v5155 = vunpack.c.h.b16 %v4475
        %v5156 = vunpack.c.l.b16 %v4476
        %v5157 = vunpack.c.h.b16 %v4476
        %v5158 = vunpack.c.l.b16 %v4477
        %v5159 = vunpack.c.h.b16 %v4477
        %v5160 = vunpack.c.l.b16 %v4478
        %v5161 = vunpack.c.h.b16 %v4478
        %v5162 = vunpack.c.l.b16 %v4479
        %v5163 = vunpack.c.h.b16 %v4479
        %v5164 = vunpack.c.l.b16 %v4480
        %v5165 = vunpack.c.h.b16 %v4480
        %v5166 = vunpack.c.l.b16 %v4481
        %v5167 = vunpack.c.h.b16 %v4481
        %v5168 = vunpack.c.l.b16 %v4482
        %v5169 = vunpack.c.h.b16 %v4482
        %v5170 = vunpack.c.l.b16 %v4483
        %v5171 = vunpack.c.h.b16 %v4483
        %v5172 = vunpack.c.l.b16 %v4484
        %v5173 = vunpack.c.h.b16 %v4484
        %v5174 = vunpack.c.l.b16 %v4485
        %v5175 = vunpack.c.h.b16 %v4485
        %v5176 = vunpack.c.l.b16 %v4486
        %v5177 = vunpack.c.h.b16 %v4486
        %v5178 = vunpack.c.l.b16 %v4487
        %v5179 = vunpack.c.h.b16 %v4487
        %v5180 = vunpack.c.l.b16 %v4488
        %v5181 = vunpack.c.h.b16 %v4488
        %v5182 = vunpack.c.l.b16 %v4489
        %v5183 = vunpack.c.h.b16 %v4489
        %v5184 = vunpack.c.l.b16 %v4490
        %v5185 = vunpack.c.h.b16 %v4490
        %v5186 = vunpack.c.l.b16 %v4491
        %v5187 = vunpack.c.h.b16 %v4491
        %v5188 = vunpack.c.l.b16 %v4492
        %v5189 = vunpack.c.h.b16 %v4492
        %v5190 = vunpack.c.l.b16 %v4493
        %v5191 = vunpack.c.h.b16 %v4493
        %v5192 = vunpack.c.l.b16 %v4494
        %v5193 = vunpack.c.h.b16 %v4494
        %v5194 = vunpack.c.l.b16 %v4495
        %v5195 = vunpack.c.h.b16 %v4495
        %v5196 = vunpack.c.l.b16 %v4496
        %v5197 = vunpack.c.h.b16 %v4496
        %v5198 = vunpack.c.l.b16 %v4497
        %v5199 = vunpack.c.h.b16 %v4497
        %v5200 = vunpack.c.l.b16 %v4498
        %v5201 = vunpack.c.h.b16 %v4498
        %v5202 = vunpack.c.l.b16 %v4499
        %v5203 = vunpack.c.h.b16 %v4499
        %v5204 = vunpack.c.l.b16 %v4500
        %v5205 = vunpack.c.h.b16 %v4500
        %v5206 = vunpack.c.l.b16 %v4501
        %v5207 = vunpack.c.h.b16 %v4501
        %v5208 = vunpack.c.l.b16 %v4502
        %v5209 = vunpack.c.h.b16 %v4502
        %v5210 = vunpack.c.l.b16 %v4503
        %v5211 = vunpack.c.h.b16 %v4503
        %v5212 = vunpack.c.l.b16 %v4504
        %v5213 = vunpack.c.h.b16 %v4504
        %v5214 = vunpack.c.l.b16 %v4505
        %v5215 = vunpack.c.h.b16 %v4505
        %v5216 = vunpack.c.l.b16 %v4506
        %v5217 = vunpack.c.h.b16 %v4506
        %v5218 = vunpack.c.l.b16 %v4507
        %v5219 = vunpack.c.h.b16 %v4507
        %v5220 = vunpack.c.l.b16 %v4508
        %v5221 = vunpack.c.h.b16 %v4508
        %v5222 = vunpack.c.l.b16 %v4509
        %v5223 = vunpack.c.h.b16 %v4509
        %v5224 = vunpack.c.l.b16 %v4510
        %v5225 = vunpack.c.h.b16 %v4510
        %v5226 = vunpack.c.l.b16 %v4511
        %v5227 = vunpack.c.h.b16 %v4511
        %v5228 = vunpack.c.l.b16 %v4512
        %v5229 = vunpack.c.h.b16 %v4512
        %v5230 = vunpack.c.l.b16 %v4513
        %v5231 = vunpack.c.h.b16 %v4513
        %v5232 = vunpack.c.l.b16 %v4514
        %v5233 = vunpack.c.h.b16 %v4514
        %v5234 = vunpack.c.l.b16 %v4515
        %v5235 = vunpack.c.h.b16 %v4515
        %v5236 = vunpack.c.l.b16 %v4516
        %v5237 = vunpack.c.h.b16 %v4516
        %v5238 = vunpack.c.l.b16 %v4517
        %v5239 = vunpack.c.h.b16 %v4517
        %v5240 = vunpack.c.l.b16 %v4518
        %v5241 = vunpack.c.h.b16 %v4518
        %v5242 = vunpack.c.l.b16 %v4519
        %v5243 = vunpack.c.h.b16 %v4519
        %v5244 = vunpack.c.l.b16 %v4520
        %v5245 = vunpack.c.h.b16 %v4520
        %v5246 = vunpack.c.l.b16 %v4521
        %v5247 = vunpack.c.h.b16 %v4521
        %v5248 = vunpack.c.l.b16 %v4522
        %v5249 = vunpack.c.h.b16 %v4522
        %v5250 = vunpack.c.l.b16 %v4523
        %v5251 = vunpack.c.h.b16 %v4523
        %v5252 = vunpack.c.l.b16 %v4524
        %v5253 = vunpack.c.h.b16 %v4524
        %v5254 = vunpack.c.l.b16 %v4525
        %v5255 = vunpack.c.h.b16 %v4525
        %v5256 = vunpack.c.l.b16 %v4526
        %v5257 = vunpack.c.h.b16 %v4526
        %v5258 = vunpack.c.l.b16 %v4527
        %v5259 = vunpack.c.h.b16 %v4527
        %v5260 = vunpack.c.l.b16 %v4528
        %v5261 = vunpack.c.h.b16 %v4528
        %v5262 = vunpack.c.l.b16 %v4529
        %v5263 = vunpack.c.h.b16 %v4529
        %v5264 = vunpack.c.l.b16 %v4530
        %v5265 = vunpack.c.h.b16 %v4530
        %v5266 = vunpack.c.l.b16 %v4531
        %v5267 = vunpack.c.h.b16 %v4531
        %v5268 = vunpack.c.l.b16 %v4532
        %v5269 = vunpack.c.h.b16 %v4532
        %v5270 = vunpack.c.l.b16 %v4533
        %v5271 = vunpack.c.h.b16 %v4533
        %v5272 = vunpack.c.l.b16 %v4534
        %v5273 = vunpack.c.h.b16 %v4534
        %v5274 = vunpack.c.l.b16 %v4535
        %v5275 = vunpack.c.h.b16 %v4535
        %v5276 = vunpack.c.l.b16 %v4536
        %v5277 = vunpack.c.h.b16 %v4536
        %v5278 = vunpack.c.l.b16 %v4537
        %v5279 = vunpack.c.h.b16 %v4537
        %v5280 = vunpack.c.l.b16 %v4538
        %v5281 = vunpack.c.h.b16 %v4538
        %v5282 = vunpack.c.l.b16 %v4539
        %v5283 = vunpack.c.h.b16 %v4539
        %v5284 = vunpack.c.l.b16 %v4540
        %v5285 = vunpack.c.h.b16 %v4540
        %v5286 = vunpack.c.l.b16 %v4541
        %v5287 = vunpack.c.h.b16 %v4541
        %v5288 = vunpack.c.l.b16 %v4542
        %v5289 = vunpack.c.h.b16 %v4542
        %v5290 = vunpack.c.l.b16 %v4543
        %v5291 = vunpack.c.h.b16 %v4543
        %v5292 = vunpack.c.l.b16 %v4544
        %v5293 = vunpack.c.h.b16 %v4544
        %v5294 = vunpack.c.l.b16 %v4545
        %v5295 = vunpack.c.h.b16 %v4545
        %v5296 = vunpack.c.l.b16 %v4546
        %v5297 = vunpack.c.h.b16 %v4546
        %v5298 = vunpack.c.l.b16 %v4547
        %v5299 = vunpack.c.h.b16 %v4547
        %v5300 = vunpack.c.l.b16 %v4548
        %v5301 = vunpack.c.h.b16 %v4548
        %v5302 = vunpack.c.l.b16 %v4549
        %v5303 = vunpack.c.h.b16 %v4549
        %v5304 = vunpack.c.l.b16 %v4550
        %v5305 = vunpack.c.h.b16 %v4550
        %v5306 = vunpack.c.l.b16 %v4551
        %v5307 = vunpack.c.h.b16 %v4551
        %v5308 = vunpack.c.l.b16 %v4552
        %v5309 = vunpack.c.h.b16 %v4552
        %v5310 = vunpack.c.l.b16 %v4553
        %v5311 = vunpack.c.h.b16 %v4553
        %v5312 = vunpack.c.l.b16 %v4554
        %v5313 = vunpack.c.h.b16 %v4554
        %v5314 = vunpack.c.l.b16 %v4555
        %v5315 = vunpack.c.h.b16 %v4555
        %v5316 = vunpack.c.l.b16 %v4556
        %v5317 = vunpack.c.h.b16 %v4556
        %v5318 = vunpack.c.l.b16 %v4557
        %v5319 = vunpack.c.h.b16 %v4557
        %v5320 = vunpack.c.l.b16 %v4558
        %v5321 = vunpack.c.h.b16 %v4558
        %v5322 = vunpack.c.l.b16 %v4559
        %v5323 = vunpack.c.h.b16 %v4559
        %v5324 = vunpack.c.l.b16 %v4560
        %v5325 = vunpack.c.h.b16 %v4560
        %v5326 = vunpack.c.l.b16 %v4561
        %v5327 = vunpack.c.h.b16 %v4561
        %v5328 = vunpack.c.l.b16 %v4562
        %v5329 = vunpack.c.h.b16 %v4562
        %v5330 = vunpack.c.l.b16 %v4563
        %v5331 = vunpack.c.h.b16 %v4563
        %v5332 = vunpack.c.l.b16 %v4564
        %v5333 = vunpack.c.h.b16 %v4564
        %v5334 = vunpack.c.l.b16 %v4565
        %v5335 = vunpack.c.h.b16 %v4565
        %v5336 = vunpack.c.l.b16 %v4566
        %v5337 = vunpack.c.h.b16 %v4566
        %v5338 = vunpack.c.l.b16 %v4567
        %v5339 = vunpack.c.h.b16 %v4567
        %v5340 = vunpack.c.l.b16 %v4568
        %v5341 = vunpack.c.h.b16 %v4568
        %v5342 = vunpack.c.l.b16 %v4569
        %v5343 = vunpack.c.h.b16 %v4569
        %v5344 = vunpack.c.l.b16 %v4570
        %v5345 = vunpack.c.h.b16 %v4570
        %v5346 = vunpack.c.l.b16 %v4571
        %v5347 = vunpack.c.h.b16 %v4571
        %v5348 = vunpack.c.l.b16 %v4572
        %v5349 = vunpack.c.h.b16 %v4572
        %v5350 = vunpack.c.l.b16 %v4573
        %v5351 = vunpack.c.h.b16 %v4573
        %v5352 = vunpack.c.l.b16 %v4574
        %v5353 = vunpack.c.h.b16 %v4574
        %v5354 = vunpack.c.l.b16 %v4575
        %v5355 = vunpack.c.h.b16 %v4575
        %v5356 = vunpack.c.l.b16 %v4576
        %v5357 = vunpack.c.h.b16 %v4576
        %v5358 = vunpack.c.l.b16 %v4577
        %v5359 = vunpack.c.h.b16 %v4577
        %v5360 = vunpack.c.l.b16 %v4578
        %v5361 = vunpack.c.h.b16 %v4578
        %v5362 = vunpack.c.l.b16 %v4579
        %v5363 = vunpack.c.h.b16 %v4579
        %v5364 = vunpack.c.l.b16 %v4580
        %v5365 = vunpack.c.h.b16 %v4580
        %v5366 = vunpack.c.l.b16 %v4581
        %v5367 = vunpack.c.h.b16 %v4581
        %v5368 = vunpack.c.l.b16 %v4582
        %v5369 = vunpack.c.h.b16 %v4582
        %v5370 = vunpack.c.l.b16 %v4583
        %v5371 = vunpack.c.h.b16 %v4583
        %v5372 = vunpack.c.l.b16 %v4584
        %v5373 = vunpack.c.h.b16 %v4584
        %v5374 = vunpack.c.l.b16 %v4585
        %v5375 = vunpack.c.h.b16 %v4585
        %v5376 = vunpack.c.l.b16 %v4586
        %v5377 = vunpack.c.h.b16 %v4586
        %v5378 = vunpack.c.l.b16 %v4587
        %v5379 = vunpack.c.h.b16 %v4587
        %v5380 = vunpack.c.l.b16 %v4588
        %v5381 = vunpack.c.h.b16 %v4588
        %v5382 = vunpack.c.l.b16 %v4589
        %v5383 = vunpack.c.h.b16 %v4589
        %v5384 = vunpack.c.l.b16 %v4590
        %v5385 = vunpack.c.h.b16 %v4590
        %v5386 = vunpack.c.l.b16 %v4591
        %v5387 = vunpack.c.h.b16 %v4591
        %v5388 = vunpack.c.l.b16 %v4592
        %v5389 = vunpack.c.h.b16 %v4592
        %v5390 = vunpack.c.l.b16 %v4593
        %v5391 = vunpack.c.h.b16 %v4593
        %v5392 = vunpack.c.l.b16 %v4594
        %v5393 = vunpack.c.h.b16 %v4594
        %v5394 = vunpack.c.l.b16 %v4595
        %v5395 = vunpack.c.h.b16 %v4595
        %v5396 = vunpack.c.l.b16 %v4596
        %v5397 = vunpack.c.h.b16 %v4596
        %v5398 = vunpack.c.l.b16 %v4597
        %v5399 = vunpack.c.h.b16 %v4597
        %v5400 = vunpack.c.l.b16 %v4598
        %v5401 = vunpack.c.h.b16 %v4598
        %v5402 = vunpack.c.l.b16 %v4599
        %v5403 = vunpack.c.h.b16 %v4599
        %v5404 = vunpack.c.l.b16 %v4600
        %v5405 = vunpack.c.h.b16 %v4600
        %v5406 = vunpack.c.l.b16 %v4601
        %v5407 = vunpack.c.h.b16 %v4601
        %v5408 = vunpack.c.l.b16 %v4602
        %v5409 = vunpack.c.h.b16 %v4602
        %v5410 = vunpack.c.l.b16 %v4603
        %v5411 = vunpack.c.h.b16 %v4603
        %v5412 = vunpack.c.l.b16 %v4604
        %v5413 = vunpack.c.h.b16 %v4604
        %v5414 = vunpack.c.l.b16 %v4605
        %v5415 = vunpack.c.h.b16 %v4605
        %v5416 = vunpack.c.l.b16 %v4606
        %v5417 = vunpack.c.h.b16 %v4606
        %v5418 = vunpack.c.l.b16 %v4607
        %v5419 = vunpack.c.h.b16 %v4607
        %v5420 = vunpack.c.l.b16 %v4608
        %v5421 = vunpack.c.h.b16 %v4608
        %v5422 = vunpack.c.l.b16 %v4609
        %v5423 = vunpack.c.h.b16 %v4609
        %v5424 = vunpack.c.l.b16 %v4610
        %v5425 = vunpack.c.h.b16 %v4610
        %v5426 = vunpack.c.l.b16 %v4611
        %v5427 = vunpack.c.h.b16 %v4611
        %v5428 = vunpack.c.l.b16 %v4612
        %v5429 = vunpack.c.h.b16 %v4612
        %v5430 = vunpack.c.l.b16 %v4613
        %v5431 = vunpack.c.h.b16 %v4613
        %v5432 = vunpack.c.l.b16 %v4614
        %v5433 = vunpack.c.h.b16 %v4614
        %v5434 = vunpack.c.l.b16 %v4615
        %v5435 = vunpack.c.h.b16 %v4615
        %v5436 = vunpack.c.l.b16 %v4616
        %v5437 = vunpack.c.h.b16 %v4616
        %v5438 = vunpack.c.l.b16 %v4617
        %v5439 = vunpack.c.h.b16 %v4617
        %v5440 = vunpack.c.l.b16 %v4618
        %v5441 = vunpack.c.h.b16 %v4618
        %v5442 = vunpack.c.l.b16 %v4619
        %v5443 = vunpack.c.h.b16 %v4619
        %v5444 = vunpack.c.l.b16 %v4620
        %v5445 = vunpack.c.h.b16 %v4620
        %v5446 = vunpack.c.l.b16 %v4621
        %v5447 = vunpack.c.h.b16 %v4621
        %v5448 = vunpack.c.l.b16 %v4622
        %v5449 = vunpack.c.h.b16 %v4622
        %v5450 = vunpack.c.l.b16 %v4623
        %v5451 = vunpack.c.h.b16 %v4623
        %v5452 = vunpack.c.l.b16 %v4624
        %v5453 = vunpack.c.h.b16 %v4624
        %v5454 = vunpack.c.l.b16 %v4625
        %v5455 = vunpack.c.h.b16 %v4625
        %v5456 = vunpack.c.l.b16 %v4626
        %v5457 = vunpack.c.h.b16 %v4626
        %v5458 = vunpack.c.l.b16 %v4627
        %v5459 = vunpack.c.h.b16 %v4627
        %v5460 = vunpack.c.l.b16 %v4628
        %v5461 = vunpack.c.h.b16 %v4628
        %v5462 = vunpack.c.l.b16 %v4629
        %v5463 = vunpack.c.h.b16 %v4629
        %v5464 = vunpack.c.l.b16 %v4630
        %v5465 = vunpack.c.h.b16 %v4630
        %v5466 = vunpack.c.l.b16 %v4631
        %v5467 = vunpack.c.h.b16 %v4631
        %v5468 = vunpack.c.l.b16 %v4632
        %v5469 = vunpack.c.h.b16 %v4632
        %v5470 = vunpack.c.l.b16 %v4633
        %v5471 = vunpack.c.h.b16 %v4633
        %v5472 = vunpack.c.l.b16 %v4634
        %v5473 = vunpack.c.h.b16 %v4634
        %v5474 = vunpack.c.l.b16 %v4635
        %v5475 = vunpack.c.h.b16 %v4635
        %v5476 = vunpack.c.l.b16 %v4636
        %v5477 = vunpack.c.h.b16 %v4636
        %v5478 = vunpack.c.l.b16 %v4637
        %v5479 = vunpack.c.h.b16 %v4637
        %v5480 = vunpack.c.l.b16 %v4638
        %v5481 = vunpack.c.h.b16 %v4638
        %v5482 = vunpack.c.l.b16 %v4639
        %v5483 = vunpack.c.h.b16 %v4639
        %v5484 = vunpack.c.l.b16 %v4640
        %v5485 = vunpack.c.h.b16 %v4640
        %v5486 = vunpack.c.l.b16 %v4641
        %v5487 = vunpack.c.h.b16 %v4641
        %v5488 = vunpack.c.l.b16 %v4642
        %v5489 = vunpack.c.h.b16 %v4642
        %v5490 = vunpack.c.l.b16 %v4643
        %v5491 = vunpack.c.h.b16 %v4643
        %v5492 = vunpack.c.l.b16 %v4644
        %v5493 = vunpack.c.h.b16 %v4644
        %v5494 = vunpack.c.l.b16 %v4645
        %v5495 = vunpack.c.h.b16 %v4645
        %v5496 = vunpack.c.l.b16 %v4646
        %v5497 = vunpack.c.h.b16 %v4646
        %v5498 = vunpack.c.l.b16 %v4647
        %v5499 = vunpack.c.h.b16 %v4647
        %v5500 = vpack.c.b16 %v5004, %v4988
        %v5501 = vpack.c.b16 %v5005, %v4989
        %v5502 = vpack.c.b16 %v5006, %v4990
        %v5503 = vpack.c.b16 %v5007, %v4991
        %v5504 = vpack.c.b16 %v5008, %v4992
        %v5505 = vpack.c.b16 %v5009, %v4993
        %v5506 = vpack.c.b16 %v5010, %v4994
        %v5507 = vpack.c.b16 %v5011, %v4995
        %v5508 = vpack.c.b16 %v5012, %v4996
        %v5509 = vpack.c.b16 %v5013, %v4997
        %v5510 = vpack.c.b16 %v5014, %v4998
        %v5511 = vpack.c.b16 %v5015, %v4999
        %v5512 = vpack.c.b16 %v5016, %v5000
        %v5513 = vpack.c.b16 %v5017, %v5001
        %v5514 = vpack.c.b16 %v5018, %v5002
        %v5515 = vpack.c.b16 %v5019, %v5003
        %v5516 = vpack.c.b16 %v5036, %v5020
        %v5517 = vpack.c.b16 %v5037, %v5021
        %v5518 = vpack.c.b16 %v5038, %v5022
        %v5519 = vpack.c.b16 %v5039, %v5023
        %v5520 = vpack.c.b16 %v5040, %v5024
        %v5521 = vpack.c.b16 %v5041, %v5025
        %v5522 = vpack.c.b16 %v5042, %v5026
        %v5523 = vpack.c.b16 %v5043, %v5027
        %v5524 = vpack.c.b16 %v5044, %v5028
        %v5525 = vpack.c.b16 %v5045, %v5029
        %v5526 = vpack.c.b16 %v5046, %v5030
        %v5527 = vpack.c.b16 %v5047, %v5031
        %v5528 = vpack.c.b16 %v5048, %v5032
        %v5529 = vpack.c.b16 %v5049, %v5033
        %v5530 = vpack.c.b16 %v5050, %v5034
        %v5531 = vpack.c.b16 %v5051, %v5035
        %v5532 = vpack.c.b16 %v5068, %v5052
        %v5533 = vpack.c.b16 %v5069, %v5053
        %v5534 = vpack.c.b16 %v5070, %v5054
        %v5535 = vpack.c.b16 %v5071, %v5055
        %v5536 = vpack.c.b16 %v5072, %v5056
        %v5537 = vpack.c.b16 %v5073, %v5057
        %v5538 = vpack.c.b16 %v5074, %v5058
        %v5539 = vpack.c.b16 %v5075, %v5059
        %v5540 = vpack.c.b16 %v5076, %v5060
        %v5541 = vpack.c.b16 %v5077, %v5061
        %v5542 = vpack.c.b16 %v5078, %v5062
        %v5543 = vpack.c.b16 %v5079, %v5063
        %v5544 = vpack.c.b16 %v5080, %v5064
        %v5545 = vpack.c.b16 %v5081, %v5065
        %v5546 = vpack.c.b16 %v5082, %v5066
        %v5547 = vpack.c.b16 %v5083, %v5067
        %v5548 = vpack.c.b16 %v5100, %v5084
        %v5549 = vpack.c.b16 %v5101, %v5085
        %v5550 = vpack.c.b16 %v5102, %v5086
        %v5551 = vpack.c.b16 %v5103, %v5087
        %v5552 = vpack.c.b16 %v5104, %v5088
        %v5553 = vpack.c.b16 %v5105, %v5089
        %v5554 = vpack.c.b16 %v5106, %v5090
        %v5555 = vpack.c.b16 %v5107, %v5091
        %v5556 = vpack.c.b16 %v5108, %v5092
        %v5557 = vpack.c.b16 %v5109, %v5093
        %v5558 = vpack.c.b16 %v5110, %v5094
        %v5559 = vpack.c.b16 %v5111, %v5095
        %v5560 = vpack.c.b16 %v5112, %v5096
        %v5561 = vpack.c.b16 %v5113, %v5097
        %v5562 = vpack.c.b16 %v5114, %v5098
        %v5563 = vpack.c.b16 %v5115, %v5099
        %v5564 = vpack.c.b16 %v5132, %v5116
        %v5565 = vpack.c.b16 %v5133, %v5117
        %v5566 = vpack.c.b16 %v5134, %v5118
        %v5567 = vpack.c.b16 %v5135, %v5119
        %v5568 = vpack.c.b16 %v5136, %v5120
        %v5569 = vpack.c.b16 %v5137, %v5121
        %v5570 = vpack.c.b16 %v5138, %v5122
        %v5571 = vpack.c.b16 %v5139, %v5123
        %v5572 = vpack.c.b16 %v5140, %v5124
        %v5573 = vpack.c.b16 %v5141, %v5125
        %v5574 = vpack.c.b16 %v5142, %v5126
        %v5575 = vpack.c.b16 %v5143, %v5127
        %v5576 = vpack.c.b16 %v5144, %v5128
        %v5577 = vpack.c.b16 %v5145, %v5129
        %v5578 = vpack.c.b16 %v5146, %v5130
        %v5579 = vpack.c.b16 %v5147, %v5131
        %v5580 = vpack.c.b16 %v5164, %v5148
        %v5581 = vpack.c.b16 %v5165, %v5149
        %v5582 = vpack.c.b16 %v5166, %v5150
        %v5583 = vpack.c.b16 %v5167, %v5151
        %v5584 = vpack.c.b16 %v5168, %v5152
        %v5585 = vpack.c.b16 %v5169, %v5153
        %v5586 = vpack.c.b16 %v5170, %v5154
        %v5587 = vpack.c.b16 %v5171, %v5155
        %v5588 = vpack.c.b16 %v5172, %v5156
        %v5589 = vpack.c.b16 %v5173, %v5157
        %v5590 = vpack.c.b16 %v5174, %v5158
        %v5591 = vpack.c.b16 %v5175, %v5159
        %v5592 = vpack.c.b16 %v5176, %v5160
        %v5593 = vpack.c.b16 %v5177, %v5161
        %v5594 = vpack.c.b16 %v5178, %v5162
        %v5595 = vpack.c.b16 %v5179, %v5163
        %v5596 = vpack.c.b16 %v5196, %v5180
        %v5597 = vpack.c.b16 %v5197, %v5181
        %v5598 = vpack.c.b16 %v5198, %v5182
        %v5599 = vpack.c.b16 %v5199, %v5183
        %v5600 = vpack.c.b16 %v5200, %v5184
        %v5601 = vpack.c.b16 %v5201, %v5185
        %v5602 = vpack.c.b16 %v5202, %v5186
        %v5603 = vpack.c.b16 %v5203, %v5187
        %v5604 = vpack.c.b16 %v5204, %v5188
        %v5605 = vpack.c.b16 %v5205, %v5189
        %v5606 = vpack.c.b16 %v5206, %v5190
        %v5607 = vpack.c.b16 %v5207, %v5191
        %v5608 = vpack.c.b16 %v5208, %v5192
        %v5609 = vpack.c.b16 %v5209, %v5193
        %v5610 = vpack.c.b16 %v5210, %v5194
        %v5611 = vpack.c.b16 %v5211, %v5195
        %v5612 = vpack.c.b16 %v5228, %v5212
        %v5613 = vpack.c.b16 %v5229, %v5213
        %v5614 = vpack.c.b16 %v5230, %v5214
        %v5615 = vpack.c.b16 %v5231, %v5215
        %v5616 = vpack.c.b16 %v5232, %v5216
        %v5617 = vpack.c.b16 %v5233, %v5217
        %v5618 = vpack.c.b16 %v5234, %v5218
        %v5619 = vpack.c.b16 %v5235, %v5219
        %v5620 = vpack.c.b16 %v5236, %v5220
        %v5621 = vpack.c.b16 %v5237, %v5221
        %v5622 = vpack.c.b16 %v5238, %v5222
        %v5623 = vpack.c.b16 %v5239, %v5223
        %v5624 = vpack.c.b16 %v5240, %v5224
        %v5625 = vpack.c.b16 %v5241, %v5225
        %v5626 = vpack.c.b16 %v5242, %v5226
        %v5627 = vpack.c.b16 %v5243, %v5227
        %v5628 = vpack.c.b16 %v5260, %v5244
        %v5629 = vpack.c.b16 %v5261, %v5245
        %v5630 = vpack.c.b16 %v5262, %v5246
        %v5631 = vpack.c.b16 %v5263, %v5247
        %v5632 = vpack.c.b16 %v5264, %v5248
        %v5633 = vpack.c.b16 %v5265, %v5249
        %v5634 = vpack.c.b16 %v5266, %v5250
        %v5635 = vpack.c.b16 %v5267, %v5251
        %v5636 = vpack.c.b16 %v5268, %v5252
        %v5637 = vpack.c.b16 %v5269, %v5253
        %v5638 = vpack.c.b16 %v5270, %v5254
        %v5639 = vpack.c.b16 %v5271, %v5255
        %v5640 = vpack.c.b16 %v5272, %v5256
        %v5641 = vpack.c.b16 %v5273, %v5257
        %v5642 = vpack.c.b16 %v5274, %v5258
        %v5643 = vpack.c.b16 %v5275, %v5259
        %v5644 = vpack.c.b16 %v5292, %v5276
        %v5645 = vpack.c.b16 %v5293, %v5277
        %v5646 = vpack.c.b16 %v5294, %v5278
        %v5647 = vpack.c.b16 %v5295, %v5279
        %v5648 = vpack.c.b16 %v5296, %v5280
        %v5649 = vpack.c.b16 %v5297, %v5281
        %v5650 = vpack.c.b16 %v5298, %v5282
        %v5651 = vpack.c.b16 %v5299, %v5283
        %v5652 = vpack.c.b16 %v5300, %v5284
        %v5653 = vpack.c.b16 %v5301, %v5285
        %v5654 = vpack.c.b16 %v5302, %v5286
        %v5655 = vpack.c.b16 %v5303, %v5287
        %v5656 = vpack.c.b16 %v5304, %v5288
        %v5657 = vpack.c.b16 %v5305, %v5289
        %v5658 = vpack.c.b16 %v5306, %v5290
        %v5659 = vpack.c.b16 %v5307, %v5291
        %v5660 = vpack.c.b16 %v5324, %v5308
        %v5661 = vpack.c.b16 %v5325, %v5309
        %v5662 = vpack.c.b16 %v5326, %v5310
        %v5663 = vpack.c.b16 %v5327, %v5311
        %v5664 = vpack.c.b16 %v5328, %v5312
        %v5665 = vpack.c.b16 %v5329, %v5313
        %v5666 = vpack.c.b16 %v5330, %v5314
        %v5667 = vpack.c.b16 %v5331, %v5315
        %v5668 = vpack.c.b16 %v5332, %v5316
        %v5669 = vpack.c.b16 %v5333, %v5317
        %v5670 = vpack.c.b16 %v5334, %v5318
        %v5671 = vpack.c.b16 %v5335, %v5319
        %v5672 = vpack.c.b16 %v5336, %v5320
        %v5673 = vpack.c.b16 %v5337, %v5321
        %v5674 = vpack.c.b16 %v5338, %v5322
        %v5675 = vpack.c.b16 %v5339, %v5323
        %v5676 = vpack.c.b16 %v5356, %v5340
        %v5677 = vpack.c.b16 %v5357, %v5341
        %v5678 = vpack.c.b16 %v5358, %v5342
        %v5679 = vpack.c.b16 %v5359, %v5343
        %v5680 = vpack.c.b16 %v5360, %v5344
        %v5681 = vpack.c.b16 %v5361, %v5345
        %v5682 = vpack.c.b16 %v5362, %v5346
        %v5683 = vpack.c.b16 %v5363, %v5347
        %v5684 = vpack.c.b16 %v5364, %v5348
        %v5685 = vpack.c.b16 %v5365, %v5349
        %v5686 = vpack.c.b16 %v5366, %v5350
        %v5687 = vpack.c.b16 %v5367, %v5351
        %v5688 = vpack.c.b16 %v5368, %v5352
        %v5689 = vpack.c.b16 %v5369, %v5353
        %v5690 = vpack.c.b16 %v5370, %v5354
        %v5691 = vpack.c.b16 %v5371, %v5355
        %v5692 = vpack.c.b16 %v5388, %v5372
        %v5693 = vpack.c.b16 %v5389, %v5373
        %v5694 = vpack.c.b16 %v5390, %v5374
        %v5695 = vpack.c.b16 %v5391, %v5375
        %v5696 = vpack.c.b16 %v5392, %v5376
        %v5697 = vpack.c.b16 %v5393, %v5377
        %v5698 = vpack.c.b16 %v5394, %v5378
        %v5699 = vpack.c.b16 %v5395, %v5379
        %v5700 = vpack.c.b16 %v5396, %v5380
        %v5701 = vpack.c.b16 %v5397, %v5381
        %v5702 = vpack.c.b16 %v5398, %v5382
        %v5703 = vpack.c.b16 %v5399, %v5383
        %v5704 = vpack.c.b16 %v5400, %v5384
        %v5705 = vpack.c.b16 %v5401, %v5385
        %v5706 = vpack.c.b16 %v5402, %v5386
        %v5707 = vpack.c.b16 %v5403, %v5387
        %v5708 = vpack.c.b16 %v5420, %v5404
        %v5709 = vpack.c.b16 %v5421, %v5405
        %v5710 = vpack.c.b16 %v5422, %v5406
        %v5711 = vpack.c.b16 %v5423, %v5407
        %v5712 = vpack.c.b16 %v5424, %v5408
        %v5713 = vpack.c.b16 %v5425, %v5409
        %v5714 = vpack.c.b16 %v5426, %v5410
        %v5715 = vpack.c.b16 %v5427, %v5411
        %v5716 = vpack.c.b16 %v5428, %v5412
        %v5717 = vpack.c.b16 %v5429, %v5413
        %v5718 = vpack.c.b16 %v5430, %v5414
        %v5719 = vpack.c.b16 %v5431, %v5415
        %v5720 = vpack.c.b16 %v5432, %v5416
        %v5721 = vpack.c.b16 %v5433, %v5417
        %v5722 = vpack.c.b16 %v5434, %v5418
        %v5723 = vpack.c.b16 %v5435, %v5419
        %v5724 = vpack.c.b16 %v5452, %v5436
        %v5725 = vpack.c.b16 %v5453, %v5437
        %v5726 = vpack.c.b16 %v5454, %v5438
        %v5727 = vpack.c.b16 %v5455, %v5439
        %v5728 = vpack.c.b16 %v5456, %v5440
        %v5729 = vpack.c.b16 %v5457, %v5441
        %v5730 = vpack.c.b16 %v5458, %v5442
        %v5731 = vpack.c.b16 %v5459, %v5443
        %v5732 = vpack.c.b16 %v5460, %v5444
        %v5733 = vpack.c.b16 %v5461, %v5445
        %v5734 = vpack.c.b16 %v5462, %v5446
        %v5735 = vpack.c.b16 %v5463, %v5447
        %v5736 = vpack.c.b16 %v5464, %v5448
        %v5737 = vpack.c.b16 %v5465, %v5449
        %v5738 = vpack.c.b16 %v5466, %v5450
        %v5739 = vpack.c.b16 %v5467, %v5451
        %v5740 = vpack.c.b16 %v5484, %v5468
        %v5741 = vpack.c.b16 %v5485, %v5469
        %v5742 = vpack.c.b16 %v5486, %v5470
        %v5743 = vpack.c.b16 %v5487, %v5471
        %v5744 = vpack.c.b16 %v5488, %v5472
        %v5745 = vpack.c.b16 %v5489, %v5473
        %v5746 = vpack.c.b16 %v5490, %v5474
        %v5747 = vpack.c.b16 %v5491, %v5475
        %v5748 = vpack.c.b16 %v5492, %v5476
        %v5749 = vpack.c.b16 %v5493, %v5477
        %v5750 = vpack.c.b16 %v5494, %v5478
        %v5751 = vpack.c.b16 %v5495, %v5479
        %v5752 = vpack.c.b16 %v5496, %v5480
        %v5753 = vpack.c.b16 %v5497, %v5481
        %v5754 = vpack.c.b16 %v5498, %v5482
        %v5755 = vpack.c.b16 %v5499, %v5483
        %6012 = vmatprep.subr.bf16.mxu0 %v5501
        %6013 = vmatpush1.bf16.msra.mxu0 %v5500
        %6014 = vmatprep.subr.bf16.mxu0 %v5517
        %6015 = vmatpush1.bf16.msra.mxu0 %v5516
        %6016 = vmatprep.subr.bf16.mxu0 %v5533
        %6017 = vmatpush1.bf16.msra.mxu0 %v5532
        %6018 = vmatprep.subr.bf16.mxu0 %v5549
        %6019 = vmatpush1.bf16.msra.mxu0 %v5548
        %6020 = vmatprep.subr.bf16.mxu0 %v5565
        %6021 = vmatpush1.bf16.msra.mxu0 %v5564
        %6022 = vmatprep.subr.bf16.mxu0 %v5581
        %6023 = vmatpush1.bf16.msra.mxu0 %v5580
        %6024 = vmatprep.subr.bf16.mxu0 %v5597
        %6025 = vmatpush1.bf16.msra.mxu0 %v5596
        %6026 = vmatprep.subr.bf16.mxu0 %v5613
        %6027 = vmatpush1.bf16.msra.mxu0 %v5612
        %6028 = vmatprep.subr.bf16.mxu0 %v5629
        %6029 = vmatpush1.bf16.msra.mxu0 %v5628
        %6030 = vmatprep.subr.bf16.mxu0 %v5645
        %6031 = vmatpush1.bf16.msra.mxu0 %v5644
        %6032 = vmatprep.subr.bf16.mxu0 %v5661
        %6033 = vmatpush1.bf16.msra.mxu0 %v5660
        %6034 = vmatprep.subr.bf16.mxu0 %v5677
        %6035 = vmatpush1.bf16.msra.mxu0 %v5676
        %6036 = vmatprep.subr.bf16.mxu0 %v5693
        %6037 = vmatpush1.bf16.msra.mxu0 %v5692
        %6038 = vmatprep.subr.bf16.mxu0 %v5709
        %6039 = vmatpush1.bf16.msra.mxu0 %v5708
        %6040 = vmatprep.subr.bf16.mxu0 %v5725
        %6041 = vmatpush1.bf16.msra.mxu0 %v5724
        %6042 = vmatprep.subr.bf16.mxu0 %v5741
        %6043 = vmatpush1.bf16.msra.mxu0 %v5740
        %6044 = vmatprep.mubr.bf16.mxu0 %v4389
        %6045 = vmatmul.mubr.bf16.gmra.mrb[0].mxu0 %v4388
        %v6046 = vpop.f32.mrb[0].mxu0
        %v6047 = vadd.f32 %v4655, %v6046
        %v6048 = vpop.f32.mrb[0].mxu0
        %v6049 = vadd.f32 %v4659, %v6048
        %v6050 = vpop.f32.mrb[0].mxu0
        %v6051 = vadd.f32 %v4655, %v6050
        %v6052 = vpop.f32.mrb[0].mxu0
        %v6053 = vadd.f32 %v4659, %v6052
        %6054 = vmatprep.mubr.bf16.mxu0 %v4391
        %6055 = vmatmul.mubr.bf16.gmra.mrb[0].mxu0 %v4390
        %v6056 = vpop.f32.mrb[0].mxu0
        %v6057 = vadd.f32 %v4655, %v6056
        %v6058 = vpop.f32.mrb[0].mxu0
        %v6059 = vadd.f32 %v4659, %v6058
        %v6060 = vpop.f32.mrb[0].mxu0
        %v6061 = vadd.f32 %v4655, %v6060
        %v6062 = vpop.f32.mrb[0].mxu0
        %v6063 = vadd.f32 %v4659, %v6062
        %6064 = vdwg.mxu0
        %6065 = vmatprep.subr.bf16.mxu0 %v5503
        %6066 = vmatpush1.bf16.msra.mxu0 %v5502
        %6067 = vmatprep.subr.bf16.mxu0 %v5519
        %6068 = vmatpush1.bf16.msra.mxu0 %v5518
        %6069 = vmatprep.subr.bf16.mxu0 %v5535
        %6070 = vmatpush1.bf16.msra.mxu0 %v5534
        %6071 = vmatprep.subr.bf16.mxu0 %v5551
        %6072 = vmatpush1.bf16.msra.mxu0 %v5550
        %6073 = vmatprep.subr.bf16.mxu0 %v5567
        %6074 = vmatpush1.bf16.msra.mxu0 %v5566
        %6075 = vmatprep.subr.bf16.mxu0 %v5583
        %6076 = vmatpush1.bf16.msra.mxu0 %v5582
        %6077 = vmatprep.subr.bf16.mxu0 %v5599
        %6078 = vmatpush1.bf16.msra.mxu0 %v5598
        %6079 = vmatprep.subr.bf16.mxu0 %v5615
        %6080 = vmatpush1.bf16.msra.mxu0 %v5614
        %6081 = vmatprep.subr.bf16.mxu0 %v5631
        %6082 = vmatpush1.bf16.msra.mxu0 %v5630
        %6083 = vmatprep.subr.bf16.mxu0 %v5647
        %6084 = vmatpush1.bf16.msra.mxu0 %v5646
        %6085 = vmatprep.subr.bf16.mxu0 %v5663
        %6086 = vmatpush1.bf16.msra.mxu0 %v5662
        %6087 = vmatprep.subr.bf16.mxu0 %v5679
        %6088 = vmatpush1.bf16.msra.mxu0 %v5678
        %6089 = vmatprep.subr.bf16.mxu0 %v5695
        %6090 = vmatpush1.bf16.msra.mxu0 %v5694
        %6091 = vmatprep.subr.bf16.mxu0 %v5711
        %6092 = vmatpush1.bf16.msra.mxu0 %v5710
        %6093 = vmatprep.subr.bf16.mxu0 %v5727
        %6094 = vmatpush1.bf16.msra.mxu0 %v5726
        %6095 = vmatprep.subr.bf16.mxu0 %v5743
        %6096 = vmatpush1.bf16.msra.mxu0 %v5742
        %6097 = vmatprep.mubr.bf16.mxu0 %v4389
        %6098 = vmatmul.mubr.bf16.gmra.mrb[0].mxu0 %v4388
        %v6099 = vpop.f32.mrb[0].mxu0
        %v6100 = vadd.f32 %v4663, %v6099
        %v6101 = vpop.f32.mrb[0].mxu0
        %v6102 = vadd.f32 %v4667, %v6101
        %v6103 = vpop.f32.mrb[0].mxu0
        %v6104 = vadd.f32 %v4663, %v6103
        %v6105 = vpop.f32.mrb[0].mxu0
        %v6106 = vadd.f32 %v4667, %v6105
        %6107 = vmatprep.mubr.bf16.mxu0 %v4391
        %6108 = vmatmul.mubr.bf16.gmra.mrb[0].mxu0 %v4390
        %v6109 = vpop.f32.mrb[0].mxu0
        %v6110 = vadd.f32 %v4663, %v6109
        %v6111 = vpop.f32.mrb[0].mxu0
        %v6112 = vadd.f32 %v4667, %v6111
        %v6113 = vpop.f32.mrb[0].mxu0
        %v6114 = vadd.f32 %v4663, %v6113
        %v6115 = vpop.f32.mrb[0].mxu0
        %v6116 = vadd.f32 %v4667, %v6115
        %6117 = vdwg.mxu0
        %6118 = vmatprep.subr.bf16.mxu0 %v5505
        %6119 = vmatpush1.bf16.msra.mxu0 %v5504
        %6120 = vmatprep.subr.bf16.mxu0 %v5521
        %6121 = vmatpush1.bf16.msra.mxu0 %v5520
        %6122 = vmatprep.subr.bf16.mxu0 %v5537
        %6123 = vmatpush1.bf16.msra.mxu0 %v5536
        %6124 = vmatprep.subr.bf16.mxu0 %v5553
        %6125 = vmatpush1.bf16.msra.mxu0 %v5552
        %6126 = vmatprep.subr.bf16.mxu0 %v5569
        %6127 = vmatpush1.bf16.msra.mxu0 %v5568
        %6128 = vmatprep.subr.bf16.mxu0 %v5585
        %6129 = vmatpush1.bf16.msra.mxu0 %v5584
        %6130 = vmatprep.subr.bf16.mxu0 %v5601
        %6131 = vmatpush1.bf16.msra.mxu0 %v5600
        %6132 = vmatprep.subr.bf16.mxu0 %v5617
        %6133 = vmatpush1.bf16.msra.mxu0 %v5616
        %6134 = vmatprep.subr.bf16.mxu0 %v5633
        %6135 = vmatpush1.bf16.msra.mxu0 %v5632
        %6136 = vmatprep.subr.bf16.mxu0 %v5649
        %6137 = vmatpush1.bf16.msra.mxu0 %v5648
        %6138 = vmatprep.subr.bf16.mxu0 %v5665
        %6139 = vmatpush1.bf16.msra.mxu0 %v5664
        %6140 = vmatprep.subr.bf16.mxu0 %v5681
        %6141 = vmatpush1.bf16.msra.mxu0 %v5680
        %6142 = vmatprep.subr.bf16.mxu0 %v5697
        %6143 = vmatpush1.bf16.msra.mxu0 %v5696
        %6144 = vmatprep.subr.bf16.mxu0 %v5713
        %6145 = vmatpush1.bf16.msra.mxu0 %v5712
        %6146 = vmatprep.subr.bf16.mxu0 %v5729
        %6147 = vmatpush1.bf16.msra.mxu0 %v5728
        %6148 = vmatprep.subr.bf16.mxu0 %v5745
        %6149 = vmatpush1.bf16.msra.mxu0 %v5744
        %6150 = vmatprep.mubr.bf16.mxu0 %v4389
        %6151 = vmatmul.mubr.bf16.gmra.mrb[0].mxu0 %v4388
        %v6152 = vpop.f32.mrb[0].mxu0
        %v6153 = vadd.f32 %v4671, %v6152
        %v6154 = vpop.f32.mrb[0].mxu0
        %v6155 = vadd.f32 %v4675, %v6154
        %v6156 = vpop.f32.mrb[0].mxu0
        %v6157 = vadd.f32 %v4671, %v6156
        %v6158 = vpop.f32.mrb[0].mxu0
        %v6159 = vadd.f32 %v4675, %v6158
        %6160 = vmatprep.mubr.bf16.mxu0 %v4391
        %6161 = vmatmul.mubr.bf16.gmra.mrb[0].mxu0 %v4390
        %v6162 = vpop.f32.mrb[0].mxu0
        %v6163 = vadd.f32 %v4671, %v6162
        %v6164 = vpop.f32.mrb[0].mxu0
        %v6165 = vadd.f32 %v4675, %v6164
        %v6166 = vpop.f32.mrb[0].mxu0
        %v6167 = vadd.f32 %v4671, %v6166
        %v6168 = vpop.f32.mrb[0].mxu0
        %v6169 = vadd.f32 %v4675, %v6168
        %6170 = vdwg.mxu0
        %6171 = vmatprep.subr.bf16.mxu0 %v5507
        %6172 = vmatpush1.bf16.msra.mxu0 %v5506
        %6173 = vmatprep.subr.bf16.mxu0 %v5523
        %6174 = vmatpush1.bf16.msra.mxu0 %v5522
        %6175 = vmatprep.subr.bf16.mxu0 %v5539
        %6176 = vmatpush1.bf16.msra.mxu0 %v5538
        %6177 = vmatprep.subr.bf16.mxu0 %v5555
        %6178 = vmatpush1.bf16.msra.mxu0 %v5554
        %6179 = vmatprep.subr.bf16.mxu0 %v5571
        %6180 = vmatpush1.bf16.msra.mxu0 %v5570
        %6181 = vmatprep.subr.bf16.mxu0 %v5587
        %6182 = vmatpush1.bf16.msra.mxu0 %v5586
        %6183 = vmatprep.subr.bf16.mxu0 %v5603
        %6184 = vmatpush1.bf16.msra.mxu0 %v5602
        %6185 = vmatprep.subr.bf16.mxu0 %v5619
        %6186 = vmatpush1.bf16.msra.mxu0 %v5618
        %6187 = vmatprep.subr.bf16.mxu0 %v5635
        %6188 = vmatpush1.bf16.msra.mxu0 %v5634
        %6189 = vmatprep.subr.bf16.mxu0 %v5651
        %6190 = vmatpush1.bf16.msra.mxu0 %v5650
        %6191 = vmatprep.subr.bf16.mxu0 %v5667
        %6192 = vmatpush1.bf16.msra.mxu0 %v5666
        %6193 = vmatprep.subr.bf16.mxu0 %v5683
        %6194 = vmatpush1.bf16.msra.mxu0 %v5682
        %6195 = vmatprep.subr.bf16.mxu0 %v5699
        %6196 = vmatpush1.bf16.msra.mxu0 %v5698
        %6197 = vmatprep.subr.bf16.mxu0 %v5715
        %6198 = vmatpush1.bf16.msra.mxu0 %v5714
        %6199 = vmatprep.subr.bf16.mxu0 %v5731
        %6200 = vmatpush1.bf16.msra.mxu0 %v5730
        %6201 = vmatprep.subr.bf16.mxu0 %v5747
        %6202 = vmatpush1.bf16.msra.mxu0 %v5746
        %6203 = vmatprep.mubr.bf16.mxu0 %v4389
        %6204 = vmatmul.mubr.bf16.gmra.mrb[0].mxu0 %v4388
        %v6205 = vpop.f32.mrb[0].mxu0
        %v6206 = vadd.f32 %v4679, %v6205
        %v6207 = vpop.f32.mrb[0].mxu0
        %v6208 = vadd.f32 %v4683, %v6207
        %v6209 = vpop.f32.mrb[0].mxu0
        %v6210 = vadd.f32 %v4679, %v6209
        %v6211 = vpop.f32.mrb[0].mxu0
        %v6212 = vadd.f32 %v4683, %v6211
        %6213 = vmatprep.mubr.bf16.mxu0 %v4391
        %6214 = vmatmul.mubr.bf16.gmra.mrb[0].mxu0 %v4390
        %v6215 = vpop.f32.mrb[0].mxu0
        %v6216 = vadd.f32 %v4679, %v6215
        %v6217 = vpop.f32.mrb[0].mxu0
        %v6218 = vadd.f32 %v4683, %v6217
        %v6219 = vpop.f32.mrb[0].mxu0
        %v6220 = vadd.f32 %v4679, %v6219
        %v6221 = vpop.f32.mrb[0].mxu0
        %v6222 = vadd.f32 %v4683, %v6221
        %6223 = vdwg.mxu0
        %6224 = vmatprep.subr.bf16.mxu0 %v5509
        %6225 = vmatpush1.bf16.msra.mxu0 %v5508
        %6226 = vmatprep.subr.bf16.mxu0 %v5525
        %6227 = vmatpush1.bf16.msra.mxu0 %v5524
        %6228 = vmatprep.subr.bf16.mxu0 %v5541
        %6229 = vmatpush1.bf16.msra.mxu0 %v5540
        %6230 = vmatprep.subr.bf16.mxu0 %v5557
        %6231 = vmatpush1.bf16.msra.mxu0 %v5556
        %6232 = vmatprep.subr.bf16.mxu0 %v5573
        %6233 = vmatpush1.bf16.msra.mxu0 %v5572
        %6234 = vmatprep.subr.bf16.mxu0 %v5589
        %6235 = vmatpush1.bf16.msra.mxu0 %v5588
        %6236 = vmatprep.subr.bf16.mxu0 %v5605
        %6237 = vmatpush1.bf16.msra.mxu0 %v5604
        %6238 = vmatprep.subr.bf16.mxu0 %v5621
        %6239 = vmatpush1.bf16.msra.mxu0 %v5620
        %6240 = vmatprep.subr.bf16.mxu0 %v5637
        %6241 = vmatpush1.bf16.msra.mxu0 %v5636
        %6242 = vmatprep.subr.bf16.mxu0 %v5653
        %6243 = vmatpush1.bf16.msra.mxu0 %v5652
        %6244 = vmatprep.subr.bf16.mxu0 %v5669
        %6245 = vmatpush1.bf16.msra.mxu0 %v5668
        %6246 = vmatprep.subr.bf16.mxu0 %v5685
        %6247 = vmatpush1.bf16.msra.mxu0 %v5684
        %6248 = vmatprep.subr.bf16.mxu0 %v5701
        %6249 = vmatpush1.bf16.msra.mxu0 %v5700
        %6250 = vmatprep.subr.bf16.mxu0 %v5717
        %6251 = vmatpush1.bf16.msra.mxu0 %v5716
        %6252 = vmatprep.subr.bf16.mxu0 %v5733
        %6253 = vmatpush1.bf16.msra.mxu0 %v5732
        %6254 = vmatprep.subr.bf16.mxu0 %v5749
        %6255 = vmatpush1.bf16.msra.mxu0 %v5748
        %6256 = vmatprep.mubr.bf16.mxu0 %v4389
        %6257 = vmatmul.mubr.bf16.gmra.mrb[0].mxu0 %v4388
        %v6258 = vpop.f32.mrb[0].mxu0
        %v6259 = vadd.f32 %v4687, %v6258
        %v6260 = vpop.f32.mrb[0].mxu0
        %v6261 = vadd.f32 %v4691, %v6260
        %v6262 = vpop.f32.mrb[0].mxu0
        %v6263 = vadd.f32 %v4687, %v6262
        %v6264 = vpop.f32.mrb[0].mxu0
        %v6265 = vadd.f32 %v4691, %v6264
        %6266 = vmatprep.mubr.bf16.mxu0 %v4391
        %6267 = vmatmul.mubr.bf16.gmra.mrb[0].mxu0 %v4390
        %v6268 = vpop.f32.mrb[0].mxu0
        %v6269 = vadd.f32 %v4687, %v6268
        %v6270 = vpop.f32.mrb[0].mxu0
        %v6271 = vadd.f32 %v4691, %v6270
        %v6272 = vpop.f32.mrb[0].mxu0
        %v6273 = vadd.f32 %v4687, %v6272
        %v6274 = vpop.f32.mrb[0].mxu0
        %v6275 = vadd.f32 %v4691, %v6274
        %6276 = vdwg.mxu0
        %6277 = vmatprep.subr.bf16.mxu0 %v5511
        %6278 = vmatpush1.bf16.msra.mxu0 %v5510
        %6279 = vmatprep.subr.bf16.mxu0 %v5527
        %6280 = vmatpush1.bf16.msra.mxu0 %v5526
        %6281 = vmatprep.subr.bf16.mxu0 %v5543
        %6282 = vmatpush1.bf16.msra.mxu0 %v5542
        %6283 = vmatprep.subr.bf16.mxu0 %v5559
        %6284 = vmatpush1.bf16.msra.mxu0 %v5558
        %6285 = vmatprep.subr.bf16.mxu0 %v5575
        %6286 = vmatpush1.bf16.msra.mxu0 %v5574
        %6287 = vmatprep.subr.bf16.mxu0 %v5591
        %6288 = vmatpush1.bf16.msra.mxu0 %v5590
        %6289 = vmatprep.subr.bf16.mxu0 %v5607
        %6290 = vmatpush1.bf16.msra.mxu0 %v5606
        %6291 = vmatprep.subr.bf16.mxu0 %v5623
        %6292 = vmatpush1.bf16.msra.mxu0 %v5622
        %6293 = vmatprep.subr.bf16.mxu0 %v5639
        %6294 = vmatpush1.bf16.msra.mxu0 %v5638
        %6295 = vmatprep.subr.bf16.mxu0 %v5655
        %6296 = vmatpush1.bf16.msra.mxu0 %v5654
        %6297 = vmatprep.subr.bf16.mxu0 %v5671
        %6298 = vmatpush1.bf16.msra.mxu0 %v5670
        %6299 = vmatprep.subr.bf16.mxu0 %v5687
        %6300 = vmatpush1.bf16.msra.mxu0 %v5686
        %6301 = vmatprep.subr.bf16.mxu0 %v5703
        %6302 = vmatpush1.bf16.msra.mxu0 %v5702
        %6303 = vmatprep.subr.bf16.mxu0 %v5719
        %6304 = vmatpush1.bf16.msra.mxu0 %v5718
        %6305 = vmatprep.subr.bf16.mxu0 %v5735
        %6306 = vmatpush1.bf16.msra.mxu0 %v5734
        %6307 = vmatprep.subr.bf16.mxu0 %v5751
        %6308 = vmatpush1.bf16.msra.mxu0 %v5750
        %6309 = vmatprep.mubr.bf16.mxu0 %v4389
        %6310 = vmatmul.mubr.bf16.gmra.mrb[0].mxu0 %v4388
        %v6311 = vpop.f32.mrb[0].mxu0
        %v6312 = vadd.f32 %v4695, %v6311
        %v6313 = vpop.f32.mrb[0].mxu0
        %v6314 = vadd.f32 %v4699, %v6313
        %v6315 = vpop.f32.mrb[0].mxu0
        %v6316 = vadd.f32 %v4695, %v6315
        %v6317 = vpop.f32.mrb[0].mxu0
        %v6318 = vadd.f32 %v4699, %v6317
        %6319 = vmatprep.mubr.bf16.mxu0 %v4391
        %6320 = vmatmul.mubr.bf16.gmra.mrb[0].mxu0 %v4390
        %v6321 = vpop.f32.mrb[0].mxu0
        %v6322 = vadd.f32 %v4695, %v6321
        %v6323 = vpop.f32.mrb[0].mxu0
        %v6324 = vadd.f32 %v4699, %v6323
        %v6325 = vpop.f32.mrb[0].mxu0
        %v6326 = vadd.f32 %v4695, %v6325
        %v6327 = vpop.f32.mrb[0].mxu0
        %v6328 = vadd.f32 %v4699, %v6327
        %6329 = vdwg.mxu0
        %6330 = vmatprep.subr.bf16.mxu0 %v5513
        %6331 = vmatpush1.bf16.msra.mxu0 %v5512
        %6332 = vmatprep.subr.bf16.mxu0 %v5529
        %6333 = vmatpush1.bf16.msra.mxu0 %v5528
        %6334 = vmatprep.subr.bf16.mxu0 %v5545
        %6335 = vmatpush1.bf16.msra.mxu0 %v5544
        %6336 = vmatprep.subr.bf16.mxu0 %v5561
        %6337 = vmatpush1.bf16.msra.mxu0 %v5560
        %6338 = vmatprep.subr.bf16.mxu0 %v5577
        %6339 = vmatpush1.bf16.msra.mxu0 %v5576
        %6340 = vmatprep.subr.bf16.mxu0 %v5593
        %6341 = vmatpush1.bf16.msra.mxu0 %v5592
        %6342 = vmatprep.subr.bf16.mxu0 %v5609
        %6343 = vmatpush1.bf16.msra.mxu0 %v5608
        %6344 = vmatprep.subr.bf16.mxu0 %v5625
        %6345 = vmatpush1.bf16.msra.mxu0 %v5624
        %6346 = vmatprep.subr.bf16.mxu0 %v5641
        %6347 = vmatpush1.bf16.msra.mxu0 %v5640
        %6348 = vmatprep.subr.bf16.mxu0 %v5657
        %6349 = vmatpush1.bf16.msra.mxu0 %v5656
        %6350 = vmatprep.subr.bf16.mxu0 %v5673
        %6351 = vmatpush1.bf16.msra.mxu0 %v5672
        %6352 = vmatprep.subr.bf16.mxu0 %v5689
        %6353 = vmatpush1.bf16.msra.mxu0 %v5688
        %6354 = vmatprep.subr.bf16.mxu0 %v5705
        %6355 = vmatpush1.bf16.msra.mxu0 %v5704
        %6356 = vmatprep.subr.bf16.mxu0 %v5721
        %6357 = vmatpush1.bf16.msra.mxu0 %v5720
        %6358 = vmatprep.subr.bf16.mxu0 %v5737
        %6359 = vmatpush1.bf16.msra.mxu0 %v5736
        %6360 = vmatprep.subr.bf16.mxu0 %v5753
        %6361 = vmatpush1.bf16.msra.mxu0 %v5752
        %6362 = vmatprep.mubr.bf16.mxu0 %v4389
        %6363 = vmatmul.mubr.bf16.gmra.mrb[0].mxu0 %v4388
        %v6364 = vpop.f32.mrb[0].mxu0
        %v6365 = vadd.f32 %v4703, %v6364
        %v6366 = vpop.f32.mrb[0].mxu0
        %v6367 = vadd.f32 %v4707, %v6366
        %v6368 = vpop.f32.mrb[0].mxu0
        %v6369 = vadd.f32 %v4703, %v6368
        %v6370 = vpop.f32.mrb[0].mxu0
        %v6371 = vadd.f32 %v4707, %v6370
        %6372 = vmatprep.mubr.bf16.mxu0 %v4391
        %6373 = vmatmul.mubr.bf16.gmra.mrb[0].mxu0 %v4390
        %v6374 = vpop.f32.mrb[0].mxu0
        %v6375 = vadd.f32 %v4703, %v6374
        %v6376 = vpop.f32.mrb[0].mxu0
        %v6377 = vadd.f32 %v4707, %v6376
        %v6378 = vpop.f32.mrb[0].mxu0
        %v6379 = vadd.f32 %v4703, %v6378
        %v6380 = vpop.f32.mrb[0].mxu0
        %v6381 = vadd.f32 %v4707, %v6380
        %6382 = vdwg.mxu0
        %6383 = vmatprep.subr.bf16.mxu0 %v5515
        %6384 = vmatpush1.bf16.msra.mxu0 %v5514
        %6385 = vmatprep.subr.bf16.mxu0 %v5531
        %6386 = vmatpush1.bf16.msra.mxu0 %v5530
        %6387 = vmatprep.subr.bf16.mxu0 %v5547
        %6388 = vmatpush1.bf16.msra.mxu0 %v5546
        %6389 = vmatprep.subr.bf16.mxu0 %v5563
        %6390 = vmatpush1.bf16.msra.mxu0 %v5562
        %6391 = vmatprep.subr.bf16.mxu0 %v5579
        %6392 = vmatpush1.bf16.msra.mxu0 %v5578
        %6393 = vmatprep.subr.bf16.mxu0 %v5595
        %6394 = vmatpush1.bf16.msra.mxu0 %v5594
        %6395 = vmatprep.subr.bf16.mxu0 %v5611
        %6396 = vmatpush1.bf16.msra.mxu0 %v5610
        %6397 = vmatprep.subr.bf16.mxu0 %v5627
        %6398 = vmatpush1.bf16.msra.mxu0 %v5626
        %6399 = vmatprep.subr.bf16.mxu0 %v5643
        %6400 = vmatpush1.bf16.msra.mxu0 %v5642
        %6401 = vmatprep.subr.bf16.mxu0 %v5659
        %6402 = vmatpush1.bf16.msra.mxu0 %v5658
        %6403 = vmatprep.subr.bf16.mxu0 %v5675
        %6404 = vmatpush1.bf16.msra.mxu0 %v5674
        %6405 = vmatprep.subr.bf16.mxu0 %v5691
        %6406 = vmatpush1.bf16.msra.mxu0 %v5690
        %6407 = vmatprep.subr.bf16.mxu0 %v5707
        %6408 = vmatpush1.bf16.msra.mxu0 %v5706
        %6409 = vmatprep.subr.bf16.mxu0 %v5723
        %6410 = vmatpush1.bf16.msra.mxu0 %v5722
        %6411 = vmatprep.subr.bf16.mxu0 %v5739
        %6412 = vmatpush1.bf16.msra.mxu0 %v5738
        %6413 = vmatprep.subr.bf16.mxu0 %v5755
        %6414 = vmatpush1.bf16.msra.mxu0 %v5754
        %6415 = vmatprep.mubr.bf16.mxu0 %v4389
        %6416 = vmatmul.mubr.bf16.gmra.mrb[0].mxu0 %v4388
        %v6417 = vpop.f32.mrb[0].mxu0
        %v6418 = vadd.f32 %v4711, %v6417
        %v6419 = vpop.f32.mrb[0].mxu0
        %v6420 = vadd.f32 %v4715, %v6419
        %v6421 = vpop.f32.mrb[0].mxu0
        %v6422 = vadd.f32 %v4711, %v6421
        %v6423 = vpop.f32.mrb[0].mxu0
        %v6424 = vadd.f32 %v4715, %v6423
        %6425 = vmatprep.mubr.bf16.mxu0 %v4391
        %6426 = vmatmul.mubr.bf16.gmra.mrb[0].mxu0 %v4390
        %v6427 = vpop.f32.mrb[0].mxu0
        %v6428 = vadd.f32 %v4711, %v6427
        %v6429 = vpop.f32.mrb[0].mxu0
        %v6430 = vadd.f32 %v4715, %v6429
        %v6431 = vpop.f32.mrb[0].mxu0
        %v6432 = vadd.f32 %v4711, %v6431
        %v6433 = vpop.f32.mrb[0].mxu0
        %v6434 = vadd.f32 %v4715, %v6433
        %6435 = vdwg.mxu0
        %v6436 = vadd.f32 %v6047, %v870
        %v6437 = vadd.f32 %v6049, %v871
        %v6438 = vadd.f32 %v6100, %v872
        %v6439 = vadd.f32 %v6102, %v873
        %v6440 = vadd.f32 %v6153, %v874
        %v6441 = vadd.f32 %v6155, %v875
        %v6442 = vadd.f32 %v6206, %v876
        %v6443 = vadd.f32 %v6208, %v877
        %v6444 = vadd.f32 %v6259, %v878
        %v6445 = vadd.f32 %v6261, %v879
        %v6446 = vadd.f32 %v6312, %v880
        %v6447 = vadd.f32 %v6314, %v881
        %v6448 = vadd.f32 %v6365, %v882
        %v6449 = vadd.f32 %v6367, %v883
        %v6450 = vadd.f32 %v6418, %v884
        %v6451 = vadd.f32 %v6420, %v885
        %v6452 = vadd.f32 %v6051, %v886
        %v6453 = vadd.f32 %v6053, %v887
        %v6454 = vadd.f32 %v6104, %v888
        %v6455 = vadd.f32 %v6106, %v889
        %v6456 = vadd.f32 %v6157, %v890
        %v6457 = vadd.f32 %v6159, %v891
        %v6458 = vadd.f32 %v6210, %v892
        %v6459 = vadd.f32 %v6212, %v893
        %v6460 = vadd.f32 %v6263, %v894
        %v6461 = vadd.f32 %v6265, %v895
        %v6462 = vadd.f32 %v6316, %v896
        %v6463 = vadd.f32 %v6318, %v897
        %v6464 = vadd.f32 %v6369, %v898
        %v6465 = vadd.f32 %v6371, %v899
        %v6466 = vadd.f32 %v6422, %v900
        %v6467 = vadd.f32 %v6424, %v901
        %v6468 = vadd.f32 %v6057, %v902
        %v6469 = vadd.f32 %v6059, %v903
        %v6470 = vadd.f32 %v6110, %v904
        %v6471 = vadd.f32 %v6112, %v905
        %v6472 = vadd.f32 %v6163, %v906
        %v6473 = vadd.f32 %v6165, %v907
        %v6474 = vadd.f32 %v6216, %v908
        %v6475 = vadd.f32 %v6218, %v909
        %v6476 = vadd.f32 %v6269, %v910
        %v6477 = vadd.f32 %v6271, %v911
        %v6478 = vadd.f32 %v6322, %v912
        %v6479 = vadd.f32 %v6324, %v913
        %v6480 = vadd.f32 %v6375, %v914
        %v6481 = vadd.f32 %v6377, %v915
        %v6482 = vadd.f32 %v6428, %v916
        %v6483 = vadd.f32 %v6430, %v917
        %v6484 = vadd.f32 %v6061, %v918
        %v6485 = vadd.f32 %v6063, %v919
        %v6486 = vadd.f32 %v6114, %v920
        %v6487 = vadd.f32 %v6116, %v921
        %v6488 = vadd.f32 %v6167, %v922
        %v6489 = vadd.f32 %v6169, %v923
        %v6490 = vadd.f32 %v6220, %v924
        %v6491 = vadd.f32 %v6222, %v925
        %v6492 = vadd.f32 %v6273, %v926
        %v6493 = vadd.f32 %v6275, %v927
        %v6494 = vadd.f32 %v6326, %v928
        %v6495 = vadd.f32 %v6328, %v929
        %v6496 = vadd.f32 %v6379, %v930
        %v6497 = vadd.f32 %v6381, %v931
        %v6498 = vadd.f32 %v6432, %v932
        %v6499 = vadd.f32 %v6434, %v933
        %v6500 = vmax.f32 %v6436, 0.0
        %v6501 = vmax.f32 %v6437, 0.0
        %v6502 = vmax.f32 %v6438, 0.0
        %v6503 = vmax.f32 %v6439, 0.0
        %v6504 = vmax.f32 %v6440, 0.0
        %v6505 = vmax.f32 %v6441, 0.0
        %v6506 = vmax.f32 %v6442, 0.0
        %v6507 = vmax.f32 %v6443, 0.0
        %v6508 = vmax.f32 %v6444, 0.0
        %v6509 = vmax.f32 %v6445, 0.0
        %v6510 = vmax.f32 %v6446, 0.0
        %v6511 = vmax.f32 %v6447, 0.0
        %v6512 = vmax.f32 %v6448, 0.0
        %v6513 = vmax.f32 %v6449, 0.0
        %v6514 = vmax.f32 %v6450, 0.0
        %v6515 = vmax.f32 %v6451, 0.0
        %v6516 = vmax.f32 %v6452, 0.0
        %v6517 = vmax.f32 %v6453, 0.0
        %v6518 = vmax.f32 %v6454, 0.0
        %v6519 = vmax.f32 %v6455, 0.0
        %v6520 = vmax.f32 %v6456, 0.0
        %v6521 = vmax.f32 %v6457, 0.0
        %v6522 = vmax.f32 %v6458, 0.0
        %v6523 = vmax.f32 %v6459, 0.0
        %v6524 = vmax.f32 %v6460, 0.0
        %v6525 = vmax.f32 %v6461, 0.0
        %v6526 = vmax.f32 %v6462, 0.0
        %v6527 = vmax.f32 %v6463, 0.0
        %v6528 = vmax.f32 %v6464, 0.0
        %v6529 = vmax.f32 %v6465, 0.0
        %v6530 = vmax.f32 %v6466, 0.0
        %v6531 = vmax.f32 %v6467, 0.0
        %v6532 = vmax.f32 %v6468, 0.0
        %v6533 = vmax.f32 %v6469, 0.0
        %v6534 = vmax.f32 %v6470, 0.0
        %v6535 = vmax.f32 %v6471, 0.0
        %v6536 = vmax.f32 %v6472, 0.0
        %v6537 = vmax.f32 %v6473, 0.0
        %v6538 = vmax.f32 %v6474, 0.0
        %v6539 = vmax.f32 %v6475, 0.0
        %v6540 = vmax.f32 %v6476, 0.0
        %v6541 = vmax.f32 %v6477, 0.0
        %v6542 = vmax.f32 %v6478, 0.0
        %v6543 = vmax.f32 %v6479, 0.0
        %v6544 = vmax.f32 %v6480, 0.0
        %v6545 = vmax.f32 %v6481, 0.0
        %v6546 = vmax.f32 %v6482, 0.0
        %v6547 = vmax.f32 %v6483, 0.0
        %v6548 = vmax.f32 %v6484, 0.0
        %v6549 = vmax.f32 %v6485, 0.0
        %v6550 = vmax.f32 %v6486, 0.0
        %v6551 = vmax.f32 %v6487, 0.0
        %v6552 = vmax.f32 %v6488, 0.0
        %v6553 = vmax.f32 %v6489, 0.0
        %v6554 = vmax.f32 %v6490, 0.0
        %v6555 = vmax.f32 %v6491, 0.0
        %v6556 = vmax.f32 %v6492, 0.0
        %v6557 = vmax.f32 %v6493, 0.0
        %v6558 = vmax.f32 %v6494, 0.0
        %v6559 = vmax.f32 %v6495, 0.0
        %v6560 = vmax.f32 %v6496, 0.0
        %v6561 = vmax.f32 %v6497, 0.0
        %v6562 = vmax.f32 %v6498, 0.0
        %v6563 = vmax.f32 %v6499, 0.0
        %6564 = vst [vmem:[%s9] sm:$0xff] %v6500
        %6565 = vst [vmem:[%s9 + $0x8] sm:$0xff] %v6501
        %6566 = vst [vmem:[%s9 + $0x10] sm:$0xff] %v6502
        %6567 = vst [vmem:[%s9 + $0x18] sm:$0xff] %v6503
        %6568 = vst [vmem:[%s9 + $0x20] sm:$0xff] %v6504
        %6569 = vst [vmem:[%s9 + $0x28] sm:$0xff] %v6505
        %6570 = vst [vmem:[%s9 + $0x30] sm:$0xff] %v6506
        %6571 = vst [vmem:[%s9 + $0x38] sm:$0xff] %v6507
        %6572 = vst [vmem:[%s9 + $0x40] sm:$0xff] %v6508
        %6573 = vst [vmem:[%s9 + $0x48] sm:$0xff] %v6509
        %6574 = vst [vmem:[%s9 + $0x50] sm:$0xff] %v6510
        %6575 = vst [vmem:[%s9 + $0x58] sm:$0xff] %v6511
        %6576 = vst [vmem:[%s9 + $0x60] sm:$0xff] %v6512
        %6577 = vst [vmem:[%s9 + $0x68] sm:$0xff] %v6513
        %6578 = vst [vmem:[%s9 + $0x70] sm:$0xff] %v6514
        %6579 = vst [vmem:[%s9 + $0x78] sm:$0xff] %v6515
        %6580 = vst [vmem:[%s9 + $0x80] sm:$0xff] %v6516
        %6581 = vst [vmem:[%s9 + $0x88] sm:$0xff] %v6517
        %6582 = vst [vmem:[%s9 + $0x90] sm:$0xff] %v6518
        %6583 = vst [vmem:[%s9 + $0x98] sm:$0xff] %v6519
        %6584 = vst [vmem:[%s9 + $0xa0] sm:$0xff] %v6520
        %6585 = vst [vmem:[%s9 + $0xa8] sm:$0xff] %v6521
        %6586 = vst [vmem:[%s9 + $0xb0] sm:$0xff] %v6522
        %6587 = vst [vmem:[%s9 + $0xb8] sm:$0xff] %v6523
        %6588 = vst [vmem:[%s9 + $0xc0] sm:$0xff] %v6524
        %6589 = vst [vmem:[%s9 + $0xc8] sm:$0xff] %v6525
        %6590 = vst [vmem:[%s9 + $0xd0] sm:$0xff] %v6526
        %6591 = vst [vmem:[%s9 + $0xd8] sm:$0xff] %v6527
        %6592 = vst [vmem:[%s9 + $0xe0] sm:$0xff] %v6528
        %6593 = vst [vmem:[%s9 + $0xe8] sm:$0xff] %v6529
        %6594 = vst [vmem:[%s9 + $0xf0] sm:$0xff] %v6530
        %6595 = vst [vmem:[%s9 + $0xf8] sm:$0xff] %v6531
        %6596 = vst [vmem:[%s9 + $0x100] sm:$0xff] %v6532
        %6597 = vst [vmem:[%s9 + $0x108] sm:$0xff] %v6533
        %6598 = vst [vmem:[%s9 + $0x110] sm:$0xff] %v6534
        %6599 = vst [vmem:[%s9 + $0x118] sm:$0xff] %v6535
        %6600 = vst [vmem:[%s9 + $0x120] sm:$0xff] %v6536
        %6601 = vst [vmem:[%s9 + $0x128] sm:$0xff] %v6537
        %6602 = vst [vmem:[%s9 + $0x130] sm:$0xff] %v6538
        %6603 = vst [vmem:[%s9 + $0x138] sm:$0xff] %v6539
        %6604 = vst [vmem:[%s9 + $0x140] sm:$0xff] %v6540
        %6605 = vst [vmem:[%s9 + $0x148] sm:$0xff] %v6541
        %6606 = vst [vmem:[%s9 + $0x150] sm:$0xff] %v6542
        %6607 = vst [vmem:[%s9 + $0x158] sm:$0xff] %v6543
        %6608 = vst [vmem:[%s9 + $0x160] sm:$0xff] %v6544
        %6609 = vst [vmem:[%s9 + $0x168] sm:$0xff] %v6545
        %6610 = vst [vmem:[%s9 + $0x170] sm:$0xff] %v6546
        %6611 = vst [vmem:[%s9 + $0x178] sm:$0xff] %v6547
        %6612 = vst [vmem:[%s9 + $0x180] sm:$0xff] %v6548
        %6613 = vst [vmem:[%s9 + $0x188] sm:$0xff] %v6549
        %6614 = vst [vmem:[%s9 + $0x190] sm:$0xff] %v6550
        %6615 = vst [vmem:[%s9 + $0x198] sm:$0xff] %v6551
        %6616 = vst [vmem:[%s9 + $0x1a0] sm:$0xff] %v6552
        %6617 = vst [vmem:[%s9 + $0x1a8] sm:$0xff] %v6553
        %6618 = vst [vmem:[%s9 + $0x1b0] sm:$0xff] %v6554
        %6619 = vst [vmem:[%s9 + $0x1b8] sm:$0xff] %v6555
        %6620 = vst [vmem:[%s9 + $0x1c0] sm:$0xff] %v6556
        %6621 = vst [vmem:[%s9 + $0x1c8] sm:$0xff] %v6557
        %6622 = vst [vmem:[%s9 + $0x1d0] sm:$0xff] %v6558
        %6623 = vst [vmem:[%s9 + $0x1d8] sm:$0xff] %v6559
        %6624 = vst [vmem:[%s9 + $0x1e0] sm:$0xff] %v6560
        %6625 = vst [vmem:[%s9 + $0x1e8] sm:$0xff] %v6561
        %6626 = vst [vmem:[%s9 + $0x1f0] sm:$0xff] %v6562
        %6627 = vst [vmem:[%s9 + $0x1f8] sm:$0xff] %v6563
        // Predicated region
        $region93: #{pixelcnn_forward.1} parent=55 // pred_check
          %p6628 = pneg %p277
        $region94: #{pixelcnn_forward.1} parent=55 // pred_check_branch
          %6630 = sbr.rel (%p6628) target = $region96
        $region95: #{pixelcnn_forward.1} parent=55 // pred_region
          _
        $region96: #{pixelcnn_forward.1} parent=55 // pred_fallthru
          _
        // Predicated region
        $region97: #{pixelcnn_forward.1} parent=55 // pred_check
          %p6631 = pneg %p277
        $region98: #{pixelcnn_forward.1} parent=55 // pred_check_branch
          %6633 = sbr.rel (%p6631) target = $region100
        $region99: #{pixelcnn_forward.1} parent=55 // pred_region
          _
        $region100: #{pixelcnn_forward.1} parent=55 // pred_fallthru
          _
      $region56: #{pixelcnn_forward.1} parent=5 // pred_fallthru
        _
      %p6634 = scmp.le.s32.totalorder 2, %s30
      // Predicated region
      $region101: #{pixelcnn_forward.1} parent=5 // pred_check
        %p6635 = pneg %p6634
      $region102: #{pixelcnn_forward.1} parent=5 // pred_check_branch
        %6637 = sbr.rel (%p6635) target = $region104
      $region103: #{pixelcnn_forward.1} parent=5 // pred_region
        %s6638 = ssub.s32 %s30, 2
      $region104: #{pixelcnn_forward.1} parent=5 // pred_fallthru
        _
    $region6: #{pixelcnn_forward.1} parent=1 // loop_footer
      %s34 = sadd.s32 1, %s30
    $region7: #{pixelcnn_forward.1} parent=1 // loop_footer_branch
      %29 = sbr.rel target = $region3
    $region8: #{pixelcnn_forward.1} parent=1 // loop_exit
      _
    %6639 = vsyncpa [#allocation3], 1
    %s6640 = scalar_lea.sflag [#allocation3], 1
    %6641 = vsyncpa %s6640, 1
    %6642 = vsyncpa [#allocation5], 1
    %s6643 = scalar_lea.sflag [#allocation5], 1
    %6644 = vsyncpa %s6643, 1
    %6645 = vsyncpa [#allocation8], 1
    %s6646 = scalar_lea.sflag [#allocation8], 1
    %6647 = vsyncpa %s6646, 1
    %6648 = vsyncpa [#allocation11], 1
    %s6649 = scalar_lea.sflag [#allocation11], 1
    %6650 = vsyncpa %s6649, 1
    %6651 = vsyncpa [#allocation14], 1
    %s6652 = scalar_lea.sflag [#allocation14], 1
    %6653 = vsyncpa %s6652, 1

</llo_original>
